<compile_context>
chip_gen: v6e
topology: v6e:2x2x1
jax: 0.10.0
libtpu: 0.0.40
codegen_flags: <defaults>
</compile_context>

<pallas_src>
import jax
import jax.numpy as jnp
from jax.experimental import pallas as pl
from jax.experimental.pallas import tpu as pltpu


# ----------------------------------------------------------------------------
# Fused Pallas kernel: one grid step == Bt (graph1, graph2, descriptors) pairs
# ----------------------------------------------------------------------------

def fused_forward_kernel(
    a1_ref, h1_ref, a2_ref, h2_ref, desc_ref,
    wc1_ref, wc2_ref, w1_ref, w2_ref, w3_ref, w4_ref, bias_ref,
    o_ref):
    """Whole GCNReg_binary_add forward for Bt graph pairs.

    a*_ref  : (Bt, N, N)   raw (un-normalized, no self-loop) adjacency, bf16
    h*_ref  : (Bt, N, Din) node features, bf16
    desc_ref: (Bt, 1, E)   extra descriptors, f32
    wc*_ref : shared GraphConv weights, bf16
    w1..w4  : MLP head weights, f32 (classify1 passed whole, sliced in-kernel)
    bias_ref: (6, F) packed biases [conv1, conv2, cls1, cls2, cls3, cls4], f32
    o_ref   : (Bt, 1, n_classes), f32
    """
    Bt, N, Din = h1_ref.shape
    H = wc1_ref.shape[1]
    F = w1_ref.shape[0]
    C = w4_ref.shape[1]
    G = 2 * Bt          # graphs per step (both branches stacked)
    M = G * N           # rows of the stacked feature-transform matmuls

    # Stack the two branches along the leading (graph) axis; weights are shared.
    a = jnp.concatenate([a1_ref[...], a2_ref[...]], axis=0)                # (G,N,N) bf16
    h = jnp.concatenate([h1_ref[...], h2_ref[...]], axis=0).astype(jnp.float32)

    # Symmetric normalization with implicit self-loop, factored form:
    #   D^{-1/2}(A+I)D^{-1/2} @ x  ==  d * (A @ (d*x) + d*x),  d = rsqrt(deg+1)
    deg = jnp.sum(a.astype(jnp.float32), axis=-1, keepdims=True)           # (G,N,1)
    d = jax.lax.rsqrt(deg + 1.0)                                           # EUP slot

    bias = bias_ref[...]                                                   # (6, F)
    bc1 = bias[0:1, 0:H]
    bc2 = bias[1:2, 0:H]
    b1 = bias[2:3, :]
    b2 = bias[3:4, 0:H]
    b3 = bias[4:5, 0:H]
    b4 = bias[5:6, 0:C]

    def aggregate(x_f32):
        # x_f32: (G, N, K) f32 -> normalized neighborhood aggregate, f32.
        dx = d * x_f32
        neigh = jnp.einsum('gij,gjk->gik', a, dx.astype(jnp.bfloat16),
                           preferred_element_type=jnp.float32)
        return d * (neigh + dx)

    # -------- GraphConv layer 1: single (M, Din) @ (Din, H) matmul --------
    g = aggregate(h).reshape(M, Din)
    x = jnp.maximum(
        jnp.dot(g.astype(jnp.bfloat16), wc1_ref[...],
                preferred_element_type=jnp.float32) + bc1, 0.0)            # (M, H)

    # -------- GraphConv layer 2 --------
    g = aggregate(x.reshape(G, N, H)).reshape(M, H)
    x = jnp.maximum(
        jnp.dot(g.astype(jnp.bfloat16), wc2_ref[...],
                preferred_element_type=jnp.float32) + bc2, 0.0)            # (M, H)

    # -------- dgl.mean_nodes per graph (sublane reduce) --------
    pooled = jnp.mean(x.reshape(G, N, H), axis=1)                          # (G, H) f32
    hg1 = pooled[0:Bt, :]                                                  # (Bt, H)
    hg2 = pooled[Bt:G, :]                                                  # (Bt, H)
    desc = desc_ref[:, 0, :].astype(jnp.float32)                           # (Bt, E)

    # -------- MLP head (f32); classify1 rows sliced in-kernel == implicit concat
    w1 = w1_ref[...]
    y = (jnp.dot(hg1, w1[0:H, :], preferred_element_type=jnp.float32)
         + jnp.dot(hg2, w1[H:2 * H, :], preferred_element_type=jnp.float32)
         + jnp.dot(desc, w1[2 * H:F, :], preferred_element_type=jnp.float32)
         + b1)
    y = jnp.maximum(y, 0.0)
    y = jnp.maximum(
        jnp.dot(y, w2_ref[...], preferred_element_type=jnp.float32) + b2, 0.0)
    y = jnp.maximum(
        jnp.dot(y, w3_ref[...], preferred_element_type=jnp.float32) + b3, 0.0)
    o_ref[:, 0, :] = (
        jnp.dot(y, w4_ref[...], preferred_element_type=jnp.float32) + b4)


# ----------------------------------------------------------------------------
# Wrapper
# ----------------------------------------------------------------------------

def gcnreg_binary_add_forward(adj1, h1, adj2, h2, descriptors, params,
                              *, target_rows=128):
    """Full forward pass (rdkit_features=False, saliency=False) in one kernel.

    adj1/adj2: (B, N, N) raw adjacency (no self-loops), h1/h2: (B, N, in_dim),
    descriptors: (B, extra_in_dim).  Returns (B, n_classes).

    target_rows: desired 2*N*Bt for the stacked matmuls (128 fills a v5e MXU
    pass; use 256 on v6e/v7x).
    """
    conv1_w, conv1_b, conv2_w, conv2_b, head = params
    w1, b1, w2, b2, w3, b3, w4, b4 = head

    B, N, Din = h1.shape
    H = conv1_w.shape[1]
    E = descriptors.shape[1]
    F = 2 * H + E
    C = w4.shape[1]
    assert w1.shape == (F, F), (w1.shape, F)

    # Batch tile: Bt pairs per grid step (2*N*Bt ~= target_rows MXU rows).
    Bt = max(1, min(B, target_rows // (2 * N)))
    B_pad = ((B + Bt - 1) // Bt) * Bt
    pad = B_pad - B
    if pad:
        pad3 = ((0, pad), (0, 0), (0, 0))
        adj1 = jnp.pad(adj1, pad3)
        adj2 = jnp.pad(adj2, pad3)
        h1 = jnp.pad(h1, pad3)
        h2 = jnp.pad(h2, pad3)
        descriptors = jnp.pad(descriptors, ((0, pad), (0, 0)))

    # bf16 for the graph-side matmul inputs (adjacency 0/1 exact in bf16);
    # the head and all accumulation stay f32.
    adj1b = adj1.astype(jnp.bfloat16)
    adj2b = adj2.astype(jnp.bfloat16)
    h1b = h1.astype(jnp.bfloat16)
    h2b = h2.astype(jnp.bfloat16)
    wc1b = conv1_w.astype(jnp.bfloat16)
    wc2b = conv2_w.astype(jnp.bfloat16)
    desc3 = descriptors.astype(jnp.float32).reshape(B_pad, 1, E)

    # Pack all six biases into one lane-padded f32 slab.
    bias_pack = jnp.zeros((6, F), jnp.float32)
    bias_pack = bias_pack.at[0, :H].set(conv1_b)
    bias_pack = bias_pack.at[1, :H].set(conv2_b)
    bias_pack = bias_pack.at[2, :F].set(b1)
    bias_pack = bias_pack.at[3, :H].set(b2)
    bias_pack = bias_pack.at[4, :H].set(b3)
    bias_pack = bias_pack.at[5, :C].set(b4)

    per_g3 = lambda s: (s, 0, 0)
    full2 = lambda s: (0, 0)

    in_specs = [
        pl.BlockSpec((Bt, N, N), per_g3),      # adj1
        pl.BlockSpec((Bt, N, Din), per_g3),    # h1
        pl.BlockSpec((Bt, N, N), per_g3),      # adj2
        pl.BlockSpec((Bt, N, Din), per_g3),    # h2
        pl.BlockSpec((Bt, 1, E), per_g3),      # descriptors
        pl.BlockSpec((Din, H), full2),         # conv1_w (bf16)
        pl.BlockSpec((H, H), full2),           # conv2_w (bf16)
        pl.BlockSpec((F, F), full2),           # classify1 w (whole)
        pl.BlockSpec((F, H), full2),           # classify2 w
        pl.BlockSpec((H, H), full2),           # classify3 w
        pl.BlockSpec((H, C), full2),           # classify4 w
        pl.BlockSpec((6, F), full2),           # packed biases
    ]

    out = pl.pallas_call(
        fused_forward_kernel,
        out_shape=jax.ShapeDtypeStruct((B_pad, 1, C), jnp.float32),
        grid_spec=pltpu.PrefetchScalarGridSpec(
            num_scalar_prefetch=0,
            grid=(B_pad // Bt,),
            in_specs=in_specs,
            out_specs=pl.BlockSpec((Bt, 1, C), per_g3),
        ),
        compiler_params=pltpu.CompilerParams(
            dimension_semantics=("parallel",)),
    )(
        adj1b, h1b, adj2b, h2b, desc3,
        wc1b, wc2b,
        w1, w2, w3, w4,
        bias_pack,
    )
    return out.reshape(B_pad, C)[:B]


# ----------------------------------------------------------------------------
# Pure-JAX f32 reference (for correctness check)
# ----------------------------------------------------------------------------

def reference_forward(adj1, h1, adj2, h2, descriptors, params):
    conv1_w, conv1_b, conv2_w, conv2_b, head = params
    w1, b1, w2, b2, w3, b3, w4, b4 = head

    def normalize(adj):
        n = adj.shape[-1]
        a = adj + jnp.eye(n, dtype=adj.dtype)[None]
        deg = jnp.sum(a, axis=-1)
        dis = 1.0 / jnp.sqrt(deg)
        return a * dis[:, :, None] * dis[:, None, :]

    def conv(a_hat, h, w, b):
        return jax.nn.relu(jnp.einsum('bij,bjk->bik', a_hat, h) @ w + b)

    a1 = normalize(adj1)
    a2 = normalize(adj2)
    x1 = conv(a1, conv(a1, h1, conv1_w, conv1_b), conv2_w, conv2_b)
    x2 = conv(a2, conv(a2, h2, conv1_w, conv1_b), conv2_w, conv2_b)
    hg = jnp.concatenate(
        [x1.mean(axis=1), x2.mean(axis=1), descriptors.astype(jnp.float32)], axis=1)
    y = jax.nn.relu(hg @ w1 + b1)
    y = jax.nn.relu(y @ w2 + b2)
    y = jax.nn.relu(y @ w3 + b3)
    return y @ w4 + b4


# ----------------------------------------------------------------------------
# Deterministic parameter / input construction
# ----------------------------------------------------------------------------

def make_params(key, in_dim, extra_in_dim, hidden_dim, n_classes):
    ks = jax.random.split(key, 6)
    scale = 0.1

    def lin(k, din, dout):
        kw, kb = jax.random.split(k)
        w = scale * jax.random.normal(kw, (din, dout), jnp.float32)
        b = scale * jax.random.normal(kb, (dout,), jnp.float32)
        return w, b

    conv1_w, conv1_b = lin(ks[0], in_dim, hidden_dim)
    conv2_w, conv2_b = lin(ks[1], hidden_dim, hidden_dim)

    F = hidden_dim * 2 + extra_in_dim            # rdkit_features=False path
    w1, b1 = lin(ks[2], F, F)                    # classify1
    w2, b2 = lin(ks[3], F, hidden_dim)           # classify2
    w3, b3 = lin(ks[4], hidden_dim, hidden_dim)  # classify3
    w4, b4 = lin(ks[5], hidden_dim, n_classes)   # classify4

    head = (w1, b1, w2, b2, w3, b3, w4, b4)
    return conv1_w, conv1_b, conv2_w, conv2_b, head


def make_graph(key, batch, n_nodes, in_dim, p_edge=0.4):
    ka, kh = jax.random.split(key)
    u = jax.random.uniform(ka, (batch, n_nodes, n_nodes))
    adj = (u < p_edge).astype(jnp.float32)
    adj = jnp.maximum(adj, jnp.swapaxes(adj, 1, 2))          # symmetric
    adj = adj * (1.0 - jnp.eye(n_nodes)[None])               # no self loops
    h = jax.random.normal(kh, (batch, n_nodes, in_dim), jnp.float32)
    return adj, h


if __name__ == "__main__":
    B = 20              # number of graph pairs (exercises batching + padding)
    N = 8               # nodes per graph
    in_dim = 4
    extra_in_dim = 6
    hidden_dim = 32
    n_classes = 2

    key = jax.random.PRNGKey(0)
    k_p, k_g1, k_g2, k_d = jax.random.split(key, 4)

    params = make_params(k_p, in_dim, extra_in_dim, hidden_dim, n_classes)
    adj1, h1 = make_graph(k_g1, B, N, in_dim)
    adj2, h2 = make_graph(k_g2, B, N, in_dim)
    descriptors = jax.random.normal(k_d, (B, extra_in_dim), jnp.float32)

    forward = jax.jit(gcnreg_binary_add_forward)
    out = forward(adj1, h1, adj2, h2, descriptors, params)
    out = jax.block_until_ready(out)

    assert out.shape == (B, n_classes), out.shape
    assert bool(jnp.all(jnp.isfinite(out)))

    ref = reference_forward(adj1, h1, adj2, h2, descriptors, params)
    # bf16 graph-side matmuls with f32 accumulation stay well inside 2e-2.
    assert bool(jnp.allclose(out, ref, rtol=2e-2, atol=2e-2)), (
        "max abs diff %e" % float(jnp.max(jnp.abs(out - ref))))

    # TODO(synk): saliency=True branch (retain_grad/backward) is a training-time
    # autograd feature with no forward-kernel equivalent; not implemented.
    print("KERNEL_OK")
</pallas_src>

<mosaic_0001>
module attributes {stable_mosaic.version = 11 : i64} {
  func.func @fused_forward_kernel(%arg0: i32, %arg1: memref<8x8x8xbf16, #tpu.memory_space<vmem>>, %arg2: memref<8x8x4xbf16, #tpu.memory_space<vmem>>, %arg3: memref<8x8x8xbf16, #tpu.memory_space<vmem>>, %arg4: memref<8x8x4xbf16, #tpu.memory_space<vmem>>, %arg5: memref<8x1x6xf32, #tpu.memory_space<vmem>>, %arg6: memref<4x32xbf16, #tpu.memory_space<vmem>>, %arg7: memref<32x32xbf16, #tpu.memory_space<vmem>>, %arg8: memref<70x70xf32, #tpu.memory_space<vmem>>, %arg9: memref<70x32xf32, #tpu.memory_space<vmem>>, %arg10: memref<32x32xf32, #tpu.memory_space<vmem>>, %arg11: memref<32x2xf32, #tpu.memory_space<vmem>>, %arg12: memref<6x70xf32, #tpu.memory_space<vmem>>, %arg13: memref<8x1x2xf32, #tpu.memory_space<vmem>>) attributes {dimension_semantics = [#tpu.dimension_semantics<parallel>], iteration_bounds = array<i64: 3>, scalar_prefetch = 0 : i64, scratch_operands = 0 : i64, tpu.core_type = #tpu.core_type<tc>, window_params = [{transform_indices = @transform_0, window_bounds = array<i64: 8, 8, 8>}, {transform_indices = @transform_1, window_bounds = array<i64: 8, 8, 4>}, {transform_indices = @transform_2, window_bounds = array<i64: 8, 8, 8>}, {transform_indices = @transform_3, window_bounds = array<i64: 8, 8, 4>}, {transform_indices = @transform_4, window_bounds = array<i64: 8, 1, 6>}, {pipeline_mode = #tpu.pipeline_mode<synchronous>, transform_indices = @transform_5, window_bounds = array<i64: 4, 32>}, {pipeline_mode = #tpu.pipeline_mode<synchronous>, transform_indices = @transform_6, window_bounds = array<i64: 32, 32>}, {pipeline_mode = #tpu.pipeline_mode<synchronous>, transform_indices = @transform_7, window_bounds = array<i64: 70, 70>}, {pipeline_mode = #tpu.pipeline_mode<synchronous>, transform_indices = @transform_8, window_bounds = array<i64: 70, 32>}, {pipeline_mode = #tpu.pipeline_mode<synchronous>, transform_indices = @transform_9, window_bounds = array<i64: 32, 32>}, {pipeline_mode = #tpu.pipeline_mode<synchronous>, transform_indices = @transform_10, window_bounds = array<i64: 32, 2>}, {pipeline_mode = #tpu.pipeline_mode<synchronous>, transform_indices = @transform_11, window_bounds = array<i64: 6, 70>}, {transform_indices = @transform_12, window_bounds = array<i64: 8, 1, 2>}]} {
    %c0 = arith.constant 0 : index
    %c0_0 = arith.constant 0 : index
    %c0_1 = arith.constant 0 : index
    %0 = vector.load %arg1[%c0, %c0_0, %c0_1] : memref<8x8x8xbf16, #tpu.memory_space<vmem>>, vector<8x8x8xbf16>
    %c0_2 = arith.constant 0 : index
    %c0_3 = arith.constant 0 : index
    %c0_4 = arith.constant 0 : index
    %1 = vector.load %arg3[%c0_2, %c0_3, %c0_4] : memref<8x8x8xbf16, #tpu.memory_space<vmem>>, vector<8x8x8xbf16>
    %2 = tpu.concatenate %0, %1 in 0 : vector<8x8x8xbf16>, vector<8x8x8xbf16> -> vector<16x8x8xbf16>
    %c0_5 = arith.constant 0 : index
    %c0_6 = arith.constant 0 : index
    %c0_7 = arith.constant 0 : index
    %3 = vector.load %arg2[%c0_5, %c0_6, %c0_7] : memref<8x8x4xbf16, #tpu.memory_space<vmem>>, vector<8x8x4xbf16>
    %c0_8 = arith.constant 0 : index
    %c0_9 = arith.constant 0 : index
    %c0_10 = arith.constant 0 : index
    %4 = vector.load %arg4[%c0_8, %c0_9, %c0_10] : memref<8x8x4xbf16, #tpu.memory_space<vmem>>, vector<8x8x4xbf16>
    %5 = tpu.concatenate %3, %4 in 0 : vector<8x8x4xbf16>, vector<8x8x4xbf16> -> vector<16x8x4xbf16>
    %6 = arith.extf %5 : vector<16x8x4xbf16> to vector<16x8x4xf32>
    %7 = arith.extf %2 : vector<16x8x8xbf16> to vector<16x8x8xf32>
    %cst = arith.constant dense<0.000000e+00> : vector<16x8xf32>
    %8 = vector.multi_reduction <add>, %7, %cst [2] : vector<16x8x8xf32> to vector<16x8xf32>
    %9 = vector.shape_cast %8 : vector<16x8xf32> to vector<16x8x1xf32>
    %cst_11 = arith.constant 1.000000e+00 : f32
    %10 = vector.broadcast %cst_11 : f32 to vector<16x8x1xf32>
    %11 = arith.addf %9, %10 : vector<16x8x1xf32>
    %12 = math.rsqrt %11 : vector<16x8x1xf32>
    %c0_12 = arith.constant 0 : index
    %c0_13 = arith.constant 0 : index
    %13 = vector.load %arg12[%c0_12, %c0_13] : memref<6x70xf32, #tpu.memory_space<vmem>>, vector<6x70xf32>
    %14 = vector.extract_strided_slice %13 {offsets = [0, 0], sizes = [1, 32], strides = [1, 1]} : vector<6x70xf32> to vector<1x32xf32>
    %15 = vector.extract_strided_slice %13 {offsets = [1, 0], sizes = [1, 32], strides = [1, 1]} : vector<6x70xf32> to vector<1x32xf32>
    %16 = vector.extract_strided_slice %13 {offsets = [2, 0], sizes = [1, 70], strides = [1, 1]} : vector<6x70xf32> to vector<1x70xf32>
    %17 = vector.extract_strided_slice %13 {offsets = [3, 0], sizes = [1, 32], strides = [1, 1]} : vector<6x70xf32> to vector<1x32xf32>
    %18 = vector.extract_strided_slice %13 {offsets = [4, 0], sizes = [1, 32], strides = [1, 1]} : vector<6x70xf32> to vector<1x32xf32>
    %19 = vector.extract_strided_slice %13 {offsets = [5, 0], sizes = [1, 2], strides = [1, 1]} : vector<6x70xf32> to vector<1x2xf32>
    %20 = vector.broadcast %12 : vector<16x8x1xf32> to vector<16x8x4xf32>
    %21 = arith.mulf %20, %6 : vector<16x8x4xf32>
    %22 = arith.truncf %21 : vector<16x8x4xf32> to vector<16x8x4xbf16>
    "tpu.trace_start"() <{level = 10 : i32, message = "gij,gjk->gik"}> : () -> ()
    %cst_14 = arith.constant dense<0.000000e+00> : vector<16x8x4xf32>
    %23 = tpu.matmul %2, %22, %cst_14 {dimension_numbers = #tpu.dot_dimension_numbers<[2], [1], [1], [2], [0, 0, 0, 1, 1, 2], [0], [0]>} : vector<16x8x8xbf16>, vector<16x8x4xbf16>, vector<16x8x4xf32> -> vector<16x8x4xf32>
    "tpu.trace_stop"() : () -> ()
    %24 = arith.addf %23, %21 : vector<16x8x4xf32>
    %25 = vector.broadcast %12 : vector<16x8x1xf32> to vector<16x8x4xf32>
    %26 = arith.mulf %25, %24 : vector<16x8x4xf32>
    %27 = vector.shape_cast %26 : vector<16x8x4xf32> to vector<128x4xf32>
    %28 = arith.truncf %27 : vector<128x4xf32> to vector<128x4xbf16>
    %c0_15 = arith.constant 0 : index
    %c0_16 = arith.constant 0 : index
    %29 = vector.load %arg6[%c0_15, %c0_16] : memref<4x32xbf16, #tpu.memory_space<vmem>>, vector<4x32xbf16>
    %cst_17 = arith.constant dense<0.000000e+00> : vector<128x32xf32>
    %30 = tpu.matmul %28, %29, %cst_17 {dimension_numbers = #tpu.dot_dimension_numbers<[1], [0], [0], [1], [0, 0, 1, 1], [], []>} : vector<128x4xbf16>, vector<4x32xbf16>, vector<128x32xf32> -> vector<128x32xf32>
    %31 = vector.broadcast %14 : vector<1x32xf32> to vector<128x32xf32>
    %32 = arith.addf %30, %31 : vector<128x32xf32>
    %cst_18 = arith.constant 0.000000e+00 : f32
    %33 = vector.broadcast %cst_18 : f32 to vector<128x32xf32>
    %34 = arith.maximumf %32, %33 : vector<128x32xf32>
    %35 = vector.shape_cast %34 : vector<128x32xf32> to vector<16x8x32xf32>
    %36 = vector.broadcast %12 : vector<16x8x1xf32> to vector<16x8x32xf32>
    %37 = arith.mulf %36, %35 : vector<16x8x32xf32>
    %38 = arith.truncf %37 : vector<16x8x32xf32> to vector<16x8x32xbf16>
    "tpu.trace_start"() <{level = 10 : i32, message = "gij,gjk->gik"}> : () -> ()
    %cst_19 = arith.constant dense<0.000000e+00> : vector<16x8x32xf32>
    %39 = tpu.matmul %2, %38, %cst_19 {dimension_numbers = #tpu.dot_dimension_numbers<[2], [1], [1], [2], [0, 0, 0, 1, 1, 2], [0], [0]>} : vector<16x8x8xbf16>, vector<16x8x32xbf16>, vector<16x8x32xf32> -> vector<16x8x32xf32>
    "tpu.trace_stop"() : () -> ()
    %40 = arith.addf %39, %37 : vector<16x8x32xf32>
    %41 = vector.broadcast %12 : vector<16x8x1xf32> to vector<16x8x32xf32>
    %42 = arith.mulf %41, %40 : vector<16x8x32xf32>
    %43 = vector.shape_cast %42 : vector<16x8x32xf32> to vector<128x32xf32>
    %44 = arith.truncf %43 : vector<128x32xf32> to vector<128x32xbf16>
    %c0_20 = arith.constant 0 : index
    %c0_21 = arith.constant 0 : index
    %45 = vector.load %arg7[%c0_20, %c0_21] : memref<32x32xbf16, #tpu.memory_space<vmem>>, vector<32x32xbf16>
    %cst_22 = arith.constant dense<0.000000e+00> : vector<128x32xf32>
    %46 = tpu.matmul %44, %45, %cst_22 {dimension_numbers = #tpu.dot_dimension_numbers<[1], [0], [0], [1], [0, 0, 1, 1], [], []>} : vector<128x32xbf16>, vector<32x32xbf16>, vector<128x32xf32> -> vector<128x32xf32>
    %47 = vector.broadcast %15 : vector<1x32xf32> to vector<128x32xf32>
    %48 = arith.addf %46, %47 : vector<128x32xf32>
    %cst_23 = arith.constant 0.000000e+00 : f32
    %49 = vector.broadcast %cst_23 : f32 to vector<128x32xf32>
    %50 = arith.maximumf %48, %49 : vector<128x32xf32>
    %51 = vector.shape_cast %50 : vector<128x32xf32> to vector<16x8x32xf32>
    %cst_24 = arith.constant dense<0.000000e+00> : vector<16x32xf32>
    %52 = vector.multi_reduction <add>, %51, %cst_24 [1] : vector<16x8x32xf32> to vector<16x32xf32>
    %cst_25 = arith.constant 8.000000e+00 : f32
    %53 = vector.broadcast %cst_25 : f32 to vector<16x32xf32>
    %54 = arith.divf %52, %53 : vector<16x32xf32>
    %55 = vector.extract_strided_slice %54 {offsets = [0, 0], sizes = [8, 32], strides = [1, 1]} : vector<16x32xf32> to vector<8x32xf32>
    %56 = vector.extract_strided_slice %54 {offsets = [8, 0], sizes = [8, 32], strides = [1, 1]} : vector<16x32xf32> to vector<8x32xf32>
    %c0_26 = arith.constant 0 : index
    %c0_27 = arith.constant 0 : index
    %c0_28 = arith.constant 0 : index
    %57 = vector.load %arg5[%c0_26, %c0_27, %c0_28] : memref<8x1x6xf32, #tpu.memory_space<vmem>>, vector<8x1x6xf32>
    %58 = vector.shape_cast %57 : vector<8x1x6xf32> to vector<8x6xf32>
    %c0_29 = arith.constant 0 : index
    %c0_30 = arith.constant 0 : index
    %59 = vector.load %arg8[%c0_29, %c0_30] : memref<70x70xf32, #tpu.memory_space<vmem>>, vector<70x70xf32>
    %60 = vector.extract_strided_slice %59 {offsets = [0, 0], sizes = [32, 70], strides = [1, 1]} : vector<70x70xf32> to vector<32x70xf32>
    %cst_31 = arith.constant dense<0.000000e+00> : vector<8x70xf32>
    %61 = tpu.matmul %55, %60, %cst_31 {dimension_numbers = #tpu.dot_dimension_numbers<[1], [0], [0], [1], [0, 0, 1, 1], [], []>} : vector<8x32xf32>, vector<32x70xf32>, vector<8x70xf32> -> vector<8x70xf32>
    %62 = vector.extract_strided_slice %59 {offsets = [32, 0], sizes = [32, 70], strides = [1, 1]} : vector<70x70xf32> to vector<32x70xf32>
    %cst_32 = arith.constant dense<0.000000e+00> : vector<8x70xf32>
    %63 = tpu.matmul %56, %62, %cst_32 {dimension_numbers = #tpu.dot_dimension_numbers<[1], [0], [0], [1], [0, 0, 1, 1], [], []>} : vector<8x32xf32>, vector<32x70xf32>, vector<8x70xf32> -> vector<8x70xf32>
    %64 = arith.addf %61, %63 : vector<8x70xf32>
    %65 = vector.extract_strided_slice %59 {offsets = [64, 0], sizes = [6, 70], strides = [1, 1]} : vector<70x70xf32> to vector<6x70xf32>
    %cst_33 = arith.constant dense<0.000000e+00> : vector<8x70xf32>
    %66 = tpu.matmul %58, %65, %cst_33 {dimension_numbers = #tpu.dot_dimension_numbers<[1], [0], [0], [1], [0, 0, 1, 1], [], []>} : vector<8x6xf32>, vector<6x70xf32>, vector<8x70xf32> -> vector<8x70xf32>
    %67 = arith.addf %64, %66 : vector<8x70xf32>
    %68 = vector.broadcast %16 : vector<1x70xf32> to vector<8x70xf32>
    %69 = arith.addf %67, %68 : vector<8x70xf32>
    %cst_34 = arith.constant 0.000000e+00 : f32
    %70 = vector.broadcast %cst_34 : f32 to vector<8x70xf32>
    %71 = arith.maximumf %69, %70 : vector<8x70xf32>
    %c0_35 = arith.constant 0 : index
    %c0_36 = arith.constant 0 : index
    %72 = vector.load %arg9[%c0_35, %c0_36] : memref<70x32xf32, #tpu.memory_space<vmem>>, vector<70x32xf32>
    %cst_37 = arith.constant dense<0.000000e+00> : vector<8x32xf32>
    %73 = tpu.matmul %71, %72, %cst_37 {dimension_numbers = #tpu.dot_dimension_numbers<[1], [0], [0], [1], [0, 0, 1, 1], [], []>} : vector<8x70xf32>, vector<70x32xf32>, vector<8x32xf32> -> vector<8x32xf32>
    %74 = vector.broadcast %17 : vector<1x32xf32> to vector<8x32xf32>
    %75 = arith.addf %73, %74 : vector<8x32xf32>
    %cst_38 = arith.constant 0.000000e+00 : f32
    %76 = vector.broadcast %cst_38 : f32 to vector<8x32xf32>
    %77 = arith.maximumf %75, %76 : vector<8x32xf32>
    %c0_39 = arith.constant 0 : index
    %c0_40 = arith.constant 0 : index
    %78 = vector.load %arg10[%c0_39, %c0_40] : memref<32x32xf32, #tpu.memory_space<vmem>>, vector<32x32xf32>
    %cst_41 = arith.constant dense<0.000000e+00> : vector<8x32xf32>
    %79 = tpu.matmul %77, %78, %cst_41 {dimension_numbers = #tpu.dot_dimension_numbers<[1], [0], [0], [1], [0, 0, 1, 1], [], []>} : vector<8x32xf32>, vector<32x32xf32>, vector<8x32xf32> -> vector<8x32xf32>
    %80 = vector.broadcast %18 : vector<1x32xf32> to vector<8x32xf32>
    %81 = arith.addf %79, %80 : vector<8x32xf32>
    %cst_42 = arith.constant 0.000000e+00 : f32
    %82 = vector.broadcast %cst_42 : f32 to vector<8x32xf32>
    %83 = arith.maximumf %81, %82 : vector<8x32xf32>
    %c0_43 = arith.constant 0 : index
    %c0_44 = arith.constant 0 : index
    %84 = vector.load %arg11[%c0_43, %c0_44] : memref<32x2xf32, #tpu.memory_space<vmem>>, vector<32x2xf32>
    %cst_45 = arith.constant dense<0.000000e+00> : vector<8x2xf32>
    %85 = tpu.matmul %83, %84, %cst_45 {dimension_numbers = #tpu.dot_dimension_numbers<[1], [0], [0], [1], [0, 0, 1, 1], [], []>} : vector<8x32xf32>, vector<32x2xf32>, vector<8x2xf32> -> vector<8x2xf32>
    %86 = vector.broadcast %19 : vector<1x2xf32> to vector<8x2xf32>
    %87 = arith.addf %85, %86 : vector<8x2xf32>
    %c0_46 = arith.constant 0 : index
    %c0_47 = arith.constant 0 : index
    %c0_48 = arith.constant 0 : index
    %88 = vector.load %arg13[%c0_46, %c0_47, %c0_48] : memref<8x1x2xf32, #tpu.memory_space<vmem>>, vector<8x1x2xf32>
    %89 = vector.shape_cast %88 : vector<8x1x2xf32> to vector<8x2xf32>
    %90 = vector.shape_cast %87 : vector<8x2xf32> to vector<8x1x2xf32>
    tpu.vector_store %arg13[%c0_46, %c0_47, %c0_48], %90 {strides = array<i32>} : memref<8x1x2xf32, #tpu.memory_space<vmem>>, vector<8x1x2xf32>,
    return
  }
  func.func @transform_0(%arg0: i32) -> (i32, i32, i32) {
    %c0_i32 = arith.constant 0 : i32
    %c0_i32_0 = arith.constant 0 : i32
    %c0_i32_1 = arith.constant 0 : i32
    return %arg0, %c0_i32, %c0_i32_0 : i32, i32, i32
  }
  func.func @transform_1(%arg0: i32) -> (i32, i32, i32) {
    %c0_i32 = arith.constant 0 : i32
    %c0_i32_0 = arith.constant 0 : i32
    %c0_i32_1 = arith.constant 0 : i32
    return %arg0, %c0_i32, %c0_i32_0 : i32, i32, i32
  }
  func.func @transform_2(%arg0: i32) -> (i32, i32, i32) {
    %c0_i32 = arith.constant 0 : i32
    %c0_i32_0 = arith.constant 0 : i32
    %c0_i32_1 = arith.constant 0 : i32
    return %arg0, %c0_i32, %c0_i32_0 : i32, i32, i32
  }
  func.func @transform_3(%arg0: i32) -> (i32, i32, i32) {
    %c0_i32 = arith.constant 0 : i32
    %c0_i32_0 = arith.constant 0 : i32
    %c0_i32_1 = arith.constant 0 : i32
    return %arg0, %c0_i32, %c0_i32_0 : i32, i32, i32
  }
  func.func @transform_4(%arg0: i32) -> (i32, i32, i32) {
    %c0_i32 = arith.constant 0 : i32
    %c0_i32_0 = arith.constant 0 : i32
    %c0_i32_1 = arith.constant 0 : i32
    return %arg0, %c0_i32, %c0_i32_0 : i32, i32, i32
  }
  func.func @transform_5(%arg0: i32) -> (i32, i32) {
    %c0_i32 = arith.constant 0 : i32
    %c0_i32_0 = arith.constant 0 : i32
    %c0_i32_1 = arith.constant 0 : i32
    return %c0_i32, %c0_i32_0 : i32, i32
  }
  func.func @transform_6(%arg0: i32) -> (i32, i32) {
    %c0_i32 = arith.constant 0 : i32
    %c0_i32_0 = arith.constant 0 : i32
    %c0_i32_1 = arith.constant 0 : i32
    return %c0_i32, %c0_i32_0 : i32, i32
  }
  func.func @transform_7(%arg0: i32) -> (i32, i32) {
    %c0_i32 = arith.constant 0 : i32
    %c0_i32_0 = arith.constant 0 : i32
    %c0_i32_1 = arith.constant 0 : i32
    return %c0_i32, %c0_i32_0 : i32, i32
  }
  func.func @transform_8(%arg0: i32) -> (i32, i32) {
    %c0_i32 = arith.constant 0 : i32
    %c0_i32_0 = arith.constant 0 : i32
    %c0_i32_1 = arith.constant 0 : i32
    return %c0_i32, %c0_i32_0 : i32, i32
  }
  func.func @transform_9(%arg0: i32) -> (i32, i32) {
    %c0_i32 = arith.constant 0 : i32
    %c0_i32_0 = arith.constant 0 : i32
    %c0_i32_1 = arith.constant 0 : i32
    return %c0_i32, %c0_i32_0 : i32, i32
  }
  func.func @transform_10(%arg0: i32) -> (i32, i32) {
    %c0_i32 = arith.constant 0 : i32
    %c0_i32_0 = arith.constant 0 : i32
    %c0_i32_1 = arith.constant 0 : i32
    return %c0_i32, %c0_i32_0 : i32, i32
  }
  func.func @transform_11(%arg0: i32) -> (i32, i32) {
    %c0_i32 = arith.constant 0 : i32
    %c0_i32_0 = arith.constant 0 : i32
    %c0_i32_1 = arith.constant 0 : i32
    return %c0_i32, %c0_i32_0 : i32, i32
  }
  func.func @transform_12(%arg0: i32) -> (i32, i32, i32) {
    %c0_i32 = arith.constant 0 : i32
    %c0_i32_0 = arith.constant 0 : i32
    %c0_i32_1 = arith.constant 0 : i32
    return %arg0, %c0_i32, %c0_i32_0 : i32, i32, i32
  }
}

</mosaic_0001>

<llo_original>
// kernel: gcnreg_binary_add_forward.1
$region0: #{gcnreg_binary_add_forward.1}
  #allocation0 [shape = 'u32[]', space=smem, size = 0x4, offset = 0x4, fixed_abs, tag = 'smem constant byte address 0x4 - core index']
  #allocation1 [shape = 'u32[144,128]{1,0:T(1,128)}', space=vmem, size = 0x12000, scoped, tag = 'internal scratch']
  %s0 = inlined_call_operand.vmem [shape: bf16[24,8,8], index: 0, kind: input, shape index: {}]
  %s1 = inlined_call_operand.vmem [shape: bf16[24,8,4], index: 1, kind: input, shape index: {}]
  %s2 = inlined_call_operand.vmem [shape: bf16[24,8,8], index: 2, kind: input, shape index: {}]
  %s3 = inlined_call_operand.vmem [shape: bf16[24,8,4], index: 3, kind: input, shape index: {}]
  %s4 = inlined_call_operand.vmem [shape: f32[24,1,6], index: 4, kind: input, shape index: {}]
  %s5 = inlined_call_operand.vmem [shape: bf16[4,32], index: 5, kind: input, shape index: {}]
  %s6 = inlined_call_operand.vmem [shape: bf16[32,32], index: 6, kind: input, shape index: {}]
  %s7 = inlined_call_operand.vmem [shape: f32[70,70], index: 7, kind: input, shape index: {}]
  %s8 = inlined_call_operand.vmem [shape: f32[70,32], index: 8, kind: input, shape index: {}]
  %s9 = inlined_call_operand.vmem [shape: f32[32,32], index: 9, kind: input, shape index: {}]
  %s10 = inlined_call_operand.vmem [shape: f32[32,2], index: 10, kind: input, shape index: {}]
  %s11 = inlined_call_operand.vmem [shape: f32[6,70], index: 11, kind: input, shape index: {}]
  %s12 = inlined_call_operand.vmem [shape: f32[24,1,2], index: 12, kind: output, shape index: {}]
  %s13 = sld [smem:[#allocation0]]
  $region81: #{gcnreg_binary_add_forward.1} parent=0
    _
  %s15 = ssub.s32 1, %s13
  %s16 = scalar_select 0, %s15, %s13
  loop: start=0, step=1, limit=5
  $region2: #{gcnreg_binary_add_forward.1} parent=0 // loop_pre_header
    _
  $region3: #{gcnreg_binary_add_forward.1} parent=0 // loop_header
    %s18 = sphi 0, %s22
    %p19 = scmp.ge.s32.totalorder %s18, 5
    %s28 = sphi 0, %s30
    %s31 = sphi 0, %s28
    %s32 = sphi 0, %s31
    %s48 = sphi 0, %s32
    %s54 = sphi 0, %s56
    %s57 = sphi 0, %s54
    %s58 = sphi 0, %s57
    %s74 = sphi 0, %s58
    %s80 = sphi 0, %s82
    %s83 = sphi 0, %s80
    %s84 = sphi 0, %s83
    %s100 = sphi 0, %s84
    %s106 = sphi 0, %s108
    %s109 = sphi 0, %s106
    %s110 = sphi 0, %s109
    %s126 = sphi 0, %s110
    %s132 = sphi 0, %s134
    %s135 = sphi 0, %s132
    %s136 = sphi 0, %s135
    %s152 = sphi 0, %s136
    %s156 = sphi 0, %s156
    %s158 = sphi 0, %s156
    %s159 = sphi 0, %s158
    %s173 = sphi 0, %s159
    %s177 = sphi 0, %s177
    %s179 = sphi 0, %s177
    %s180 = sphi 0, %s179
    %s194 = sphi 0, %s180
    %s198 = sphi 0, %s198
    %s200 = sphi 0, %s198
    %s201 = sphi 0, %s200
    %s215 = sphi 0, %s201
    %s219 = sphi 0, %s219
    %s221 = sphi 0, %s219
    %s222 = sphi 0, %s221
    %s236 = sphi 0, %s222
    %s240 = sphi 0, %s240
    %s242 = sphi 0, %s240
    %s243 = sphi 0, %s242
    %s257 = sphi 0, %s243
    %s261 = sphi 0, %s261
    %s263 = sphi 0, %s261
    %s264 = sphi 0, %s263
    %s278 = sphi 0, %s264
    %s282 = sphi 0, %s282
    %s284 = sphi 0, %s282
    %s285 = sphi 0, %s284
    %s299 = sphi 0, %s285
    %s305 = sphi 0, %s307
    %s308 = sphi 0, %s305
    %s309 = sphi 0, %s308
    %s325 = sphi 0, %s309
  $region4: #{gcnreg_binary_add_forward.1} parent=0 // loop_header_branch
    %21 = sbr.rel (%p19) target = $region8
  $region5: #{gcnreg_binary_add_forward.1} parent=0 // loop_body
    %s23 = ssub.s32 %s18, 1
    %s24 = ssub.s32 %s18, 2
    %s25 = sadd.s32 %s18, 1
    %s26 = ssub.s32 %s18, %s25
    %p27 = scmp.eq.s32.totalorder %s26, 0
    %s29 = sadd.s32 %s28, 1
    %s30 = scalar_select %p27, %s28, %s29
    %p33 = pneg %p27
    %p34 = scmp.eq.s32.totalorder %s18, 2
    %p35 = por %p33, %p34
    %p36 = scmp.ne.s32.totalorder %s28, %s31
    %p37 = scmp.eq.s32.totalorder %s18, 0
    %p38 = por %p36, %p37
    %p39 = scmp.ne.s32.totalorder %s28, %s31
    %p40 = scmp.eq.s32.totalorder %s23, 2
    %p41 = por %p39, %p40
    %p42 = scmp.ne.s32.totalorder %s31, %s32
    %p43 = scmp.eq.s32.totalorder %s23, 0
    %p44 = por %p42, %p43
    %p45 = scmp.ne.s32.totalorder %s31, %s32
    %p46 = scmp.eq.s32.totalorder %s24, 2
    %p47 = por %p45, %p46
    %p49 = scmp.ne.s32.totalorder %s32, %s48
    %p50 = scmp.eq.s32.totalorder %s24, 0
    %p51 = por %p49, %p50
    %s52 = ssub.s32 %s18, %s25
    %p53 = scmp.eq.s32.totalorder %s52, 0
    %s55 = sadd.s32 %s54, 1
    %s56 = scalar_select %p53, %s54, %s55
    %p59 = pneg %p53
    %p60 = scmp.eq.s32.totalorder %s18, 2
    %p61 = por %p59, %p60
    %p62 = scmp.ne.s32.totalorder %s54, %s57
    %p63 = scmp.eq.s32.totalorder %s18, 0
    %p64 = por %p62, %p63
    %p65 = scmp.ne.s32.totalorder %s54, %s57
    %p66 = scmp.eq.s32.totalorder %s23, 2
    %p67 = por %p65, %p66
    %p68 = scmp.ne.s32.totalorder %s57, %s58
    %p69 = scmp.eq.s32.totalorder %s23, 0
    %p70 = por %p68, %p69
    %p71 = scmp.ne.s32.totalorder %s57, %s58
    %p72 = scmp.eq.s32.totalorder %s24, 2
    %p73 = por %p71, %p72
    %p75 = scmp.ne.s32.totalorder %s58, %s74
    %p76 = scmp.eq.s32.totalorder %s24, 0
    %p77 = por %p75, %p76
    %s78 = ssub.s32 %s18, %s25
    %p79 = scmp.eq.s32.totalorder %s78, 0
    %s81 = sadd.s32 %s80, 1
    %s82 = scalar_select %p79, %s80, %s81
    %p85 = pneg %p79
    %p86 = scmp.eq.s32.totalorder %s18, 2
    %p87 = por %p85, %p86
    %p88 = scmp.ne.s32.totalorder %s80, %s83
    %p89 = scmp.eq.s32.totalorder %s18, 0
    %p90 = por %p88, %p89
    %p91 = scmp.ne.s32.totalorder %s80, %s83
    %p92 = scmp.eq.s32.totalorder %s23, 2
    %p93 = por %p91, %p92
    %p94 = scmp.ne.s32.totalorder %s83, %s84
    %p95 = scmp.eq.s32.totalorder %s23, 0
    %p96 = por %p94, %p95
    %p97 = scmp.ne.s32.totalorder %s83, %s84
    %p98 = scmp.eq.s32.totalorder %s24, 2
    %p99 = por %p97, %p98
    %p101 = scmp.ne.s32.totalorder %s84, %s100
    %p102 = scmp.eq.s32.totalorder %s24, 0
    %p103 = por %p101, %p102
    %s104 = ssub.s32 %s18, %s25
    %p105 = scmp.eq.s32.totalorder %s104, 0
    %s107 = sadd.s32 %s106, 1
    %s108 = scalar_select %p105, %s106, %s107
    %p111 = pneg %p105
    %p112 = scmp.eq.s32.totalorder %s18, 2
    %p113 = por %p111, %p112
    %p114 = scmp.ne.s32.totalorder %s106, %s109
    %p115 = scmp.eq.s32.totalorder %s18, 0
    %p116 = por %p114, %p115
    %p117 = scmp.ne.s32.totalorder %s106, %s109
    %p118 = scmp.eq.s32.totalorder %s23, 2
    %p119 = por %p117, %p118
    %p120 = scmp.ne.s32.totalorder %s109, %s110
    %p121 = scmp.eq.s32.totalorder %s23, 0
    %p122 = por %p120, %p121
    %p123 = scmp.ne.s32.totalorder %s109, %s110
    %p124 = scmp.eq.s32.totalorder %s24, 2
    %p125 = por %p123, %p124
    %p127 = scmp.ne.s32.totalorder %s110, %s126
    %p128 = scmp.eq.s32.totalorder %s24, 0
    %p129 = por %p127, %p128
    %s130 = ssub.s32 %s18, %s25
    %p131 = scmp.eq.s32.totalorder %s130, 0
    %s133 = sadd.s32 %s132, 1
    %s134 = scalar_select %p131, %s132, %s133
    %p137 = pneg %p131
    %p138 = scmp.eq.s32.totalorder %s18, 2
    %p139 = por %p137, %p138
    %p140 = scmp.ne.s32.totalorder %s132, %s135
    %p141 = scmp.eq.s32.totalorder %s18, 0
    %p142 = por %p140, %p141
    %p143 = scmp.ne.s32.totalorder %s132, %s135
    %p144 = scmp.eq.s32.totalorder %s23, 2
    %p145 = por %p143, %p144
    %p146 = scmp.ne.s32.totalorder %s135, %s136
    %p147 = scmp.eq.s32.totalorder %s23, 0
    %p148 = por %p146, %p147
    %p149 = scmp.ne.s32.totalorder %s135, %s136
    %p150 = scmp.eq.s32.totalorder %s24, 2
    %p151 = por %p149, %p150
    %p153 = scmp.ne.s32.totalorder %s136, %s152
    %p154 = scmp.eq.s32.totalorder %s24, 0
    %p155 = por %p153, %p154
    %s157 = sadd.s32 %s156, 1
    %p160 = scmp.eq.s32.totalorder %s18, 2
    %p161 = scmp.ne.s32.totalorder %s156, %s158
    %p162 = scmp.eq.s32.totalorder %s18, 0
    %p163 = por %p161, %p162
    %p164 = scmp.ne.s32.totalorder %s156, %s158
    %p165 = scmp.eq.s32.totalorder %s23, 2
    %p166 = por %p164, %p165
    %p167 = scmp.ne.s32.totalorder %s158, %s159
    %p168 = scmp.eq.s32.totalorder %s23, 0
    %p169 = por %p167, %p168
    %p170 = scmp.ne.s32.totalorder %s158, %s159
    %p171 = scmp.eq.s32.totalorder %s24, 2
    %p172 = por %p170, %p171
    %p174 = scmp.ne.s32.totalorder %s159, %s173
    %p175 = scmp.eq.s32.totalorder %s24, 0
    %p176 = por %p174, %p175
    %s178 = sadd.s32 %s177, 1
    %p181 = scmp.eq.s32.totalorder %s18, 2
    %p182 = scmp.ne.s32.totalorder %s177, %s179
    %p183 = scmp.eq.s32.totalorder %s18, 0
    %p184 = por %p182, %p183
    %p185 = scmp.ne.s32.totalorder %s177, %s179
    %p186 = scmp.eq.s32.totalorder %s23, 2
    %p187 = por %p185, %p186
    %p188 = scmp.ne.s32.totalorder %s179, %s180
    %p189 = scmp.eq.s32.totalorder %s23, 0
    %p190 = por %p188, %p189
    %p191 = scmp.ne.s32.totalorder %s179, %s180
    %p192 = scmp.eq.s32.totalorder %s24, 2
    %p193 = por %p191, %p192
    %p195 = scmp.ne.s32.totalorder %s180, %s194
    %p196 = scmp.eq.s32.totalorder %s24, 0
    %p197 = por %p195, %p196
    %s199 = sadd.s32 %s198, 1
    %p202 = scmp.eq.s32.totalorder %s18, 2
    %p203 = scmp.ne.s32.totalorder %s198, %s200
    %p204 = scmp.eq.s32.totalorder %s18, 0
    %p205 = por %p203, %p204
    %p206 = scmp.ne.s32.totalorder %s198, %s200
    %p207 = scmp.eq.s32.totalorder %s23, 2
    %p208 = por %p206, %p207
    %p209 = scmp.ne.s32.totalorder %s200, %s201
    %p210 = scmp.eq.s32.totalorder %s23, 0
    %p211 = por %p209, %p210
    %p212 = scmp.ne.s32.totalorder %s200, %s201
    %p213 = scmp.eq.s32.totalorder %s24, 2
    %p214 = por %p212, %p213
    %p216 = scmp.ne.s32.totalorder %s201, %s215
    %p217 = scmp.eq.s32.totalorder %s24, 0
    %p218 = por %p216, %p217
    %s220 = sadd.s32 %s219, 1
    %p223 = scmp.eq.s32.totalorder %s18, 2
    %p224 = scmp.ne.s32.totalorder %s219, %s221
    %p225 = scmp.eq.s32.totalorder %s18, 0
    %p226 = por %p224, %p225
    %p227 = scmp.ne.s32.totalorder %s219, %s221
    %p228 = scmp.eq.s32.totalorder %s23, 2
    %p229 = por %p227, %p228
    %p230 = scmp.ne.s32.totalorder %s221, %s222
    %p231 = scmp.eq.s32.totalorder %s23, 0
    %p232 = por %p230, %p231
    %p233 = scmp.ne.s32.totalorder %s221, %s222
    %p234 = scmp.eq.s32.totalorder %s24, 2
    %p235 = por %p233, %p234
    %p237 = scmp.ne.s32.totalorder %s222, %s236
    %p238 = scmp.eq.s32.totalorder %s24, 0
    %p239 = por %p237, %p238
    %s241 = sadd.s32 %s240, 1
    %p244 = scmp.eq.s32.totalorder %s18, 2
    %p245 = scmp.ne.s32.totalorder %s240, %s242
    %p246 = scmp.eq.s32.totalorder %s18, 0
    %p247 = por %p245, %p246
    %p248 = scmp.ne.s32.totalorder %s240, %s242
    %p249 = scmp.eq.s32.totalorder %s23, 2
    %p250 = por %p248, %p249
    %p251 = scmp.ne.s32.totalorder %s242, %s243
    %p252 = scmp.eq.s32.totalorder %s23, 0
    %p253 = por %p251, %p252
    %p254 = scmp.ne.s32.totalorder %s242, %s243
    %p255 = scmp.eq.s32.totalorder %s24, 2
    %p256 = por %p254, %p255
    %p258 = scmp.ne.s32.totalorder %s243, %s257
    %p259 = scmp.eq.s32.totalorder %s24, 0
    %p260 = por %p258, %p259
    %s262 = sadd.s32 %s261, 1
    %p265 = scmp.eq.s32.totalorder %s18, 2
    %p266 = scmp.ne.s32.totalorder %s261, %s263
    %p267 = scmp.eq.s32.totalorder %s18, 0
    %p268 = por %p266, %p267
    %p269 = scmp.ne.s32.totalorder %s261, %s263
    %p270 = scmp.eq.s32.totalorder %s23, 2
    %p271 = por %p269, %p270
    %p272 = scmp.ne.s32.totalorder %s263, %s264
    %p273 = scmp.eq.s32.totalorder %s23, 0
    %p274 = por %p272, %p273
    %p275 = scmp.ne.s32.totalorder %s263, %s264
    %p276 = scmp.eq.s32.totalorder %s24, 2
    %p277 = por %p275, %p276
    %p279 = scmp.ne.s32.totalorder %s264, %s278
    %p280 = scmp.eq.s32.totalorder %s24, 0
    %p281 = por %p279, %p280
    %s283 = sadd.s32 %s282, 1
    %p286 = scmp.eq.s32.totalorder %s18, 2
    %p287 = scmp.ne.s32.totalorder %s282, %s284
    %p288 = scmp.eq.s32.totalorder %s18, 0
    %p289 = por %p287, %p288
    %p290 = scmp.ne.s32.totalorder %s282, %s284
    %p291 = scmp.eq.s32.totalorder %s23, 2
    %p292 = por %p290, %p291
    %p293 = scmp.ne.s32.totalorder %s284, %s285
    %p294 = scmp.eq.s32.totalorder %s23, 0
    %p295 = por %p293, %p294
    %p296 = scmp.ne.s32.totalorder %s284, %s285
    %p297 = scmp.eq.s32.totalorder %s24, 2
    %p298 = por %p296, %p297
    %p300 = scmp.ne.s32.totalorder %s285, %s299
    %p301 = scmp.eq.s32.totalorder %s24, 0
    %p302 = por %p300, %p301
    %s303 = ssub.s32 %s18, %s25
    %p304 = scmp.eq.s32.totalorder %s303, 0
    %s306 = sadd.s32 %s305, 1
    %s307 = scalar_select %p304, %s305, %s306
    %p310 = pneg %p304
    %p311 = scmp.eq.s32.totalorder %s18, 2
    %p312 = por %p310, %p311
    %p313 = scmp.ne.s32.totalorder %s305, %s308
    %p314 = scmp.eq.s32.totalorder %s18, 0
    %p315 = por %p313, %p314
    %p316 = scmp.ne.s32.totalorder %s305, %s308
    %p317 = scmp.eq.s32.totalorder %s23, 2
    %p318 = por %p316, %p317
    %p319 = scmp.ne.s32.totalorder %s308, %s309
    %p320 = scmp.eq.s32.totalorder %s23, 0
    %p321 = por %p319, %p320
    %p322 = scmp.ne.s32.totalorder %s308, %s309
    %p323 = scmp.eq.s32.totalorder %s24, 2
    %p324 = por %p322, %p323
    %p326 = scmp.ne.s32.totalorder %s309, %s325
    %p327 = scmp.eq.s32.totalorder %s24, 0
    %p328 = por %p326, %p327
    %p329 = scmp.le.s32.totalorder 1, %s18
    %p330 = scmp.lt.s32.totalorder %s18, 4
    %p331 = pnand %p329, %p330
    %p332 = pneg %p331
    // Predicated region
    $region9: #{gcnreg_binary_add_forward.1} parent=5 // pred_check
      _
    $region10: #{gcnreg_binary_add_forward.1} parent=5 // pred_check_branch
      %334 = sbr.rel (%p331) target = $region12
    $region11: #{gcnreg_binary_add_forward.1} parent=5 // pred_region
      %s335 = ssub.s32 %s18, 1
      // Predicated region
      $region13: #{gcnreg_binary_add_forward.1} parent=11 // pred_check
        %p336 = pneg %p169
      $region14: #{gcnreg_binary_add_forward.1} parent=11 // pred_check_branch
        %338 = sbr.rel (%p336) target = $region16
      $region15: #{gcnreg_binary_add_forward.1} parent=11 // pred_region
        _
      $region16: #{gcnreg_binary_add_forward.1} parent=11 // pred_fallthru
        _
      // Predicated region
      $region17: #{gcnreg_binary_add_forward.1} parent=11 // pred_check
        %p339 = pneg %p190
      $region18: #{gcnreg_binary_add_forward.1} parent=11 // pred_check_branch
        %341 = sbr.rel (%p339) target = $region20
      $region19: #{gcnreg_binary_add_forward.1} parent=11 // pred_region
        _
      $region20: #{gcnreg_binary_add_forward.1} parent=11 // pred_fallthru
        _
      // Predicated region
      $region21: #{gcnreg_binary_add_forward.1} parent=11 // pred_check
        %p342 = pneg %p211
      $region22: #{gcnreg_binary_add_forward.1} parent=11 // pred_check_branch
        %344 = sbr.rel (%p342) target = $region24
      $region23: #{gcnreg_binary_add_forward.1} parent=11 // pred_region
        _
      $region24: #{gcnreg_binary_add_forward.1} parent=11 // pred_fallthru
        _
      // Predicated region
      $region25: #{gcnreg_binary_add_forward.1} parent=11 // pred_check
        %p345 = pneg %p232
      $region26: #{gcnreg_binary_add_forward.1} parent=11 // pred_check_branch
        %347 = sbr.rel (%p345) target = $region28
      $region27: #{gcnreg_binary_add_forward.1} parent=11 // pred_region
        _
      $region28: #{gcnreg_binary_add_forward.1} parent=11 // pred_fallthru
        _
      // Predicated region
      $region29: #{gcnreg_binary_add_forward.1} parent=11 // pred_check
        %p348 = pneg %p253
      $region30: #{gcnreg_binary_add_forward.1} parent=11 // pred_check_branch
        %350 = sbr.rel (%p348) target = $region32
      $region31: #{gcnreg_binary_add_forward.1} parent=11 // pred_region
        _
      $region32: #{gcnreg_binary_add_forward.1} parent=11 // pred_fallthru
        _
      // Predicated region
      $region33: #{gcnreg_binary_add_forward.1} parent=11 // pred_check
        %p351 = pneg %p274
      $region34: #{gcnreg_binary_add_forward.1} parent=11 // pred_check_branch
        %353 = sbr.rel (%p351) target = $region36
      $region35: #{gcnreg_binary_add_forward.1} parent=11 // pred_region
        _
      $region36: #{gcnreg_binary_add_forward.1} parent=11 // pred_fallthru
        _
      // Predicated region
      $region37: #{gcnreg_binary_add_forward.1} parent=11 // pred_check
        %p354 = pneg %p295
      $region38: #{gcnreg_binary_add_forward.1} parent=11 // pred_check_branch
        %356 = sbr.rel (%p354) target = $region40
      $region39: #{gcnreg_binary_add_forward.1} parent=11 // pred_region
        _
      $region40: #{gcnreg_binary_add_forward.1} parent=11 // pred_fallthru
        _
    $region12: #{gcnreg_binary_add_forward.1} parent=5 // pred_fallthru
      _
    %p357 = scmp.lt.s32.totalorder %s18, 3
    // Predicated region
    $region41: #{gcnreg_binary_add_forward.1} parent=5 // pred_check
      %p358 = pneg %p357
    $region42: #{gcnreg_binary_add_forward.1} parent=5 // pred_check_branch
      %360 = sbr.rel (%p358) target = $region44
    $region43: #{gcnreg_binary_add_forward.1} parent=5 // pred_region
      // Predicated region
      $region45: #{gcnreg_binary_add_forward.1} parent=43 // pred_check
        %p361 = pneg %p38
      $region46: #{gcnreg_binary_add_forward.1} parent=43 // pred_check_branch
        %363 = sbr.rel (%p361) target = $region48
      $region47: #{gcnreg_binary_add_forward.1} parent=43 // pred_region
        %s364 = smul.u32 8, %s18
        %p365 = scmp.lt.s32.totalorder %s364, 23
        %s366 = scalar_select %p365, %s364, 23
        %s367 = smul.addr %s366, 4
        %s368 = scalar_lea.vmem %s0, %s367
        %s369 = smul.u32 8, %s18
      $region48: #{gcnreg_binary_add_forward.1} parent=43 // pred_fallthru
        _
      // Predicated region
      $region49: #{gcnreg_binary_add_forward.1} parent=43 // pred_check
        %p370 = pneg %p64
      $region50: #{gcnreg_binary_add_forward.1} parent=43 // pred_check_branch
        %372 = sbr.rel (%p370) target = $region52
      $region51: #{gcnreg_binary_add_forward.1} parent=43 // pred_region
        %s373 = smul.u32 8, %s18
        %p374 = scmp.lt.s32.totalorder %s373, 23
        %s375 = scalar_select %p374, %s373, 23
        %s376 = smul.addr %s375, 4
        %s377 = scalar_lea.vmem %s1, %s376
        %s378 = smul.u32 8, %s18
      $region52: #{gcnreg_binary_add_forward.1} parent=43 // pred_fallthru
        _
      // Predicated region
      $region53: #{gcnreg_binary_add_forward.1} parent=43 // pred_check
        %p379 = pneg %p90
      $region54: #{gcnreg_binary_add_forward.1} parent=43 // pred_check_branch
        %381 = sbr.rel (%p379) target = $region56
      $region55: #{gcnreg_binary_add_forward.1} parent=43 // pred_region
        %s382 = smul.u32 8, %s18
        %p383 = scmp.lt.s32.totalorder %s382, 23
        %s384 = scalar_select %p383, %s382, 23
        %s385 = smul.addr %s384, 4
        %s386 = scalar_lea.vmem %s2, %s385
        %s387 = smul.u32 8, %s18
      $region56: #{gcnreg_binary_add_forward.1} parent=43 // pred_fallthru
        _
      // Predicated region
      $region57: #{gcnreg_binary_add_forward.1} parent=43 // pred_check
        %p388 = pneg %p116
      $region58: #{gcnreg_binary_add_forward.1} parent=43 // pred_check_branch
        %390 = sbr.rel (%p388) target = $region60
      $region59: #{gcnreg_binary_add_forward.1} parent=43 // pred_region
        %s391 = smul.u32 8, %s18
        %p392 = scmp.lt.s32.totalorder %s391, 23
        %s393 = scalar_select %p392, %s391, 23
        %s394 = smul.addr %s393, 4
        %s395 = scalar_lea.vmem %s3, %s394
        %s396 = smul.u32 8, %s18
      $region60: #{gcnreg_binary_add_forward.1} parent=43 // pred_fallthru
        _
      // Predicated region
      $region61: #{gcnreg_binary_add_forward.1} parent=43 // pred_check
        %p397 = pneg %p142
      $region62: #{gcnreg_binary_add_forward.1} parent=43 // pred_check_branch
        %399 = sbr.rel (%p397) target = $region64
      $region63: #{gcnreg_binary_add_forward.1} parent=43 // pred_region
        %s400 = smul.u32 8, %s18
        %p401 = scmp.lt.s32.totalorder %s400, 23
        %s402 = scalar_select %p401, %s400, 23
        %s403 = scalar_lea.vmem %s4, %s402
        %s404 = smul.u32 8, %s18
      $region64: #{gcnreg_binary_add_forward.1} parent=43 // pred_fallthru
        _
    $region44: #{gcnreg_binary_add_forward.1} parent=5 // pred_fallthru
      _
    %p405 = scmp.le.s32.totalorder 1, %s18
    %p406 = scmp.lt.s32.totalorder %s18, 4
    %p407 = pnand %p405, %p406
    %p408 = pneg %p407
    // Predicated region
    $region65: #{gcnreg_binary_add_forward.1} parent=5 // pred_check
      _
    $region66: #{gcnreg_binary_add_forward.1} parent=5 // pred_check_branch
      %410 = sbr.rel (%p407) target = $region68
    $region67: #{gcnreg_binary_add_forward.1} parent=5 // pred_region
      %s411 = ssub.s32 %s18, 1
      %s412 = smul.u32 8, %s23
      %p413 = scmp.lt.s32.totalorder %s412, 23
      %s414 = scalar_select %p413, %s412, 23
      %s415 = smul.addr %s414, 4
      %s416 = scalar_lea.vmem %s0, %s415
      %p417 = pneg %p44
      %p418 = pneg %p41
      %s419 = smul.u32 8, %s23
      %p420 = scmp.lt.s32.totalorder %s419, 23
      %s421 = scalar_select %p420, %s419, 23
      %s422 = smul.addr %s421, 4
      %s423 = scalar_lea.vmem %s1, %s422
      %p424 = pneg %p70
      %p425 = pneg %p67
      %s426 = smul.u32 8, %s23
      %p427 = scmp.lt.s32.totalorder %s426, 23
      %s428 = scalar_select %p427, %s426, 23
      %s429 = smul.addr %s428, 4
      %s430 = scalar_lea.vmem %s2, %s429
      %p431 = pneg %p96
      %p432 = pneg %p93
      %s433 = smul.u32 8, %s23
      %p434 = scmp.lt.s32.totalorder %s433, 23
      %s435 = scalar_select %p434, %s433, 23
      %s436 = smul.addr %s435, 4
      %s437 = scalar_lea.vmem %s3, %s436
      %p438 = pneg %p122
      %p439 = pneg %p119
      %s440 = smul.u32 8, %s23
      %p441 = scmp.lt.s32.totalorder %s440, 23
      %s442 = scalar_select %p441, %s440, 23
      %s443 = scalar_lea.vmem %s4, %s442
      %p444 = pneg %p148
      %p445 = pneg %p145
      %p446 = pneg %p169
      %p447 = pneg %p166
      %p448 = pneg %p190
      %p449 = pneg %p187
      %p450 = pneg %p211
      %p451 = pneg %p208
      %p452 = pneg %p232
      %p453 = pneg %p229
      %p454 = pneg %p253
      %p455 = pneg %p250
      %p456 = pneg %p274
      %p457 = pneg %p271
      %p458 = pneg %p295
      %p459 = pneg %p292
      %p460 = pneg %p321
      %p461 = pneg %p318
      %s462 = smul.u32 8, %s23
      %p463 = scmp.lt.s32.totalorder %s462, 23
      %s464 = scalar_select %p463, %s462, 23
      %s465 = scalar_lea.vmem %s12, %s464
      %s466 = smul.u32 8, %s23
      %p467 = scmp.lt.s32.totalorder %s466, 23
      %s468 = scalar_select %p467, %s466, 23
      %s469 = smul.addr %s468, 4
      %s470 = scalar_lea.vmem %s0, %s469
      %s471 = smul.u32 8, %s23
      %s472 = smul.u32 8, %s23
      %p473 = scmp.lt.s32.totalorder %s472, 23
      %s474 = scalar_select %p473, %s472, 23
      %s475 = smul.addr %s474, 4
      %s476 = scalar_lea.vmem %s1, %s475
      %s477 = smul.u32 8, %s23
      %s478 = smul.u32 8, %s23
      %p479 = scmp.lt.s32.totalorder %s478, 23
      %s480 = scalar_select %p479, %s478, 23
      %s481 = smul.addr %s480, 4
      %s482 = scalar_lea.vmem %s2, %s481
      %s483 = smul.u32 8, %s23
      %s484 = smul.u32 8, %s23
      %p485 = scmp.lt.s32.totalorder %s484, 23
      %s486 = scalar_select %p485, %s484, 23
      %s487 = smul.addr %s486, 4
      %s488 = scalar_lea.vmem %s3, %s487
      %s489 = smul.u32 8, %s23
      %s490 = smul.u32 8, %s23
      %p491 = scmp.lt.s32.totalorder %s490, 23
      %s492 = scalar_select %p491, %s490, 23
      %s493 = scalar_lea.vmem %s4, %s492
      %s494 = smul.u32 8, %s23
      %s495 = smul.u32 8, %s23
      %p496 = scmp.lt.s32.totalorder %s495, 23
      %s497 = scalar_select %p496, %s495, 23
      %s498 = scalar_lea.vmem %s12, %s497
      %s499 = smul.u32 8, %s23
      %v501 = vld [vmem:[%s470] sm:$0xf]
      %v502 = vld [vmem:[%s470 + $0x4] sm:$0xf]
      %v503 = vld [vmem:[%s470 + $0x8] sm:$0xf]
      %v504 = vld [vmem:[%s470 + $0xc] sm:$0xf]
      %v505 = vld [vmem:[%s470 + $0x10] sm:$0xf]
      %v506 = vld [vmem:[%s470 + $0x14] sm:$0xf]
      %v507 = vld [vmem:[%s470 + $0x18] sm:$0xf]
      %v508 = vld [vmem:[%s470 + $0x1c] sm:$0xf]
      %v509 = vld [vmem:[%s482] sm:$0xf]
      %v510 = vld [vmem:[%s482 + $0x4] sm:$0xf]
      %v511 = vld [vmem:[%s482 + $0x8] sm:$0xf]
      %v512 = vld [vmem:[%s482 + $0xc] sm:$0xf]
      %v513 = vld [vmem:[%s482 + $0x10] sm:$0xf]
      %v514 = vld [vmem:[%s482 + $0x14] sm:$0xf]
      %v515 = vld [vmem:[%s482 + $0x18] sm:$0xf]
      %v516 = vld [vmem:[%s482 + $0x1c] sm:$0xf]
      %v517 = vld [vmem:[%s476] sm:$0xf]
      %v518 = vld [vmem:[%s476 + $0x4] sm:$0xf]
      %v519 = vld [vmem:[%s476 + $0x8] sm:$0xf]
      %v520 = vld [vmem:[%s476 + $0xc] sm:$0xf]
      %v521 = vld [vmem:[%s476 + $0x10] sm:$0xf]
      %v522 = vld [vmem:[%s476 + $0x14] sm:$0xf]
      %v523 = vld [vmem:[%s476 + $0x18] sm:$0xf]
      %v524 = vld [vmem:[%s476 + $0x1c] sm:$0xf]
      %v525 = vld [vmem:[%s488] sm:$0xf]
      %v526 = vld [vmem:[%s488 + $0x4] sm:$0xf]
      %v527 = vld [vmem:[%s488 + $0x8] sm:$0xf]
      %v528 = vld [vmem:[%s488 + $0xc] sm:$0xf]
      %v529 = vld [vmem:[%s488 + $0x10] sm:$0xf]
      %v530 = vld [vmem:[%s488 + $0x14] sm:$0xf]
      %v531 = vld [vmem:[%s488 + $0x18] sm:$0xf]
      %v532 = vld [vmem:[%s488 + $0x1c] sm:$0xf]
      %v533 = vunpack.c.l.bf16 %v517
      %v534 = vunpack.c.l.bf16 %v518
      %v535 = vunpack.c.l.bf16 %v519
      %v536 = vunpack.c.l.bf16 %v520
      %v537 = vunpack.c.l.bf16 %v521
      %v538 = vunpack.c.l.bf16 %v522
      %v539 = vunpack.c.l.bf16 %v523
      %v540 = vunpack.c.l.bf16 %v524
      %v541 = vunpack.c.l.bf16 %v525
      %v542 = vunpack.c.l.bf16 %v526
      %v543 = vunpack.c.l.bf16 %v527
      %v544 = vunpack.c.l.bf16 %v528
      %v545 = vunpack.c.l.bf16 %v529
      %v546 = vunpack.c.l.bf16 %v530
      %v547 = vunpack.c.l.bf16 %v531
      %v548 = vunpack.c.l.bf16 %v532
      %v549 = vunpack.c.l.bf16 %v501
      %v550 = vunpack.c.l.bf16 %v502
      %v551 = vunpack.c.l.bf16 %v503
      %v552 = vunpack.c.l.bf16 %v504
      %v553 = vunpack.c.l.bf16 %v505
      %v554 = vunpack.c.l.bf16 %v506
      %v555 = vunpack.c.l.bf16 %v507
      %v556 = vunpack.c.l.bf16 %v508
      %v557 = vunpack.c.l.bf16 %v509
      %v558 = vunpack.c.l.bf16 %v510
      %v559 = vunpack.c.l.bf16 %v511
      %v560 = vunpack.c.l.bf16 %v512
      %v561 = vunpack.c.l.bf16 %v513
      %v562 = vunpack.c.l.bf16 %v514
      %v563 = vunpack.c.l.bf16 %v515
      %v564 = vunpack.c.l.bf16 %v516
      %vm565 = vcmask 64512
      %v566 = vsel %vm565, %v549, 0.0
      %567 = vadd.xlane.f32.xlu0 %v566
      %v568 = vpop.xlane.xlu0 %567
      %v569 = vsel %vm565, %v550, 0.0
      %570 = vadd.xlane.f32.xlu0 %v569
      %v571 = vpop.xlane.xlu0 %570
      %v572 = vsel %vm565, %v551, 0.0
      %573 = vadd.xlane.f32.xlu0 %v572
      %v574 = vpop.xlane.xlu0 %573
      %v575 = vsel %vm565, %v552, 0.0
      %576 = vadd.xlane.f32.xlu0 %v575
      %v577 = vpop.xlane.xlu0 %576
      %v578 = vsel %vm565, %v553, 0.0
      %579 = vadd.xlane.f32.xlu0 %v578
      %v580 = vpop.xlane.xlu0 %579
      %v581 = vsel %vm565, %v554, 0.0
      %582 = vadd.xlane.f32.xlu0 %v581
      %v583 = vpop.xlane.xlu0 %582
      %v584 = vsel %vm565, %v555, 0.0
      %585 = vadd.xlane.f32.xlu0 %v584
      %v586 = vpop.xlane.xlu0 %585
      %v587 = vsel %vm565, %v556, 0.0
      %588 = vadd.xlane.f32.xlu0 %v587
      %v589 = vpop.xlane.xlu0 %588
      %v590 = vsel %vm565, %v557, 0.0
      %591 = vadd.xlane.f32.xlu0 %v590
      %v592 = vpop.xlane.xlu0 %591
      %v593 = vsel %vm565, %v558, 0.0
      %594 = vadd.xlane.f32.xlu0 %v593
      %v595 = vpop.xlane.xlu0 %594
      %v596 = vsel %vm565, %v559, 0.0
      %597 = vadd.xlane.f32.xlu0 %v596
      %v598 = vpop.xlane.xlu0 %597
      %v599 = vsel %vm565, %v560, 0.0
      %600 = vadd.xlane.f32.xlu0 %v599
      %v601 = vpop.xlane.xlu0 %600
      %v602 = vsel %vm565, %v561, 0.0
      %603 = vadd.xlane.f32.xlu0 %v602
      %v604 = vpop.xlane.xlu0 %603
      %v605 = vsel %vm565, %v562, 0.0
      %606 = vadd.xlane.f32.xlu0 %v605
      %v607 = vpop.xlane.xlu0 %606
      %v608 = vsel %vm565, %v563, 0.0
      %609 = vadd.xlane.f32.xlu0 %v608
      %v610 = vpop.xlane.xlu0 %609
      %v611 = vsel %vm565, %v564, 0.0
      %612 = vadd.xlane.f32.xlu0 %v611
      %v613 = vpop.xlane.xlu0 %612
      %v614 = vadd.f32 %v568, 1.0
      %v615 = vadd.f32 %v571, 1.0
      %v616 = vadd.f32 %v574, 1.0
      %v617 = vadd.f32 %v577, 1.0
      %v618 = vadd.f32 %v580, 1.0
      %v619 = vadd.f32 %v583, 1.0
      %v620 = vadd.f32 %v586, 1.0
      %v621 = vadd.f32 %v589, 1.0
      %v622 = vadd.f32 %v592, 1.0
      %v623 = vadd.f32 %v595, 1.0
      %v624 = vadd.f32 %v598, 1.0
      %v625 = vadd.f32 %v601, 1.0
      %v626 = vadd.f32 %v604, 1.0
      %v627 = vadd.f32 %v607, 1.0
      %v628 = vadd.f32 %v610, 1.0
      %v629 = vadd.f32 %v613, 1.0
      %v630 = vrsqrt.pop %v614
      %v631 = vrsqrt.pop %v615
      %v632 = vrsqrt.pop %v616
      %v633 = vrsqrt.pop %v617
      %v634 = vrsqrt.pop %v618
      %v635 = vrsqrt.pop %v619
      %v636 = vrsqrt.pop %v620
      %v637 = vrsqrt.pop %v621
      %v638 = vrsqrt.pop %v622
      %v639 = vrsqrt.pop %v623
      %v640 = vrsqrt.pop %v624
      %v641 = vrsqrt.pop %v625
      %v642 = vrsqrt.pop %v626
      %v643 = vrsqrt.pop %v627
      %v644 = vrsqrt.pop %v628
      %v645 = vrsqrt.pop %v629
      %v646 = vld [vmem:[%s11] sm:$0x3f]
      %v647 = vmul.f32 %v630, %v533
      %v648 = vmul.f32 %v631, %v534
      %v649 = vmul.f32 %v632, %v535
      %v650 = vmul.f32 %v633, %v536
      %v651 = vmul.f32 %v634, %v537
      %v652 = vmul.f32 %v635, %v538
      %v653 = vmul.f32 %v636, %v539
      %v654 = vmul.f32 %v637, %v540
      %v655 = vmul.f32 %v638, %v541
      %v656 = vmul.f32 %v639, %v542
      %v657 = vmul.f32 %v640, %v543
      %v658 = vmul.f32 %v641, %v544
      %v659 = vmul.f32 %v642, %v545
      %v660 = vmul.f32 %v643, %v546
      %v661 = vmul.f32 %v644, %v547
      %v662 = vmul.f32 %v645, %v548
      %v663 = vpack.c.bf16 %v647, %v647
      %v664 = vpack.c.bf16 %v648, %v648
      %v665 = vpack.c.bf16 %v649, %v649
      %v666 = vpack.c.bf16 %v650, %v650
      %v667 = vpack.c.bf16 %v651, %v651
      %v668 = vpack.c.bf16 %v652, %v652
      %v669 = vpack.c.bf16 %v653, %v653
      %v670 = vpack.c.bf16 %v654, %v654
      %v671 = vpack.c.bf16 %v655, %v655
      %v672 = vpack.c.bf16 %v656, %v656
      %v673 = vpack.c.bf16 %v657, %v657
      %v674 = vpack.c.bf16 %v658, %v658
      %v675 = vpack.c.bf16 %v659, %v659
      %v676 = vpack.c.bf16 %v660, %v660
      %v677 = vpack.c.bf16 %v661, %v661
      %v678 = vpack.c.bf16 %v662, %v662
      %v680 = vsel %vm565, %v501, 0
      %vm682 = vcmask 1043456
      %v684 = vsel %vm682, %v663, 0
      %686 = vmatprep.subr.bf16.mxu0 0
      %687 = vmatpush1.bf16.msra.mxu0 0
      %688 = vmatprep.subr.bf16.mxu0 0
      %689 = vmatpush1.bf16.msra.mxu0 0
      %690 = vmatprep.subr.bf16.mxu0 0
      %691 = vmatpush1.bf16.msra.mxu0 0
      %692 = vmatprep.subr.bf16.mxu0 0
      %693 = vmatpush1.bf16.msra.mxu0 0
      %694 = vmatprep.subr.bf16.mxu0 0
      %695 = vmatpush1.bf16.msra.mxu0 0
      %696 = vmatprep.subr.bf16.mxu0 0
      %697 = vmatpush1.bf16.msra.mxu0 0
      %698 = vmatprep.subr.bf16.mxu0 0
      %699 = vmatpush1.bf16.msra.mxu0 0
      %700 = vmatprep.subr.bf16.mxu0 0
      %701 = vmatpush1.bf16.msra.mxu0 %v684
      %702 = vmatprep.subr.bf16.mxu0 0
      %703 = vmatpush2.bf16.msra.mxu0 0
      %704 = vmatprep.subr.bf16.mxu0 0
      %705 = vmatpush2.bf16.msra.mxu0 0
      %706 = vmatprep.subr.bf16.mxu0 0
      %707 = vmatpush2.bf16.msra.mxu0 0
      %708 = vmatprep.subr.bf16.mxu0 0
      %709 = vmatpush2.bf16.msra.mxu0 0
      %710 = vmatprep.subr.bf16.mxu0 0
      %711 = vmatpush2.bf16.msra.mxu0 0
      %712 = vmatprep.subr.bf16.mxu0 0
      %713 = vmatpush2.bf16.msra.mxu0 0
      %714 = vmatprep.subr.bf16.mxu0 0
      %715 = vmatpush2.bf16.msra.mxu0 0
      %716 = vmatprep.subr.bf16.mxu0 0
      %717 = vmatpush2.bf16.msra.mxu0 0
      %718 = vmatprep.mubr.bf16.mxu0 0
      %719 = vmatmul.mubr.bf16.gmra.mxu0 %v680
      %v720 = vpop.f32.mrf.mxu0
      %v721 = vadd.f32 %v647, %v720
      %v722 = vpop.f32.mrf.mxu0
      %v723 = vpop.f32.mrf.mxu0
      %v724 = vpop.f32.mrf.mxu0
      %725 = vdwg.mxu0
      %v727 = vsel %vm565, %v502, 0
      %v730 = vsel %vm682, %v664, 0
      %732 = vmatprep.subr.bf16.mxu0 0
      %733 = vmatpush1.bf16.msra.mxu0 0
      %734 = vmatprep.subr.bf16.mxu0 0
      %735 = vmatpush1.bf16.msra.mxu0 0
      %736 = vmatprep.subr.bf16.mxu0 0
      %737 = vmatpush1.bf16.msra.mxu0 0
      %738 = vmatprep.subr.bf16.mxu0 0
      %739 = vmatpush1.bf16.msra.mxu0 0
      %740 = vmatprep.subr.bf16.mxu0 0
      %741 = vmatpush1.bf16.msra.mxu0 0
      %742 = vmatprep.subr.bf16.mxu0 0
      %743 = vmatpush1.bf16.msra.mxu0 0
      %744 = vmatprep.subr.bf16.mxu0 0
      %745 = vmatpush1.bf16.msra.mxu0 0
      %746 = vmatprep.subr.bf16.mxu0 0
      %747 = vmatpush1.bf16.msra.mxu0 %v730
      %748 = vmatprep.subr.bf16.mxu0 0
      %749 = vmatpush2.bf16.msra.mxu0 0
      %750 = vmatprep.subr.bf16.mxu0 0
      %751 = vmatpush2.bf16.msra.mxu0 0
      %752 = vmatprep.subr.bf16.mxu0 0
      %753 = vmatpush2.bf16.msra.mxu0 0
      %754 = vmatprep.subr.bf16.mxu0 0
      %755 = vmatpush2.bf16.msra.mxu0 0
      %756 = vmatprep.subr.bf16.mxu0 0
      %757 = vmatpush2.bf16.msra.mxu0 0
      %758 = vmatprep.subr.bf16.mxu0 0
      %759 = vmatpush2.bf16.msra.mxu0 0
      %760 = vmatprep.subr.bf16.mxu0 0
      %761 = vmatpush2.bf16.msra.mxu0 0
      %762 = vmatprep.subr.bf16.mxu0 0
      %763 = vmatpush2.bf16.msra.mxu0 0
      %764 = vmatprep.mubr.bf16.mxu0 0
      %765 = vmatmul.mubr.bf16.gmra.mxu0 %v727
      %v766 = vpop.f32.mrf.mxu0
      %v767 = vadd.f32 %v648, %v766
      %v768 = vpop.f32.mrf.mxu0
      %v769 = vpop.f32.mrf.mxu0
      %v770 = vpop.f32.mrf.mxu0
      %771 = vdwg.mxu0
      %v773 = vsel %vm565, %v503, 0
      %v776 = vsel %vm682, %v665, 0
      %778 = vmatprep.subr.bf16.mxu0 0
      %779 = vmatpush1.bf16.msra.mxu0 0
      %780 = vmatprep.subr.bf16.mxu0 0
      %781 = vmatpush1.bf16.msra.mxu0 0
      %782 = vmatprep.subr.bf16.mxu0 0
      %783 = vmatpush1.bf16.msra.mxu0 0
      %784 = vmatprep.subr.bf16.mxu0 0
      %785 = vmatpush1.bf16.msra.mxu0 0
      %786 = vmatprep.subr.bf16.mxu0 0
      %787 = vmatpush1.bf16.msra.mxu0 0
      %788 = vmatprep.subr.bf16.mxu0 0
      %789 = vmatpush1.bf16.msra.mxu0 0
      %790 = vmatprep.subr.bf16.mxu0 0
      %791 = vmatpush1.bf16.msra.mxu0 0
      %792 = vmatprep.subr.bf16.mxu0 0
      %793 = vmatpush1.bf16.msra.mxu0 %v776
      %794 = vmatprep.subr.bf16.mxu0 0
      %795 = vmatpush2.bf16.msra.mxu0 0
      %796 = vmatprep.subr.bf16.mxu0 0
      %797 = vmatpush2.bf16.msra.mxu0 0
      %798 = vmatprep.subr.bf16.mxu0 0
      %799 = vmatpush2.bf16.msra.mxu0 0
      %800 = vmatprep.subr.bf16.mxu0 0
      %801 = vmatpush2.bf16.msra.mxu0 0
      %802 = vmatprep.subr.bf16.mxu0 0
      %803 = vmatpush2.bf16.msra.mxu0 0
      %804 = vmatprep.subr.bf16.mxu0 0
      %805 = vmatpush2.bf16.msra.mxu0 0
      %806 = vmatprep.subr.bf16.mxu0 0
      %807 = vmatpush2.bf16.msra.mxu0 0
      %808 = vmatprep.subr.bf16.mxu0 0
      %809 = vmatpush2.bf16.msra.mxu0 0
      %810 = vmatprep.mubr.bf16.mxu0 0
      %811 = vmatmul.mubr.bf16.gmra.mxu0 %v773
      %v812 = vpop.f32.mrf.mxu0
      %v813 = vadd.f32 %v649, %v812
      %v814 = vpop.f32.mrf.mxu0
      %v815 = vpop.f32.mrf.mxu0
      %v816 = vpop.f32.mrf.mxu0
      %817 = vdwg.mxu0
      %v819 = vsel %vm565, %v504, 0
      %v822 = vsel %vm682, %v666, 0
      %824 = vmatprep.subr.bf16.mxu0 0
      %825 = vmatpush1.bf16.msra.mxu0 0
      %826 = vmatprep.subr.bf16.mxu0 0
      %827 = vmatpush1.bf16.msra.mxu0 0
      %828 = vmatprep.subr.bf16.mxu0 0
      %829 = vmatpush1.bf16.msra.mxu0 0
      %830 = vmatprep.subr.bf16.mxu0 0
      %831 = vmatpush1.bf16.msra.mxu0 0
      %832 = vmatprep.subr.bf16.mxu0 0
      %833 = vmatpush1.bf16.msra.mxu0 0
      %834 = vmatprep.subr.bf16.mxu0 0
      %835 = vmatpush1.bf16.msra.mxu0 0
      %836 = vmatprep.subr.bf16.mxu0 0
      %837 = vmatpush1.bf16.msra.mxu0 0
      %838 = vmatprep.subr.bf16.mxu0 0
      %839 = vmatpush1.bf16.msra.mxu0 %v822
      %840 = vmatprep.subr.bf16.mxu0 0
      %841 = vmatpush2.bf16.msra.mxu0 0
      %842 = vmatprep.subr.bf16.mxu0 0
      %843 = vmatpush2.bf16.msra.mxu0 0
      %844 = vmatprep.subr.bf16.mxu0 0
      %845 = vmatpush2.bf16.msra.mxu0 0
      %846 = vmatprep.subr.bf16.mxu0 0
      %847 = vmatpush2.bf16.msra.mxu0 0
      %848 = vmatprep.subr.bf16.mxu0 0
      %849 = vmatpush2.bf16.msra.mxu0 0
      %850 = vmatprep.subr.bf16.mxu0 0
      %851 = vmatpush2.bf16.msra.mxu0 0
      %852 = vmatprep.subr.bf16.mxu0 0
      %853 = vmatpush2.bf16.msra.mxu0 0
      %854 = vmatprep.subr.bf16.mxu0 0
      %855 = vmatpush2.bf16.msra.mxu0 0
      %856 = vmatprep.mubr.bf16.mxu0 0
      %857 = vmatmul.mubr.bf16.gmra.mxu0 %v819
      %v858 = vpop.f32.mrf.mxu0
      %v859 = vadd.f32 %v650, %v858
      %v860 = vpop.f32.mrf.mxu0
      %v861 = vpop.f32.mrf.mxu0
      %v862 = vpop.f32.mrf.mxu0
      %863 = vdwg.mxu0
      %v865 = vsel %vm565, %v505, 0
      %v868 = vsel %vm682, %v667, 0
      %870 = vmatprep.subr.bf16.mxu0 0
      %871 = vmatpush1.bf16.msra.mxu0 0
      %872 = vmatprep.subr.bf16.mxu0 0
      %873 = vmatpush1.bf16.msra.mxu0 0
      %874 = vmatprep.subr.bf16.mxu0 0
      %875 = vmatpush1.bf16.msra.mxu0 0
      %876 = vmatprep.subr.bf16.mxu0 0
      %877 = vmatpush1.bf16.msra.mxu0 0
      %878 = vmatprep.subr.bf16.mxu0 0
      %879 = vmatpush1.bf16.msra.mxu0 0
      %880 = vmatprep.subr.bf16.mxu0 0
      %881 = vmatpush1.bf16.msra.mxu0 0
      %882 = vmatprep.subr.bf16.mxu0 0
      %883 = vmatpush1.bf16.msra.mxu0 0
      %884 = vmatprep.subr.bf16.mxu0 0
      %885 = vmatpush1.bf16.msra.mxu0 %v868
      %886 = vmatprep.subr.bf16.mxu0 0
      %887 = vmatpush2.bf16.msra.mxu0 0
      %888 = vmatprep.subr.bf16.mxu0 0
      %889 = vmatpush2.bf16.msra.mxu0 0
      %890 = vmatprep.subr.bf16.mxu0 0
      %891 = vmatpush2.bf16.msra.mxu0 0
      %892 = vmatprep.subr.bf16.mxu0 0
      %893 = vmatpush2.bf16.msra.mxu0 0
      %894 = vmatprep.subr.bf16.mxu0 0
      %895 = vmatpush2.bf16.msra.mxu0 0
      %896 = vmatprep.subr.bf16.mxu0 0
      %897 = vmatpush2.bf16.msra.mxu0 0
      %898 = vmatprep.subr.bf16.mxu0 0
      %899 = vmatpush2.bf16.msra.mxu0 0
      %900 = vmatprep.subr.bf16.mxu0 0
      %901 = vmatpush2.bf16.msra.mxu0 0
      %902 = vmatprep.mubr.bf16.mxu0 0
      %903 = vmatmul.mubr.bf16.gmra.mxu0 %v865
      %v904 = vpop.f32.mrf.mxu0
      %v905 = vadd.f32 %v651, %v904
      %v906 = vpop.f32.mrf.mxu0
      %v907 = vpop.f32.mrf.mxu0
      %v908 = vpop.f32.mrf.mxu0
      %909 = vdwg.mxu0
      %v911 = vsel %vm565, %v506, 0
      %v914 = vsel %vm682, %v668, 0
      %916 = vmatprep.subr.bf16.mxu0 0
      %917 = vmatpush1.bf16.msra.mxu0 0
      %918 = vmatprep.subr.bf16.mxu0 0
      %919 = vmatpush1.bf16.msra.mxu0 0
      %920 = vmatprep.subr.bf16.mxu0 0
      %921 = vmatpush1.bf16.msra.mxu0 0
      %922 = vmatprep.subr.bf16.mxu0 0
      %923 = vmatpush1.bf16.msra.mxu0 0
      %924 = vmatprep.subr.bf16.mxu0 0
      %925 = vmatpush1.bf16.msra.mxu0 0
      %926 = vmatprep.subr.bf16.mxu0 0
      %927 = vmatpush1.bf16.msra.mxu0 0
      %928 = vmatprep.subr.bf16.mxu0 0
      %929 = vmatpush1.bf16.msra.mxu0 0
      %930 = vmatprep.subr.bf16.mxu0 0
      %931 = vmatpush1.bf16.msra.mxu0 %v914
      %932 = vmatprep.subr.bf16.mxu0 0
      %933 = vmatpush2.bf16.msra.mxu0 0
      %934 = vmatprep.subr.bf16.mxu0 0
      %935 = vmatpush2.bf16.msra.mxu0 0
      %936 = vmatprep.subr.bf16.mxu0 0
      %937 = vmatpush2.bf16.msra.mxu0 0
      %938 = vmatprep.subr.bf16.mxu0 0
      %939 = vmatpush2.bf16.msra.mxu0 0
      %940 = vmatprep.subr.bf16.mxu0 0
      %941 = vmatpush2.bf16.msra.mxu0 0
      %942 = vmatprep.subr.bf16.mxu0 0
      %943 = vmatpush2.bf16.msra.mxu0 0
      %944 = vmatprep.subr.bf16.mxu0 0
      %945 = vmatpush2.bf16.msra.mxu0 0
      %946 = vmatprep.subr.bf16.mxu0 0
      %947 = vmatpush2.bf16.msra.mxu0 0
      %948 = vmatprep.mubr.bf16.mxu0 0
      %949 = vmatmul.mubr.bf16.gmra.mxu0 %v911
      %v950 = vpop.f32.mrf.mxu0
      %v951 = vadd.f32 %v652, %v950
      %v952 = vpop.f32.mrf.mxu0
      %v953 = vpop.f32.mrf.mxu0
      %v954 = vpop.f32.mrf.mxu0
      %955 = vdwg.mxu0
      %v957 = vsel %vm565, %v507, 0
      %v960 = vsel %vm682, %v669, 0
      %962 = vmatprep.subr.bf16.mxu0 0
      %963 = vmatpush1.bf16.msra.mxu0 0
      %964 = vmatprep.subr.bf16.mxu0 0
      %965 = vmatpush1.bf16.msra.mxu0 0
      %966 = vmatprep.subr.bf16.mxu0 0
      %967 = vmatpush1.bf16.msra.mxu0 0
      %968 = vmatprep.subr.bf16.mxu0 0
      %969 = vmatpush1.bf16.msra.mxu0 0
      %970 = vmatprep.subr.bf16.mxu0 0
      %971 = vmatpush1.bf16.msra.mxu0 0
      %972 = vmatprep.subr.bf16.mxu0 0
      %973 = vmatpush1.bf16.msra.mxu0 0
      %974 = vmatprep.subr.bf16.mxu0 0
      %975 = vmatpush1.bf16.msra.mxu0 0
      %976 = vmatprep.subr.bf16.mxu0 0
      %977 = vmatpush1.bf16.msra.mxu0 %v960
      %978 = vmatprep.subr.bf16.mxu0 0
      %979 = vmatpush2.bf16.msra.mxu0 0
      %980 = vmatprep.subr.bf16.mxu0 0
      %981 = vmatpush2.bf16.msra.mxu0 0
      %982 = vmatprep.subr.bf16.mxu0 0
      %983 = vmatpush2.bf16.msra.mxu0 0
      %984 = vmatprep.subr.bf16.mxu0 0
      %985 = vmatpush2.bf16.msra.mxu0 0
      %986 = vmatprep.subr.bf16.mxu0 0
      %987 = vmatpush2.bf16.msra.mxu0 0
      %988 = vmatprep.subr.bf16.mxu0 0
      %989 = vmatpush2.bf16.msra.mxu0 0
      %990 = vmatprep.subr.bf16.mxu0 0
      %991 = vmatpush2.bf16.msra.mxu0 0
      %992 = vmatprep.subr.bf16.mxu0 0
      %993 = vmatpush2.bf16.msra.mxu0 0
      %994 = vmatprep.mubr.bf16.mxu0 0
      %995 = vmatmul.mubr.bf16.gmra.mxu0 %v957
      %v996 = vpop.f32.mrf.mxu0
      %v997 = vadd.f32 %v653, %v996
      %v998 = vpop.f32.mrf.mxu0
      %v999 = vpop.f32.mrf.mxu0
      %v1000 = vpop.f32.mrf.mxu0
      %1001 = vdwg.mxu0
      %v1003 = vsel %vm565, %v508, 0
      %v1006 = vsel %vm682, %v670, 0
      %1008 = vmatprep.subr.bf16.mxu0 0
      %1009 = vmatpush1.bf16.msra.mxu0 0
      %1010 = vmatprep.subr.bf16.mxu0 0
      %1011 = vmatpush1.bf16.msra.mxu0 0
      %1012 = vmatprep.subr.bf16.mxu0 0
      %1013 = vmatpush1.bf16.msra.mxu0 0
      %1014 = vmatprep.subr.bf16.mxu0 0
      %1015 = vmatpush1.bf16.msra.mxu0 0
      %1016 = vmatprep.subr.bf16.mxu0 0
      %1017 = vmatpush1.bf16.msra.mxu0 0
      %1018 = vmatprep.subr.bf16.mxu0 0
      %1019 = vmatpush1.bf16.msra.mxu0 0
      %1020 = vmatprep.subr.bf16.mxu0 0
      %1021 = vmatpush1.bf16.msra.mxu0 0
      %1022 = vmatprep.subr.bf16.mxu0 0
      %1023 = vmatpush1.bf16.msra.mxu0 %v1006
      %1024 = vmatprep.subr.bf16.mxu0 0
      %1025 = vmatpush2.bf16.msra.mxu0 0
      %1026 = vmatprep.subr.bf16.mxu0 0
      %1027 = vmatpush2.bf16.msra.mxu0 0
      %1028 = vmatprep.subr.bf16.mxu0 0
      %1029 = vmatpush2.bf16.msra.mxu0 0
      %1030 = vmatprep.subr.bf16.mxu0 0
      %1031 = vmatpush2.bf16.msra.mxu0 0
      %1032 = vmatprep.subr.bf16.mxu0 0
      %1033 = vmatpush2.bf16.msra.mxu0 0
      %1034 = vmatprep.subr.bf16.mxu0 0
      %1035 = vmatpush2.bf16.msra.mxu0 0
      %1036 = vmatprep.subr.bf16.mxu0 0
      %1037 = vmatpush2.bf16.msra.mxu0 0
      %1038 = vmatprep.subr.bf16.mxu0 0
      %1039 = vmatpush2.bf16.msra.mxu0 0
      %1040 = vmatprep.mubr.bf16.mxu0 0
      %1041 = vmatmul.mubr.bf16.gmra.mxu0 %v1003
      %v1042 = vpop.f32.mrf.mxu0
      %v1043 = vadd.f32 %v654, %v1042
      %v1044 = vpop.f32.mrf.mxu0
      %v1045 = vpop.f32.mrf.mxu0
      %v1046 = vpop.f32.mrf.mxu0
      %1047 = vdwg.mxu0
      %v1049 = vsel %vm565, %v509, 0
      %v1052 = vsel %vm682, %v671, 0
      %1054 = vmatprep.subr.bf16.mxu0 0
      %1055 = vmatpush1.bf16.msra.mxu0 0
      %1056 = vmatprep.subr.bf16.mxu0 0
      %1057 = vmatpush1.bf16.msra.mxu0 0
      %1058 = vmatprep.subr.bf16.mxu0 0
      %1059 = vmatpush1.bf16.msra.mxu0 0
      %1060 = vmatprep.subr.bf16.mxu0 0
      %1061 = vmatpush1.bf16.msra.mxu0 0
      %1062 = vmatprep.subr.bf16.mxu0 0
      %1063 = vmatpush1.bf16.msra.mxu0 0
      %1064 = vmatprep.subr.bf16.mxu0 0
      %1065 = vmatpush1.bf16.msra.mxu0 0
      %1066 = vmatprep.subr.bf16.mxu0 0
      %1067 = vmatpush1.bf16.msra.mxu0 0
      %1068 = vmatprep.subr.bf16.mxu0 0
      %1069 = vmatpush1.bf16.msra.mxu0 %v1052
      %1070 = vmatprep.subr.bf16.mxu0 0
      %1071 = vmatpush2.bf16.msra.mxu0 0
      %1072 = vmatprep.subr.bf16.mxu0 0
      %1073 = vmatpush2.bf16.msra.mxu0 0
      %1074 = vmatprep.subr.bf16.mxu0 0
      %1075 = vmatpush2.bf16.msra.mxu0 0
      %1076 = vmatprep.subr.bf16.mxu0 0
      %1077 = vmatpush2.bf16.msra.mxu0 0
      %1078 = vmatprep.subr.bf16.mxu0 0
      %1079 = vmatpush2.bf16.msra.mxu0 0
      %1080 = vmatprep.subr.bf16.mxu0 0
      %1081 = vmatpush2.bf16.msra.mxu0 0
      %1082 = vmatprep.subr.bf16.mxu0 0
      %1083 = vmatpush2.bf16.msra.mxu0 0
      %1084 = vmatprep.subr.bf16.mxu0 0
      %1085 = vmatpush2.bf16.msra.mxu0 0
      %1086 = vmatprep.mubr.bf16.mxu0 0
      %1087 = vmatmul.mubr.bf16.gmra.mxu0 %v1049
      %v1088 = vpop.f32.mrf.mxu0
      %v1089 = vadd.f32 %v655, %v1088
      %v1090 = vpop.f32.mrf.mxu0
      %v1091 = vpop.f32.mrf.mxu0
      %v1092 = vpop.f32.mrf.mxu0
      %1093 = vdwg.mxu0
      %v1095 = vsel %vm565, %v510, 0
      %v1098 = vsel %vm682, %v672, 0
      %1100 = vmatprep.subr.bf16.mxu0 0
      %1101 = vmatpush1.bf16.msra.mxu0 0
      %1102 = vmatprep.subr.bf16.mxu0 0
      %1103 = vmatpush1.bf16.msra.mxu0 0
      %1104 = vmatprep.subr.bf16.mxu0 0
      %1105 = vmatpush1.bf16.msra.mxu0 0
      %1106 = vmatprep.subr.bf16.mxu0 0
      %1107 = vmatpush1.bf16.msra.mxu0 0
      %1108 = vmatprep.subr.bf16.mxu0 0
      %1109 = vmatpush1.bf16.msra.mxu0 0
      %1110 = vmatprep.subr.bf16.mxu0 0
      %1111 = vmatpush1.bf16.msra.mxu0 0
      %1112 = vmatprep.subr.bf16.mxu0 0
      %1113 = vmatpush1.bf16.msra.mxu0 0
      %1114 = vmatprep.subr.bf16.mxu0 0
      %1115 = vmatpush1.bf16.msra.mxu0 %v1098
      %1116 = vmatprep.subr.bf16.mxu0 0
      %1117 = vmatpush2.bf16.msra.mxu0 0
      %1118 = vmatprep.subr.bf16.mxu0 0
      %1119 = vmatpush2.bf16.msra.mxu0 0
      %1120 = vmatprep.subr.bf16.mxu0 0
      %1121 = vmatpush2.bf16.msra.mxu0 0
      %1122 = vmatprep.subr.bf16.mxu0 0
      %1123 = vmatpush2.bf16.msra.mxu0 0
      %1124 = vmatprep.subr.bf16.mxu0 0
      %1125 = vmatpush2.bf16.msra.mxu0 0
      %1126 = vmatprep.subr.bf16.mxu0 0
      %1127 = vmatpush2.bf16.msra.mxu0 0
      %1128 = vmatprep.subr.bf16.mxu0 0
      %1129 = vmatpush2.bf16.msra.mxu0 0
      %1130 = vmatprep.subr.bf16.mxu0 0
      %1131 = vmatpush2.bf16.msra.mxu0 0
      %1132 = vmatprep.mubr.bf16.mxu0 0
      %1133 = vmatmul.mubr.bf16.gmra.mxu0 %v1095
      %v1134 = vpop.f32.mrf.mxu0
      %v1135 = vadd.f32 %v656, %v1134
      %v1136 = vpop.f32.mrf.mxu0
      %v1137 = vpop.f32.mrf.mxu0
      %v1138 = vpop.f32.mrf.mxu0
      %1139 = vdwg.mxu0
      %v1141 = vsel %vm565, %v511, 0
      %v1144 = vsel %vm682, %v673, 0
      %1146 = vmatprep.subr.bf16.mxu0 0
      %1147 = vmatpush1.bf16.msra.mxu0 0
      %1148 = vmatprep.subr.bf16.mxu0 0
      %1149 = vmatpush1.bf16.msra.mxu0 0
      %1150 = vmatprep.subr.bf16.mxu0 0
      %1151 = vmatpush1.bf16.msra.mxu0 0
      %1152 = vmatprep.subr.bf16.mxu0 0
      %1153 = vmatpush1.bf16.msra.mxu0 0
      %1154 = vmatprep.subr.bf16.mxu0 0
      %1155 = vmatpush1.bf16.msra.mxu0 0
      %1156 = vmatprep.subr.bf16.mxu0 0
      %1157 = vmatpush1.bf16.msra.mxu0 0
      %1158 = vmatprep.subr.bf16.mxu0 0
      %1159 = vmatpush1.bf16.msra.mxu0 0
      %1160 = vmatprep.subr.bf16.mxu0 0
      %1161 = vmatpush1.bf16.msra.mxu0 %v1144
      %1162 = vmatprep.subr.bf16.mxu0 0
      %1163 = vmatpush2.bf16.msra.mxu0 0
      %1164 = vmatprep.subr.bf16.mxu0 0
      %1165 = vmatpush2.bf16.msra.mxu0 0
      %1166 = vmatprep.subr.bf16.mxu0 0
      %1167 = vmatpush2.bf16.msra.mxu0 0
      %1168 = vmatprep.subr.bf16.mxu0 0
      %1169 = vmatpush2.bf16.msra.mxu0 0
      %1170 = vmatprep.subr.bf16.mxu0 0
      %1171 = vmatpush2.bf16.msra.mxu0 0
      %1172 = vmatprep.subr.bf16.mxu0 0
      %1173 = vmatpush2.bf16.msra.mxu0 0
      %1174 = vmatprep.subr.bf16.mxu0 0
      %1175 = vmatpush2.bf16.msra.mxu0 0
      %1176 = vmatprep.subr.bf16.mxu0 0
      %1177 = vmatpush2.bf16.msra.mxu0 0
      %1178 = vmatprep.mubr.bf16.mxu0 0
      %1179 = vmatmul.mubr.bf16.gmra.mxu0 %v1141
      %v1180 = vpop.f32.mrf.mxu0
      %v1181 = vadd.f32 %v657, %v1180
      %v1182 = vpop.f32.mrf.mxu0
      %v1183 = vpop.f32.mrf.mxu0
      %v1184 = vpop.f32.mrf.mxu0
      %1185 = vdwg.mxu0
      %v1187 = vsel %vm565, %v512, 0
      %v1190 = vsel %vm682, %v674, 0
      %1192 = vmatprep.subr.bf16.mxu0 0
      %1193 = vmatpush1.bf16.msra.mxu0 0
      %1194 = vmatprep.subr.bf16.mxu0 0
      %1195 = vmatpush1.bf16.msra.mxu0 0
      %1196 = vmatprep.subr.bf16.mxu0 0
      %1197 = vmatpush1.bf16.msra.mxu0 0
      %1198 = vmatprep.subr.bf16.mxu0 0
      %1199 = vmatpush1.bf16.msra.mxu0 0
      %1200 = vmatprep.subr.bf16.mxu0 0
      %1201 = vmatpush1.bf16.msra.mxu0 0
      %1202 = vmatprep.subr.bf16.mxu0 0
      %1203 = vmatpush1.bf16.msra.mxu0 0
      %1204 = vmatprep.subr.bf16.mxu0 0
      %1205 = vmatpush1.bf16.msra.mxu0 0
      %1206 = vmatprep.subr.bf16.mxu0 0
      %1207 = vmatpush1.bf16.msra.mxu0 %v1190
      %1208 = vmatprep.subr.bf16.mxu0 0
      %1209 = vmatpush2.bf16.msra.mxu0 0
      %1210 = vmatprep.subr.bf16.mxu0 0
      %1211 = vmatpush2.bf16.msra.mxu0 0
      %1212 = vmatprep.subr.bf16.mxu0 0
      %1213 = vmatpush2.bf16.msra.mxu0 0
      %1214 = vmatprep.subr.bf16.mxu0 0
      %1215 = vmatpush2.bf16.msra.mxu0 0
      %1216 = vmatprep.subr.bf16.mxu0 0
      %1217 = vmatpush2.bf16.msra.mxu0 0
      %1218 = vmatprep.subr.bf16.mxu0 0
      %1219 = vmatpush2.bf16.msra.mxu0 0
      %1220 = vmatprep.subr.bf16.mxu0 0
      %1221 = vmatpush2.bf16.msra.mxu0 0
      %1222 = vmatprep.subr.bf16.mxu0 0
      %1223 = vmatpush2.bf16.msra.mxu0 0
      %1224 = vmatprep.mubr.bf16.mxu0 0
      %1225 = vmatmul.mubr.bf16.gmra.mxu0 %v1187
      %v1226 = vpop.f32.mrf.mxu0
      %v1227 = vadd.f32 %v658, %v1226
      %v1228 = vpop.f32.mrf.mxu0
      %v1229 = vpop.f32.mrf.mxu0
      %v1230 = vpop.f32.mrf.mxu0
      %1231 = vdwg.mxu0
      %v1233 = vsel %vm565, %v513, 0
      %v1236 = vsel %vm682, %v675, 0
      %1238 = vmatprep.subr.bf16.mxu0 0
      %1239 = vmatpush1.bf16.msra.mxu0 0
      %1240 = vmatprep.subr.bf16.mxu0 0
      %1241 = vmatpush1.bf16.msra.mxu0 0
      %1242 = vmatprep.subr.bf16.mxu0 0
      %1243 = vmatpush1.bf16.msra.mxu0 0
      %1244 = vmatprep.subr.bf16.mxu0 0
      %1245 = vmatpush1.bf16.msra.mxu0 0
      %1246 = vmatprep.subr.bf16.mxu0 0
      %1247 = vmatpush1.bf16.msra.mxu0 0
      %1248 = vmatprep.subr.bf16.mxu0 0
      %1249 = vmatpush1.bf16.msra.mxu0 0
      %1250 = vmatprep.subr.bf16.mxu0 0
      %1251 = vmatpush1.bf16.msra.mxu0 0
      %1252 = vmatprep.subr.bf16.mxu0 0
      %1253 = vmatpush1.bf16.msra.mxu0 %v1236
      %1254 = vmatprep.subr.bf16.mxu0 0
      %1255 = vmatpush2.bf16.msra.mxu0 0
      %1256 = vmatprep.subr.bf16.mxu0 0
      %1257 = vmatpush2.bf16.msra.mxu0 0
      %1258 = vmatprep.subr.bf16.mxu0 0
      %1259 = vmatpush2.bf16.msra.mxu0 0
      %1260 = vmatprep.subr.bf16.mxu0 0
      %1261 = vmatpush2.bf16.msra.mxu0 0
      %1262 = vmatprep.subr.bf16.mxu0 0
      %1263 = vmatpush2.bf16.msra.mxu0 0
      %1264 = vmatprep.subr.bf16.mxu0 0
      %1265 = vmatpush2.bf16.msra.mxu0 0
      %1266 = vmatprep.subr.bf16.mxu0 0
      %1267 = vmatpush2.bf16.msra.mxu0 0
      %1268 = vmatprep.subr.bf16.mxu0 0
      %1269 = vmatpush2.bf16.msra.mxu0 0
      %1270 = vmatprep.mubr.bf16.mxu0 0
      %1271 = vmatmul.mubr.bf16.gmra.mxu0 %v1233
      %v1272 = vpop.f32.mrf.mxu0
      %v1273 = vadd.f32 %v659, %v1272
      %v1274 = vpop.f32.mrf.mxu0
      %v1275 = vpop.f32.mrf.mxu0
      %v1276 = vpop.f32.mrf.mxu0
      %1277 = vdwg.mxu0
      %v1279 = vsel %vm565, %v514, 0
      %v1282 = vsel %vm682, %v676, 0
      %1284 = vmatprep.subr.bf16.mxu0 0
      %1285 = vmatpush1.bf16.msra.mxu0 0
      %1286 = vmatprep.subr.bf16.mxu0 0
      %1287 = vmatpush1.bf16.msra.mxu0 0
      %1288 = vmatprep.subr.bf16.mxu0 0
      %1289 = vmatpush1.bf16.msra.mxu0 0
      %1290 = vmatprep.subr.bf16.mxu0 0
      %1291 = vmatpush1.bf16.msra.mxu0 0
      %1292 = vmatprep.subr.bf16.mxu0 0
      %1293 = vmatpush1.bf16.msra.mxu0 0
      %1294 = vmatprep.subr.bf16.mxu0 0
      %1295 = vmatpush1.bf16.msra.mxu0 0
      %1296 = vmatprep.subr.bf16.mxu0 0
      %1297 = vmatpush1.bf16.msra.mxu0 0
      %1298 = vmatprep.subr.bf16.mxu0 0
      %1299 = vmatpush1.bf16.msra.mxu0 %v1282
      %1300 = vmatprep.subr.bf16.mxu0 0
      %1301 = vmatpush2.bf16.msra.mxu0 0
      %1302 = vmatprep.subr.bf16.mxu0 0
      %1303 = vmatpush2.bf16.msra.mxu0 0
      %1304 = vmatprep.subr.bf16.mxu0 0
      %1305 = vmatpush2.bf16.msra.mxu0 0
      %1306 = vmatprep.subr.bf16.mxu0 0
      %1307 = vmatpush2.bf16.msra.mxu0 0
      %1308 = vmatprep.subr.bf16.mxu0 0
      %1309 = vmatpush2.bf16.msra.mxu0 0
      %1310 = vmatprep.subr.bf16.mxu0 0
      %1311 = vmatpush2.bf16.msra.mxu0 0
      %1312 = vmatprep.subr.bf16.mxu0 0
      %1313 = vmatpush2.bf16.msra.mxu0 0
      %1314 = vmatprep.subr.bf16.mxu0 0
      %1315 = vmatpush2.bf16.msra.mxu0 0
      %1316 = vmatprep.mubr.bf16.mxu0 0
      %1317 = vmatmul.mubr.bf16.gmra.mxu0 %v1279
      %v1318 = vpop.f32.mrf.mxu0
      %v1319 = vadd.f32 %v660, %v1318
      %v1320 = vpop.f32.mrf.mxu0
      %v1321 = vpop.f32.mrf.mxu0
      %v1322 = vpop.f32.mrf.mxu0
      %1323 = vdwg.mxu0
      %v1325 = vsel %vm565, %v515, 0
      %v1328 = vsel %vm682, %v677, 0
      %1330 = vmatprep.subr.bf16.mxu0 0
      %1331 = vmatpush1.bf16.msra.mxu0 0
      %1332 = vmatprep.subr.bf16.mxu0 0
      %1333 = vmatpush1.bf16.msra.mxu0 0
      %1334 = vmatprep.subr.bf16.mxu0 0
      %1335 = vmatpush1.bf16.msra.mxu0 0
      %1336 = vmatprep.subr.bf16.mxu0 0
      %1337 = vmatpush1.bf16.msra.mxu0 0
      %1338 = vmatprep.subr.bf16.mxu0 0
      %1339 = vmatpush1.bf16.msra.mxu0 0
      %1340 = vmatprep.subr.bf16.mxu0 0
      %1341 = vmatpush1.bf16.msra.mxu0 0
      %1342 = vmatprep.subr.bf16.mxu0 0
      %1343 = vmatpush1.bf16.msra.mxu0 0
      %1344 = vmatprep.subr.bf16.mxu0 0
      %1345 = vmatpush1.bf16.msra.mxu0 %v1328
      %1346 = vmatprep.subr.bf16.mxu0 0
      %1347 = vmatpush2.bf16.msra.mxu0 0
      %1348 = vmatprep.subr.bf16.mxu0 0
      %1349 = vmatpush2.bf16.msra.mxu0 0
      %1350 = vmatprep.subr.bf16.mxu0 0
      %1351 = vmatpush2.bf16.msra.mxu0 0
      %1352 = vmatprep.subr.bf16.mxu0 0
      %1353 = vmatpush2.bf16.msra.mxu0 0
      %1354 = vmatprep.subr.bf16.mxu0 0
      %1355 = vmatpush2.bf16.msra.mxu0 0
      %1356 = vmatprep.subr.bf16.mxu0 0
      %1357 = vmatpush2.bf16.msra.mxu0 0
      %1358 = vmatprep.subr.bf16.mxu0 0
      %1359 = vmatpush2.bf16.msra.mxu0 0
      %1360 = vmatprep.subr.bf16.mxu0 0
      %1361 = vmatpush2.bf16.msra.mxu0 0
      %1362 = vmatprep.mubr.bf16.mxu0 0
      %1363 = vmatmul.mubr.bf16.gmra.mxu0 %v1325
      %v1364 = vpop.f32.mrf.mxu0
      %v1365 = vadd.f32 %v661, %v1364
      %v1366 = vpop.f32.mrf.mxu0
      %v1367 = vpop.f32.mrf.mxu0
      %v1368 = vpop.f32.mrf.mxu0
      %1369 = vdwg.mxu0
      %v1371 = vsel %vm565, %v516, 0
      %v1374 = vsel %vm682, %v678, 0
      %1376 = vmatprep.subr.bf16.mxu0 0
      %1377 = vmatpush1.bf16.msra.mxu0 0
      %1378 = vmatprep.subr.bf16.mxu0 0
      %1379 = vmatpush1.bf16.msra.mxu0 0
      %1380 = vmatprep.subr.bf16.mxu0 0
      %1381 = vmatpush1.bf16.msra.mxu0 0
      %1382 = vmatprep.subr.bf16.mxu0 0
      %1383 = vmatpush1.bf16.msra.mxu0 0
      %1384 = vmatprep.subr.bf16.mxu0 0
      %1385 = vmatpush1.bf16.msra.mxu0 0
      %1386 = vmatprep.subr.bf16.mxu0 0
      %1387 = vmatpush1.bf16.msra.mxu0 0
      %1388 = vmatprep.subr.bf16.mxu0 0
      %1389 = vmatpush1.bf16.msra.mxu0 0
      %1390 = vmatprep.subr.bf16.mxu0 0
      %1391 = vmatpush1.bf16.msra.mxu0 %v1374
      %1392 = vmatprep.subr.bf16.mxu0 0
      %1393 = vmatpush2.bf16.msra.mxu0 0
      %1394 = vmatprep.subr.bf16.mxu0 0
      %1395 = vmatpush2.bf16.msra.mxu0 0
      %1396 = vmatprep.subr.bf16.mxu0 0
      %1397 = vmatpush2.bf16.msra.mxu0 0
      %1398 = vmatprep.subr.bf16.mxu0 0
      %1399 = vmatpush2.bf16.msra.mxu0 0
      %1400 = vmatprep.subr.bf16.mxu0 0
      %1401 = vmatpush2.bf16.msra.mxu0 0
      %1402 = vmatprep.subr.bf16.mxu0 0
      %1403 = vmatpush2.bf16.msra.mxu0 0
      %1404 = vmatprep.subr.bf16.mxu0 0
      %1405 = vmatpush2.bf16.msra.mxu0 0
      %1406 = vmatprep.subr.bf16.mxu0 0
      %1407 = vmatpush2.bf16.msra.mxu0 0
      %1408 = vmatprep.mubr.bf16.mxu0 0
      %1409 = vmatmul.mubr.bf16.gmra.mxu0 %v1371
      %v1410 = vpop.f32.mrf.mxu0
      %v1411 = vadd.f32 %v662, %v1410
      %v1412 = vpop.f32.mrf.mxu0
      %v1413 = vpop.f32.mrf.mxu0
      %v1414 = vpop.f32.mrf.mxu0
      %1415 = vdwg.mxu0
      %v1416 = vmul.f32 %v630, %v721
      %v1417 = vmul.f32 %v631, %v767
      %v1418 = vmul.f32 %v632, %v813
      %v1419 = vmul.f32 %v633, %v859
      %v1420 = vmul.f32 %v634, %v905
      %v1421 = vmul.f32 %v635, %v951
      %v1422 = vmul.f32 %v636, %v997
      %v1423 = vmul.f32 %v637, %v1043
      %v1424 = vmul.f32 %v638, %v1089
      %v1425 = vmul.f32 %v639, %v1135
      %v1426 = vmul.f32 %v640, %v1181
      %v1427 = vmul.f32 %v641, %v1227
      %v1428 = vmul.f32 %v642, %v1273
      %v1429 = vmul.f32 %v643, %v1319
      %v1430 = vmul.f32 %v644, %v1365
      %v1431 = vmul.f32 %v645, %v1411
      %v1432 = vpack.c.bf16 %v1417, %v1416
      %v1433 = vpack.c.bf16 %v1419, %v1418
      %v1434 = vpack.c.bf16 %v1421, %v1420
      %v1435 = vpack.c.bf16 %v1423, %v1422
      %v1436 = vpack.c.bf16 %v1425, %v1424
      %v1437 = vpack.c.bf16 %v1427, %v1426
      %v1438 = vpack.c.bf16 %v1429, %v1428
      %v1439 = vpack.c.bf16 %v1431, %v1430
      %v1440 = vld [vmem:[%s5] sm:$0x3]
      %v1441 = vlaneseq
      %v1442 = vshrl.u32 %v1441, 7
      %v1443 = vsub.s32 0, %v1442
      %v1444 = vrot.slane %v646, %v1443
      %vm1445 = vcmask 31744
      %v1447 = vsel %vm1445, %v1432, 0
      %v1450 = vsel %vm1445, %v1433, 0
      %v1453 = vsel %vm1445, %v1434, 0
      %v1456 = vsel %vm1445, %v1435, 0
      %v1459 = vsel %vm1445, %v1436, 0
      %v1462 = vsel %vm1445, %v1437, 0
      %v1465 = vsel %vm1445, %v1438, 0
      %v1468 = vsel %vm1445, %v1439, 0
      %vm1470 = vcmask 1041408
      %v1472 = vsel %vm1470, %v1440, 0
      %1474 = vmatprep.subr.bf16.mxu0 0
      %1475 = vmatpush1.bf16.msra.mxu0 0
      %1476 = vmatprep.subr.bf16.mxu0 0
      %1477 = vmatpush1.bf16.msra.mxu0 0
      %1478 = vmatprep.subr.bf16.mxu0 0
      %1479 = vmatpush1.bf16.msra.mxu0 0
      %1480 = vmatprep.subr.bf16.mxu0 0
      %1481 = vmatpush1.bf16.msra.mxu0 0
      %1482 = vmatprep.subr.bf16.mxu0 0
      %1483 = vmatpush1.bf16.msra.mxu0 0
      %1484 = vmatprep.subr.bf16.mxu0 0
      %1485 = vmatpush1.bf16.msra.mxu0 0
      %1486 = vmatprep.subr.bf16.mxu0 0
      %1487 = vmatpush1.bf16.msra.mxu0 0
      %1488 = vmatprep.subr.bf16.mxu0 0
      %1489 = vmatpush1.bf16.msra.mxu0 %v1472
      %1490 = vmatprep.subr.bf16.mxu0 0
      %1491 = vmatpush2.bf16.msra.mxu0 0
      %1492 = vmatprep.subr.bf16.mxu0 0
      %1493 = vmatpush2.bf16.msra.mxu0 0
      %1494 = vmatprep.subr.bf16.mxu0 0
      %1495 = vmatpush2.bf16.msra.mxu0 0
      %1496 = vmatprep.subr.bf16.mxu0 0
      %1497 = vmatpush2.bf16.msra.mxu0 0
      %1498 = vmatprep.subr.bf16.mxu0 0
      %1499 = vmatpush2.bf16.msra.mxu0 0
      %1500 = vmatprep.subr.bf16.mxu0 0
      %1501 = vmatpush2.bf16.msra.mxu0 0
      %1502 = vmatprep.subr.bf16.mxu0 0
      %1503 = vmatpush2.bf16.msra.mxu0 0
      %1504 = vmatprep.subr.bf16.mxu0 0
      %1505 = vmatpush2.bf16.msra.mxu0 0
      %1506 = vmatprep.mubr.bf16.mxu0 0
      %1507 = vmatmul.mubr.bf16.gmra.mxu0 %v1447
      %v1508 = vpop.f32.mrf.mxu0
      %v1509 = vadd.f32 %v1444, %v1508
      %v1510 = vpop.f32.mrf.mxu0
      %v1511 = vpop.f32.mrf.mxu0
      %v1512 = vadd.f32 %v1444, %v1511
      %v1513 = vpop.f32.mrf.mxu0
      %1514 = vmatprep.mubr.bf16.mxu0 0
      %1515 = vmatmul.mubr.bf16.gmra.mxu0 %v1450
      %v1516 = vpop.f32.mrf.mxu0
      %v1517 = vadd.f32 %v1444, %v1516
      %v1518 = vpop.f32.mrf.mxu0
      %v1519 = vpop.f32.mrf.mxu0
      %v1520 = vadd.f32 %v1444, %v1519
      %v1521 = vpop.f32.mrf.mxu0
      %1522 = vmatprep.mubr.bf16.mxu0 0
      %1523 = vmatmul.mubr.bf16.gmra.mxu0 %v1453
      %v1524 = vpop.f32.mrf.mxu0
      %v1525 = vadd.f32 %v1444, %v1524
      %v1526 = vpop.f32.mrf.mxu0
      %v1527 = vpop.f32.mrf.mxu0
      %v1528 = vadd.f32 %v1444, %v1527
      %v1529 = vpop.f32.mrf.mxu0
      %1530 = vmatprep.mubr.bf16.mxu0 0
      %1531 = vmatmul.mubr.bf16.gmra.mxu0 %v1456
      %v1532 = vpop.f32.mrf.mxu0
      %v1533 = vadd.f32 %v1444, %v1532
      %v1534 = vpop.f32.mrf.mxu0
      %v1535 = vpop.f32.mrf.mxu0
      %v1536 = vadd.f32 %v1444, %v1535
      %v1537 = vpop.f32.mrf.mxu0
      %1538 = vmatprep.mubr.bf16.mxu0 0
      %1539 = vmatmul.mubr.bf16.gmra.mxu0 %v1459
      %v1540 = vpop.f32.mrf.mxu0
      %v1541 = vadd.f32 %v1444, %v1540
      %v1542 = vpop.f32.mrf.mxu0
      %v1543 = vpop.f32.mrf.mxu0
      %v1544 = vadd.f32 %v1444, %v1543
      %v1545 = vpop.f32.mrf.mxu0
      %1546 = vmatprep.mubr.bf16.mxu0 0
      %1547 = vmatmul.mubr.bf16.gmra.mxu0 %v1462
      %v1548 = vpop.f32.mrf.mxu0
      %v1549 = vadd.f32 %v1444, %v1548
      %v1550 = vpop.f32.mrf.mxu0
      %v1551 = vpop.f32.mrf.mxu0
      %v1552 = vadd.f32 %v1444, %v1551
      %v1553 = vpop.f32.mrf.mxu0
      %1554 = vmatprep.mubr.bf16.mxu0 0
      %1555 = vmatmul.mubr.bf16.gmra.mxu0 %v1465
      %v1556 = vpop.f32.mrf.mxu0
      %v1557 = vadd.f32 %v1444, %v1556
      %v1558 = vpop.f32.mrf.mxu0
      %v1559 = vpop.f32.mrf.mxu0
      %v1560 = vadd.f32 %v1444, %v1559
      %v1561 = vpop.f32.mrf.mxu0
      %1562 = vmatprep.mubr.bf16.mxu0 0
      %1563 = vmatmul.mubr.bf16.gmra.mxu0 %v1468
      %v1564 = vpop.f32.mrf.mxu0
      %v1565 = vadd.f32 %v1444, %v1564
      %v1566 = vpop.f32.mrf.mxu0
      %v1567 = vpop.f32.mrf.mxu0
      %v1568 = vadd.f32 %v1444, %v1567
      %v1569 = vpop.f32.mrf.mxu0
      %1570 = vdwg.mxu0
      %v1571 = vmax.f32 %v1509, 0.0
      %v1572 = vmax.f32 %v1512, 0.0
      %v1573 = vmax.f32 %v1517, 0.0
      %v1574 = vmax.f32 %v1520, 0.0
      %v1575 = vmax.f32 %v1525, 0.0
      %v1576 = vmax.f32 %v1528, 0.0
      %v1577 = vmax.f32 %v1533, 0.0
      %v1578 = vmax.f32 %v1536, 0.0
      %v1579 = vmax.f32 %v1541, 0.0
      %v1580 = vmax.f32 %v1544, 0.0
      %v1581 = vmax.f32 %v1549, 0.0
      %v1582 = vmax.f32 %v1552, 0.0
      %v1583 = vmax.f32 %v1557, 0.0
      %v1584 = vmax.f32 %v1560, 0.0
      %v1585 = vmax.f32 %v1565, 0.0
      %v1586 = vmax.f32 %v1568, 0.0
      %v1587 = vmul.f32 %v630, %v1571
      %v1588 = vmul.f32 %v631, %v1572
      %v1589 = vmul.f32 %v632, %v1573
      %v1590 = vmul.f32 %v633, %v1574
      %v1591 = vmul.f32 %v634, %v1575
      %v1592 = vmul.f32 %v635, %v1576
      %v1593 = vmul.f32 %v636, %v1577
      %v1594 = vmul.f32 %v637, %v1578
      %v1595 = vmul.f32 %v638, %v1579
      %v1596 = vmul.f32 %v639, %v1580
      %v1597 = vmul.f32 %v640, %v1581
      %v1598 = vmul.f32 %v641, %v1582
      %v1599 = vmul.f32 %v642, %v1583
      %v1600 = vmul.f32 %v643, %v1584
      %v1601 = vmul.f32 %v644, %v1585
      %v1602 = vmul.f32 %v645, %v1586
      %v1603 = vpack.c.bf16 %v1587, %v1587
      %v1604 = vpack.c.bf16 %v1588, %v1588
      %v1605 = vpack.c.bf16 %v1589, %v1589
      %v1606 = vpack.c.bf16 %v1590, %v1590
      %v1607 = vpack.c.bf16 %v1591, %v1591
      %v1608 = vpack.c.bf16 %v1592, %v1592
      %v1609 = vpack.c.bf16 %v1593, %v1593
      %v1610 = vpack.c.bf16 %v1594, %v1594
      %v1611 = vpack.c.bf16 %v1595, %v1595
      %v1612 = vpack.c.bf16 %v1596, %v1596
      %v1613 = vpack.c.bf16 %v1597, %v1597
      %v1614 = vpack.c.bf16 %v1598, %v1598
      %v1615 = vpack.c.bf16 %v1599, %v1599
      %v1616 = vpack.c.bf16 %v1600, %v1600
      %v1617 = vpack.c.bf16 %v1601, %v1601
      %v1618 = vpack.c.bf16 %v1602, %v1602
      %v1620 = vsel %vm682, %v1603, 0
      %1622 = vmatprep.subr.bf16.mxu0 0
      %1623 = vmatpush1.bf16.msra.mxu0 0
      %1624 = vmatprep.subr.bf16.mxu0 0
      %1625 = vmatpush1.bf16.msra.mxu0 0
      %1626 = vmatprep.subr.bf16.mxu0 0
      %1627 = vmatpush1.bf16.msra.mxu0 0
      %1628 = vmatprep.subr.bf16.mxu0 0
      %1629 = vmatpush1.bf16.msra.mxu0 0
      %1630 = vmatprep.subr.bf16.mxu0 0
      %1631 = vmatpush1.bf16.msra.mxu0 0
      %1632 = vmatprep.subr.bf16.mxu0 0
      %1633 = vmatpush1.bf16.msra.mxu0 0
      %1634 = vmatprep.subr.bf16.mxu0 0
      %1635 = vmatpush1.bf16.msra.mxu0 0
      %1636 = vmatprep.subr.bf16.mxu0 0
      %1637 = vmatpush1.bf16.msra.mxu0 %v1620
      %1638 = vmatprep.subr.bf16.mxu0 0
      %1639 = vmatpush2.bf16.msra.mxu0 0
      %1640 = vmatprep.subr.bf16.mxu0 0
      %1641 = vmatpush2.bf16.msra.mxu0 0
      %1642 = vmatprep.subr.bf16.mxu0 0
      %1643 = vmatpush2.bf16.msra.mxu0 0
      %1644 = vmatprep.subr.bf16.mxu0 0
      %1645 = vmatpush2.bf16.msra.mxu0 0
      %1646 = vmatprep.subr.bf16.mxu0 0
      %1647 = vmatpush2.bf16.msra.mxu0 0
      %1648 = vmatprep.subr.bf16.mxu0 0
      %1649 = vmatpush2.bf16.msra.mxu0 0
      %1650 = vmatprep.subr.bf16.mxu0 0
      %1651 = vmatpush2.bf16.msra.mxu0 0
      %1652 = vmatprep.subr.bf16.mxu0 0
      %1653 = vmatpush2.bf16.msra.mxu0 0
      %1654 = vmatprep.mubr.bf16.mxu0 0
      %1655 = vmatmul.mubr.bf16.gmra.mxu0 %v680
      %v1656 = vpop.f32.mrf.mxu0
      %v1657 = vadd.f32 %v1587, %v1656
      %v1658 = vpop.f32.mrf.mxu0
      %v1659 = vpop.f32.mrf.mxu0
      %v1660 = vpop.f32.mrf.mxu0
      %1661 = vdwg.mxu0
      %v1663 = vsel %vm682, %v1604, 0
      %1665 = vmatprep.subr.bf16.mxu0 0
      %1666 = vmatpush1.bf16.msra.mxu0 0
      %1667 = vmatprep.subr.bf16.mxu0 0
      %1668 = vmatpush1.bf16.msra.mxu0 0
      %1669 = vmatprep.subr.bf16.mxu0 0
      %1670 = vmatpush1.bf16.msra.mxu0 0
      %1671 = vmatprep.subr.bf16.mxu0 0
      %1672 = vmatpush1.bf16.msra.mxu0 0
      %1673 = vmatprep.subr.bf16.mxu0 0
      %1674 = vmatpush1.bf16.msra.mxu0 0
      %1675 = vmatprep.subr.bf16.mxu0 0
      %1676 = vmatpush1.bf16.msra.mxu0 0
      %1677 = vmatprep.subr.bf16.mxu0 0
      %1678 = vmatpush1.bf16.msra.mxu0 0
      %1679 = vmatprep.subr.bf16.mxu0 0
      %1680 = vmatpush1.bf16.msra.mxu0 %v1663
      %1681 = vmatprep.subr.bf16.mxu0 0
      %1682 = vmatpush2.bf16.msra.mxu0 0
      %1683 = vmatprep.subr.bf16.mxu0 0
      %1684 = vmatpush2.bf16.msra.mxu0 0
      %1685 = vmatprep.subr.bf16.mxu0 0
      %1686 = vmatpush2.bf16.msra.mxu0 0
      %1687 = vmatprep.subr.bf16.mxu0 0
      %1688 = vmatpush2.bf16.msra.mxu0 0
      %1689 = vmatprep.subr.bf16.mxu0 0
      %1690 = vmatpush2.bf16.msra.mxu0 0
      %1691 = vmatprep.subr.bf16.mxu0 0
      %1692 = vmatpush2.bf16.msra.mxu0 0
      %1693 = vmatprep.subr.bf16.mxu0 0
      %1694 = vmatpush2.bf16.msra.mxu0 0
      %1695 = vmatprep.subr.bf16.mxu0 0
      %1696 = vmatpush2.bf16.msra.mxu0 0
      %1697 = vmatprep.mubr.bf16.mxu0 0
      %1698 = vmatmul.mubr.bf16.gmra.mxu0 %v727
      %v1699 = vpop.f32.mrf.mxu0
      %v1700 = vadd.f32 %v1588, %v1699
      %v1701 = vpop.f32.mrf.mxu0
      %v1702 = vpop.f32.mrf.mxu0
      %v1703 = vpop.f32.mrf.mxu0
      %1704 = vdwg.mxu0
      %v1706 = vsel %vm682, %v1605, 0
      %1708 = vmatprep.subr.bf16.mxu0 0
      %1709 = vmatpush1.bf16.msra.mxu0 0
      %1710 = vmatprep.subr.bf16.mxu0 0
      %1711 = vmatpush1.bf16.msra.mxu0 0
      %1712 = vmatprep.subr.bf16.mxu0 0
      %1713 = vmatpush1.bf16.msra.mxu0 0
      %1714 = vmatprep.subr.bf16.mxu0 0
      %1715 = vmatpush1.bf16.msra.mxu0 0
      %1716 = vmatprep.subr.bf16.mxu0 0
      %1717 = vmatpush1.bf16.msra.mxu0 0
      %1718 = vmatprep.subr.bf16.mxu0 0
      %1719 = vmatpush1.bf16.msra.mxu0 0
      %1720 = vmatprep.subr.bf16.mxu0 0
      %1721 = vmatpush1.bf16.msra.mxu0 0
      %1722 = vmatprep.subr.bf16.mxu0 0
      %1723 = vmatpush1.bf16.msra.mxu0 %v1706
      %1724 = vmatprep.subr.bf16.mxu0 0
      %1725 = vmatpush2.bf16.msra.mxu0 0
      %1726 = vmatprep.subr.bf16.mxu0 0
      %1727 = vmatpush2.bf16.msra.mxu0 0
      %1728 = vmatprep.subr.bf16.mxu0 0
      %1729 = vmatpush2.bf16.msra.mxu0 0
      %1730 = vmatprep.subr.bf16.mxu0 0
      %1731 = vmatpush2.bf16.msra.mxu0 0
      %1732 = vmatprep.subr.bf16.mxu0 0
      %1733 = vmatpush2.bf16.msra.mxu0 0
      %1734 = vmatprep.subr.bf16.mxu0 0
      %1735 = vmatpush2.bf16.msra.mxu0 0
      %1736 = vmatprep.subr.bf16.mxu0 0
      %1737 = vmatpush2.bf16.msra.mxu0 0
      %1738 = vmatprep.subr.bf16.mxu0 0
      %1739 = vmatpush2.bf16.msra.mxu0 0
      %1740 = vmatprep.mubr.bf16.mxu0 0
      %1741 = vmatmul.mubr.bf16.gmra.mxu0 %v773
      %v1742 = vpop.f32.mrf.mxu0
      %v1743 = vadd.f32 %v1589, %v1742
      %v1744 = vpop.f32.mrf.mxu0
      %v1745 = vpop.f32.mrf.mxu0
      %v1746 = vpop.f32.mrf.mxu0
      %1747 = vdwg.mxu0
      %v1749 = vsel %vm682, %v1606, 0
      %1751 = vmatprep.subr.bf16.mxu0 0
      %1752 = vmatpush1.bf16.msra.mxu0 0
      %1753 = vmatprep.subr.bf16.mxu0 0
      %1754 = vmatpush1.bf16.msra.mxu0 0
      %1755 = vmatprep.subr.bf16.mxu0 0
      %1756 = vmatpush1.bf16.msra.mxu0 0
      %1757 = vmatprep.subr.bf16.mxu0 0
      %1758 = vmatpush1.bf16.msra.mxu0 0
      %1759 = vmatprep.subr.bf16.mxu0 0
      %1760 = vmatpush1.bf16.msra.mxu0 0
      %1761 = vmatprep.subr.bf16.mxu0 0
      %1762 = vmatpush1.bf16.msra.mxu0 0
      %1763 = vmatprep.subr.bf16.mxu0 0
      %1764 = vmatpush1.bf16.msra.mxu0 0
      %1765 = vmatprep.subr.bf16.mxu0 0
      %1766 = vmatpush1.bf16.msra.mxu0 %v1749
      %1767 = vmatprep.subr.bf16.mxu0 0
      %1768 = vmatpush2.bf16.msra.mxu0 0
      %1769 = vmatprep.subr.bf16.mxu0 0
      %1770 = vmatpush2.bf16.msra.mxu0 0
      %1771 = vmatprep.subr.bf16.mxu0 0
      %1772 = vmatpush2.bf16.msra.mxu0 0
      %1773 = vmatprep.subr.bf16.mxu0 0
      %1774 = vmatpush2.bf16.msra.mxu0 0
      %1775 = vmatprep.subr.bf16.mxu0 0
      %1776 = vmatpush2.bf16.msra.mxu0 0
      %1777 = vmatprep.subr.bf16.mxu0 0
      %1778 = vmatpush2.bf16.msra.mxu0 0
      %1779 = vmatprep.subr.bf16.mxu0 0
      %1780 = vmatpush2.bf16.msra.mxu0 0
      %1781 = vmatprep.subr.bf16.mxu0 0
      %1782 = vmatpush2.bf16.msra.mxu0 0
      %1783 = vmatprep.mubr.bf16.mxu0 0
      %1784 = vmatmul.mubr.bf16.gmra.mxu0 %v819
      %v1785 = vpop.f32.mrf.mxu0
      %v1786 = vadd.f32 %v1590, %v1785
      %v1787 = vpop.f32.mrf.mxu0
      %v1788 = vpop.f32.mrf.mxu0
      %v1789 = vpop.f32.mrf.mxu0
      %1790 = vdwg.mxu0
      %v1792 = vsel %vm682, %v1607, 0
      %1794 = vmatprep.subr.bf16.mxu0 0
      %1795 = vmatpush1.bf16.msra.mxu0 0
      %1796 = vmatprep.subr.bf16.mxu0 0
      %1797 = vmatpush1.bf16.msra.mxu0 0
      %1798 = vmatprep.subr.bf16.mxu0 0
      %1799 = vmatpush1.bf16.msra.mxu0 0
      %1800 = vmatprep.subr.bf16.mxu0 0
      %1801 = vmatpush1.bf16.msra.mxu0 0
      %1802 = vmatprep.subr.bf16.mxu0 0
      %1803 = vmatpush1.bf16.msra.mxu0 0
      %1804 = vmatprep.subr.bf16.mxu0 0
      %1805 = vmatpush1.bf16.msra.mxu0 0
      %1806 = vmatprep.subr.bf16.mxu0 0
      %1807 = vmatpush1.bf16.msra.mxu0 0
      %1808 = vmatprep.subr.bf16.mxu0 0
      %1809 = vmatpush1.bf16.msra.mxu0 %v1792
      %1810 = vmatprep.subr.bf16.mxu0 0
      %1811 = vmatpush2.bf16.msra.mxu0 0
      %1812 = vmatprep.subr.bf16.mxu0 0
      %1813 = vmatpush2.bf16.msra.mxu0 0
      %1814 = vmatprep.subr.bf16.mxu0 0
      %1815 = vmatpush2.bf16.msra.mxu0 0
      %1816 = vmatprep.subr.bf16.mxu0 0
      %1817 = vmatpush2.bf16.msra.mxu0 0
      %1818 = vmatprep.subr.bf16.mxu0 0
      %1819 = vmatpush2.bf16.msra.mxu0 0
      %1820 = vmatprep.subr.bf16.mxu0 0
      %1821 = vmatpush2.bf16.msra.mxu0 0
      %1822 = vmatprep.subr.bf16.mxu0 0
      %1823 = vmatpush2.bf16.msra.mxu0 0
      %1824 = vmatprep.subr.bf16.mxu0 0
      %1825 = vmatpush2.bf16.msra.mxu0 0
      %1826 = vmatprep.mubr.bf16.mxu0 0
      %1827 = vmatmul.mubr.bf16.gmra.mxu0 %v865
      %v1828 = vpop.f32.mrf.mxu0
      %v1829 = vadd.f32 %v1591, %v1828
      %v1830 = vpop.f32.mrf.mxu0
      %v1831 = vpop.f32.mrf.mxu0
      %v1832 = vpop.f32.mrf.mxu0
      %1833 = vdwg.mxu0
      %v1835 = vsel %vm682, %v1608, 0
      %1837 = vmatprep.subr.bf16.mxu0 0
      %1838 = vmatpush1.bf16.msra.mxu0 0
      %1839 = vmatprep.subr.bf16.mxu0 0
      %1840 = vmatpush1.bf16.msra.mxu0 0
      %1841 = vmatprep.subr.bf16.mxu0 0
      %1842 = vmatpush1.bf16.msra.mxu0 0
      %1843 = vmatprep.subr.bf16.mxu0 0
      %1844 = vmatpush1.bf16.msra.mxu0 0
      %1845 = vmatprep.subr.bf16.mxu0 0
      %1846 = vmatpush1.bf16.msra.mxu0 0
      %1847 = vmatprep.subr.bf16.mxu0 0
      %1848 = vmatpush1.bf16.msra.mxu0 0
      %1849 = vmatprep.subr.bf16.mxu0 0
      %1850 = vmatpush1.bf16.msra.mxu0 0
      %1851 = vmatprep.subr.bf16.mxu0 0
      %1852 = vmatpush1.bf16.msra.mxu0 %v1835
      %1853 = vmatprep.subr.bf16.mxu0 0
      %1854 = vmatpush2.bf16.msra.mxu0 0
      %1855 = vmatprep.subr.bf16.mxu0 0
      %1856 = vmatpush2.bf16.msra.mxu0 0
      %1857 = vmatprep.subr.bf16.mxu0 0
      %1858 = vmatpush2.bf16.msra.mxu0 0
      %1859 = vmatprep.subr.bf16.mxu0 0
      %1860 = vmatpush2.bf16.msra.mxu0 0
      %1861 = vmatprep.subr.bf16.mxu0 0
      %1862 = vmatpush2.bf16.msra.mxu0 0
      %1863 = vmatprep.subr.bf16.mxu0 0
      %1864 = vmatpush2.bf16.msra.mxu0 0
      %1865 = vmatprep.subr.bf16.mxu0 0
      %1866 = vmatpush2.bf16.msra.mxu0 0
      %1867 = vmatprep.subr.bf16.mxu0 0
      %1868 = vmatpush2.bf16.msra.mxu0 0
      %1869 = vmatprep.mubr.bf16.mxu0 0
      %1870 = vmatmul.mubr.bf16.gmra.mxu0 %v911
      %v1871 = vpop.f32.mrf.mxu0
      %v1872 = vadd.f32 %v1592, %v1871
      %v1873 = vpop.f32.mrf.mxu0
      %v1874 = vpop.f32.mrf.mxu0
      %v1875 = vpop.f32.mrf.mxu0
      %1876 = vdwg.mxu0
      %v1878 = vsel %vm682, %v1609, 0
      %1880 = vmatprep.subr.bf16.mxu0 0
      %1881 = vmatpush1.bf16.msra.mxu0 0
      %1882 = vmatprep.subr.bf16.mxu0 0
      %1883 = vmatpush1.bf16.msra.mxu0 0
      %1884 = vmatprep.subr.bf16.mxu0 0
      %1885 = vmatpush1.bf16.msra.mxu0 0
      %1886 = vmatprep.subr.bf16.mxu0 0
      %1887 = vmatpush1.bf16.msra.mxu0 0
      %1888 = vmatprep.subr.bf16.mxu0 0
      %1889 = vmatpush1.bf16.msra.mxu0 0
      %1890 = vmatprep.subr.bf16.mxu0 0
      %1891 = vmatpush1.bf16.msra.mxu0 0
      %1892 = vmatprep.subr.bf16.mxu0 0
      %1893 = vmatpush1.bf16.msra.mxu0 0
      %1894 = vmatprep.subr.bf16.mxu0 0
      %1895 = vmatpush1.bf16.msra.mxu0 %v1878
      %1896 = vmatprep.subr.bf16.mxu0 0
      %1897 = vmatpush2.bf16.msra.mxu0 0
      %1898 = vmatprep.subr.bf16.mxu0 0
      %1899 = vmatpush2.bf16.msra.mxu0 0
      %1900 = vmatprep.subr.bf16.mxu0 0
      %1901 = vmatpush2.bf16.msra.mxu0 0
      %1902 = vmatprep.subr.bf16.mxu0 0
      %1903 = vmatpush2.bf16.msra.mxu0 0
      %1904 = vmatprep.subr.bf16.mxu0 0
      %1905 = vmatpush2.bf16.msra.mxu0 0
      %1906 = vmatprep.subr.bf16.mxu0 0
      %1907 = vmatpush2.bf16.msra.mxu0 0
      %1908 = vmatprep.subr.bf16.mxu0 0
      %1909 = vmatpush2.bf16.msra.mxu0 0
      %1910 = vmatprep.subr.bf16.mxu0 0
      %1911 = vmatpush2.bf16.msra.mxu0 0
      %1912 = vmatprep.mubr.bf16.mxu0 0
      %1913 = vmatmul.mubr.bf16.gmra.mxu0 %v957
      %v1914 = vpop.f32.mrf.mxu0
      %v1915 = vadd.f32 %v1593, %v1914
      %v1916 = vpop.f32.mrf.mxu0
      %v1917 = vpop.f32.mrf.mxu0
      %v1918 = vpop.f32.mrf.mxu0
      %1919 = vdwg.mxu0
      %v1921 = vsel %vm682, %v1610, 0
      %1923 = vmatprep.subr.bf16.mxu0 0
      %1924 = vmatpush1.bf16.msra.mxu0 0
      %1925 = vmatprep.subr.bf16.mxu0 0
      %1926 = vmatpush1.bf16.msra.mxu0 0
      %1927 = vmatprep.subr.bf16.mxu0 0
      %1928 = vmatpush1.bf16.msra.mxu0 0
      %1929 = vmatprep.subr.bf16.mxu0 0
      %1930 = vmatpush1.bf16.msra.mxu0 0
      %1931 = vmatprep.subr.bf16.mxu0 0
      %1932 = vmatpush1.bf16.msra.mxu0 0
      %1933 = vmatprep.subr.bf16.mxu0 0
      %1934 = vmatpush1.bf16.msra.mxu0 0
      %1935 = vmatprep.subr.bf16.mxu0 0
      %1936 = vmatpush1.bf16.msra.mxu0 0
      %1937 = vmatprep.subr.bf16.mxu0 0
      %1938 = vmatpush1.bf16.msra.mxu0 %v1921
      %1939 = vmatprep.subr.bf16.mxu0 0
      %1940 = vmatpush2.bf16.msra.mxu0 0
      %1941 = vmatprep.subr.bf16.mxu0 0
      %1942 = vmatpush2.bf16.msra.mxu0 0
      %1943 = vmatprep.subr.bf16.mxu0 0
      %1944 = vmatpush2.bf16.msra.mxu0 0
      %1945 = vmatprep.subr.bf16.mxu0 0
      %1946 = vmatpush2.bf16.msra.mxu0 0
      %1947 = vmatprep.subr.bf16.mxu0 0
      %1948 = vmatpush2.bf16.msra.mxu0 0
      %1949 = vmatprep.subr.bf16.mxu0 0
      %1950 = vmatpush2.bf16.msra.mxu0 0
      %1951 = vmatprep.subr.bf16.mxu0 0
      %1952 = vmatpush2.bf16.msra.mxu0 0
      %1953 = vmatprep.subr.bf16.mxu0 0
      %1954 = vmatpush2.bf16.msra.mxu0 0
      %1955 = vmatprep.mubr.bf16.mxu0 0
      %1956 = vmatmul.mubr.bf16.gmra.mxu0 %v1003
      %v1957 = vpop.f32.mrf.mxu0
      %v1958 = vadd.f32 %v1594, %v1957
      %v1959 = vpop.f32.mrf.mxu0
      %v1960 = vpop.f32.mrf.mxu0
      %v1961 = vpop.f32.mrf.mxu0
      %1962 = vdwg.mxu0
      %v1964 = vsel %vm682, %v1611, 0
      %1966 = vmatprep.subr.bf16.mxu0 0
      %1967 = vmatpush1.bf16.msra.mxu0 0
      %1968 = vmatprep.subr.bf16.mxu0 0
      %1969 = vmatpush1.bf16.msra.mxu0 0
      %1970 = vmatprep.subr.bf16.mxu0 0
      %1971 = vmatpush1.bf16.msra.mxu0 0
      %1972 = vmatprep.subr.bf16.mxu0 0
      %1973 = vmatpush1.bf16.msra.mxu0 0
      %1974 = vmatprep.subr.bf16.mxu0 0
      %1975 = vmatpush1.bf16.msra.mxu0 0
      %1976 = vmatprep.subr.bf16.mxu0 0
      %1977 = vmatpush1.bf16.msra.mxu0 0
      %1978 = vmatprep.subr.bf16.mxu0 0
      %1979 = vmatpush1.bf16.msra.mxu0 0
      %1980 = vmatprep.subr.bf16.mxu0 0
      %1981 = vmatpush1.bf16.msra.mxu0 %v1964
      %1982 = vmatprep.subr.bf16.mxu0 0
      %1983 = vmatpush2.bf16.msra.mxu0 0
      %1984 = vmatprep.subr.bf16.mxu0 0
      %1985 = vmatpush2.bf16.msra.mxu0 0
      %1986 = vmatprep.subr.bf16.mxu0 0
      %1987 = vmatpush2.bf16.msra.mxu0 0
      %1988 = vmatprep.subr.bf16.mxu0 0
      %1989 = vmatpush2.bf16.msra.mxu0 0
      %1990 = vmatprep.subr.bf16.mxu0 0
      %1991 = vmatpush2.bf16.msra.mxu0 0
      %1992 = vmatprep.subr.bf16.mxu0 0
      %1993 = vmatpush2.bf16.msra.mxu0 0
      %1994 = vmatprep.subr.bf16.mxu0 0
      %1995 = vmatpush2.bf16.msra.mxu0 0
      %1996 = vmatprep.subr.bf16.mxu0 0
      %1997 = vmatpush2.bf16.msra.mxu0 0
      %1998 = vmatprep.mubr.bf16.mxu0 0
      %1999 = vmatmul.mubr.bf16.gmra.mxu0 %v1049
      %v2000 = vpop.f32.mrf.mxu0
      %v2001 = vadd.f32 %v1595, %v2000
      %v2002 = vpop.f32.mrf.mxu0
      %v2003 = vpop.f32.mrf.mxu0
      %v2004 = vpop.f32.mrf.mxu0
      %2005 = vdwg.mxu0
      %v2007 = vsel %vm682, %v1612, 0
      %2009 = vmatprep.subr.bf16.mxu0 0
      %2010 = vmatpush1.bf16.msra.mxu0 0
      %2011 = vmatprep.subr.bf16.mxu0 0
      %2012 = vmatpush1.bf16.msra.mxu0 0
      %2013 = vmatprep.subr.bf16.mxu0 0
      %2014 = vmatpush1.bf16.msra.mxu0 0
      %2015 = vmatprep.subr.bf16.mxu0 0
      %2016 = vmatpush1.bf16.msra.mxu0 0
      %2017 = vmatprep.subr.bf16.mxu0 0
      %2018 = vmatpush1.bf16.msra.mxu0 0
      %2019 = vmatprep.subr.bf16.mxu0 0
      %2020 = vmatpush1.bf16.msra.mxu0 0
      %2021 = vmatprep.subr.bf16.mxu0 0
      %2022 = vmatpush1.bf16.msra.mxu0 0
      %2023 = vmatprep.subr.bf16.mxu0 0
      %2024 = vmatpush1.bf16.msra.mxu0 %v2007
      %2025 = vmatprep.subr.bf16.mxu0 0
      %2026 = vmatpush2.bf16.msra.mxu0 0
      %2027 = vmatprep.subr.bf16.mxu0 0
      %2028 = vmatpush2.bf16.msra.mxu0 0
      %2029 = vmatprep.subr.bf16.mxu0 0
      %2030 = vmatpush2.bf16.msra.mxu0 0
      %2031 = vmatprep.subr.bf16.mxu0 0
      %2032 = vmatpush2.bf16.msra.mxu0 0
      %2033 = vmatprep.subr.bf16.mxu0 0
      %2034 = vmatpush2.bf16.msra.mxu0 0
      %2035 = vmatprep.subr.bf16.mxu0 0
      %2036 = vmatpush2.bf16.msra.mxu0 0
      %2037 = vmatprep.subr.bf16.mxu0 0
      %2038 = vmatpush2.bf16.msra.mxu0 0
      %2039 = vmatprep.subr.bf16.mxu0 0
      %2040 = vmatpush2.bf16.msra.mxu0 0
      %2041 = vmatprep.mubr.bf16.mxu0 0
      %2042 = vmatmul.mubr.bf16.gmra.mxu0 %v1095
      %v2043 = vpop.f32.mrf.mxu0
      %v2044 = vadd.f32 %v1596, %v2043
      %v2045 = vpop.f32.mrf.mxu0
      %v2046 = vpop.f32.mrf.mxu0
      %v2047 = vpop.f32.mrf.mxu0
      %2048 = vdwg.mxu0
      %v2050 = vsel %vm682, %v1613, 0
      %2052 = vmatprep.subr.bf16.mxu0 0
      %2053 = vmatpush1.bf16.msra.mxu0 0
      %2054 = vmatprep.subr.bf16.mxu0 0
      %2055 = vmatpush1.bf16.msra.mxu0 0
      %2056 = vmatprep.subr.bf16.mxu0 0
      %2057 = vmatpush1.bf16.msra.mxu0 0
      %2058 = vmatprep.subr.bf16.mxu0 0
      %2059 = vmatpush1.bf16.msra.mxu0 0
      %2060 = vmatprep.subr.bf16.mxu0 0
      %2061 = vmatpush1.bf16.msra.mxu0 0
      %2062 = vmatprep.subr.bf16.mxu0 0
      %2063 = vmatpush1.bf16.msra.mxu0 0
      %2064 = vmatprep.subr.bf16.mxu0 0
      %2065 = vmatpush1.bf16.msra.mxu0 0
      %2066 = vmatprep.subr.bf16.mxu0 0
      %2067 = vmatpush1.bf16.msra.mxu0 %v2050
      %2068 = vmatprep.subr.bf16.mxu0 0
      %2069 = vmatpush2.bf16.msra.mxu0 0
      %2070 = vmatprep.subr.bf16.mxu0 0
      %2071 = vmatpush2.bf16.msra.mxu0 0
      %2072 = vmatprep.subr.bf16.mxu0 0
      %2073 = vmatpush2.bf16.msra.mxu0 0
      %2074 = vmatprep.subr.bf16.mxu0 0
      %2075 = vmatpush2.bf16.msra.mxu0 0
      %2076 = vmatprep.subr.bf16.mxu0 0
      %2077 = vmatpush2.bf16.msra.mxu0 0
      %2078 = vmatprep.subr.bf16.mxu0 0
      %2079 = vmatpush2.bf16.msra.mxu0 0
      %2080 = vmatprep.subr.bf16.mxu0 0
      %2081 = vmatpush2.bf16.msra.mxu0 0
      %2082 = vmatprep.subr.bf16.mxu0 0
      %2083 = vmatpush2.bf16.msra.mxu0 0
      %2084 = vmatprep.mubr.bf16.mxu0 0
      %2085 = vmatmul.mubr.bf16.gmra.mxu0 %v1141
      %v2086 = vpop.f32.mrf.mxu0
      %v2087 = vadd.f32 %v1597, %v2086
      %v2088 = vpop.f32.mrf.mxu0
      %v2089 = vpop.f32.mrf.mxu0
      %v2090 = vpop.f32.mrf.mxu0
      %2091 = vdwg.mxu0
      %v2093 = vsel %vm682, %v1614, 0
      %2095 = vmatprep.subr.bf16.mxu0 0
      %2096 = vmatpush1.bf16.msra.mxu0 0
      %2097 = vmatprep.subr.bf16.mxu0 0
      %2098 = vmatpush1.bf16.msra.mxu0 0
      %2099 = vmatprep.subr.bf16.mxu0 0
      %2100 = vmatpush1.bf16.msra.mxu0 0
      %2101 = vmatprep.subr.bf16.mxu0 0
      %2102 = vmatpush1.bf16.msra.mxu0 0
      %2103 = vmatprep.subr.bf16.mxu0 0
      %2104 = vmatpush1.bf16.msra.mxu0 0
      %2105 = vmatprep.subr.bf16.mxu0 0
      %2106 = vmatpush1.bf16.msra.mxu0 0
      %2107 = vmatprep.subr.bf16.mxu0 0
      %2108 = vmatpush1.bf16.msra.mxu0 0
      %2109 = vmatprep.subr.bf16.mxu0 0
      %2110 = vmatpush1.bf16.msra.mxu0 %v2093
      %2111 = vmatprep.subr.bf16.mxu0 0
      %2112 = vmatpush2.bf16.msra.mxu0 0
      %2113 = vmatprep.subr.bf16.mxu0 0
      %2114 = vmatpush2.bf16.msra.mxu0 0
      %2115 = vmatprep.subr.bf16.mxu0 0
      %2116 = vmatpush2.bf16.msra.mxu0 0
      %2117 = vmatprep.subr.bf16.mxu0 0
      %2118 = vmatpush2.bf16.msra.mxu0 0
      %2119 = vmatprep.subr.bf16.mxu0 0
      %2120 = vmatpush2.bf16.msra.mxu0 0
      %2121 = vmatprep.subr.bf16.mxu0 0
      %2122 = vmatpush2.bf16.msra.mxu0 0
      %2123 = vmatprep.subr.bf16.mxu0 0
      %2124 = vmatpush2.bf16.msra.mxu0 0
      %2125 = vmatprep.subr.bf16.mxu0 0
      %2126 = vmatpush2.bf16.msra.mxu0 0
      %2127 = vmatprep.mubr.bf16.mxu0 0
      %2128 = vmatmul.mubr.bf16.gmra.mxu0 %v1187
      %v2129 = vpop.f32.mrf.mxu0
      %v2130 = vadd.f32 %v1598, %v2129
      %v2131 = vpop.f32.mrf.mxu0
      %v2132 = vpop.f32.mrf.mxu0
      %v2133 = vpop.f32.mrf.mxu0
      %2134 = vdwg.mxu0
      %v2136 = vsel %vm682, %v1615, 0
      %2138 = vmatprep.subr.bf16.mxu0 0
      %2139 = vmatpush1.bf16.msra.mxu0 0
      %2140 = vmatprep.subr.bf16.mxu0 0
      %2141 = vmatpush1.bf16.msra.mxu0 0
      %2142 = vmatprep.subr.bf16.mxu0 0
      %2143 = vmatpush1.bf16.msra.mxu0 0
      %2144 = vmatprep.subr.bf16.mxu0 0
      %2145 = vmatpush1.bf16.msra.mxu0 0
      %2146 = vmatprep.subr.bf16.mxu0 0
      %2147 = vmatpush1.bf16.msra.mxu0 0
      %2148 = vmatprep.subr.bf16.mxu0 0
      %2149 = vmatpush1.bf16.msra.mxu0 0
      %2150 = vmatprep.subr.bf16.mxu0 0
      %2151 = vmatpush1.bf16.msra.mxu0 0
      %2152 = vmatprep.subr.bf16.mxu0 0
      %2153 = vmatpush1.bf16.msra.mxu0 %v2136
      %2154 = vmatprep.subr.bf16.mxu0 0
      %2155 = vmatpush2.bf16.msra.mxu0 0
      %2156 = vmatprep.subr.bf16.mxu0 0
      %2157 = vmatpush2.bf16.msra.mxu0 0
      %2158 = vmatprep.subr.bf16.mxu0 0
      %2159 = vmatpush2.bf16.msra.mxu0 0
      %2160 = vmatprep.subr.bf16.mxu0 0
      %2161 = vmatpush2.bf16.msra.mxu0 0
      %2162 = vmatprep.subr.bf16.mxu0 0
      %2163 = vmatpush2.bf16.msra.mxu0 0
      %2164 = vmatprep.subr.bf16.mxu0 0
      %2165 = vmatpush2.bf16.msra.mxu0 0
      %2166 = vmatprep.subr.bf16.mxu0 0
      %2167 = vmatpush2.bf16.msra.mxu0 0
      %2168 = vmatprep.subr.bf16.mxu0 0
      %2169 = vmatpush2.bf16.msra.mxu0 0
      %2170 = vmatprep.mubr.bf16.mxu0 0
      %2171 = vmatmul.mubr.bf16.gmra.mxu0 %v1233
      %v2172 = vpop.f32.mrf.mxu0
      %v2173 = vadd.f32 %v1599, %v2172
      %v2174 = vpop.f32.mrf.mxu0
      %v2175 = vpop.f32.mrf.mxu0
      %v2176 = vpop.f32.mrf.mxu0
      %2177 = vdwg.mxu0
      %v2179 = vsel %vm682, %v1616, 0
      %2181 = vmatprep.subr.bf16.mxu0 0
      %2182 = vmatpush1.bf16.msra.mxu0 0
      %2183 = vmatprep.subr.bf16.mxu0 0
      %2184 = vmatpush1.bf16.msra.mxu0 0
      %2185 = vmatprep.subr.bf16.mxu0 0
      %2186 = vmatpush1.bf16.msra.mxu0 0
      %2187 = vmatprep.subr.bf16.mxu0 0
      %2188 = vmatpush1.bf16.msra.mxu0 0
      %2189 = vmatprep.subr.bf16.mxu0 0
      %2190 = vmatpush1.bf16.msra.mxu0 0
      %2191 = vmatprep.subr.bf16.mxu0 0
      %2192 = vmatpush1.bf16.msra.mxu0 0
      %2193 = vmatprep.subr.bf16.mxu0 0
      %2194 = vmatpush1.bf16.msra.mxu0 0
      %2195 = vmatprep.subr.bf16.mxu0 0
      %2196 = vmatpush1.bf16.msra.mxu0 %v2179
      %2197 = vmatprep.subr.bf16.mxu0 0
      %2198 = vmatpush2.bf16.msra.mxu0 0
      %2199 = vmatprep.subr.bf16.mxu0 0
      %2200 = vmatpush2.bf16.msra.mxu0 0
      %2201 = vmatprep.subr.bf16.mxu0 0
      %2202 = vmatpush2.bf16.msra.mxu0 0
      %2203 = vmatprep.subr.bf16.mxu0 0
      %2204 = vmatpush2.bf16.msra.mxu0 0
      %2205 = vmatprep.subr.bf16.mxu0 0
      %2206 = vmatpush2.bf16.msra.mxu0 0
      %2207 = vmatprep.subr.bf16.mxu0 0
      %2208 = vmatpush2.bf16.msra.mxu0 0
      %2209 = vmatprep.subr.bf16.mxu0 0
      %2210 = vmatpush2.bf16.msra.mxu0 0
      %2211 = vmatprep.subr.bf16.mxu0 0
      %2212 = vmatpush2.bf16.msra.mxu0 0
      %2213 = vmatprep.mubr.bf16.mxu0 0
      %2214 = vmatmul.mubr.bf16.gmra.mxu0 %v1279
      %v2215 = vpop.f32.mrf.mxu0
      %v2216 = vadd.f32 %v1600, %v2215
      %v2217 = vpop.f32.mrf.mxu0
      %v2218 = vpop.f32.mrf.mxu0
      %v2219 = vpop.f32.mrf.mxu0
      %2220 = vdwg.mxu0
      %v2222 = vsel %vm682, %v1617, 0
      %2224 = vmatprep.subr.bf16.mxu0 0
      %2225 = vmatpush1.bf16.msra.mxu0 0
      %2226 = vmatprep.subr.bf16.mxu0 0
      %2227 = vmatpush1.bf16.msra.mxu0 0
      %2228 = vmatprep.subr.bf16.mxu0 0
      %2229 = vmatpush1.bf16.msra.mxu0 0
      %2230 = vmatprep.subr.bf16.mxu0 0
      %2231 = vmatpush1.bf16.msra.mxu0 0
      %2232 = vmatprep.subr.bf16.mxu0 0
      %2233 = vmatpush1.bf16.msra.mxu0 0
      %2234 = vmatprep.subr.bf16.mxu0 0
      %2235 = vmatpush1.bf16.msra.mxu0 0
      %2236 = vmatprep.subr.bf16.mxu0 0
      %2237 = vmatpush1.bf16.msra.mxu0 0
      %2238 = vmatprep.subr.bf16.mxu0 0
      %2239 = vmatpush1.bf16.msra.mxu0 %v2222
      %2240 = vmatprep.subr.bf16.mxu0 0
      %2241 = vmatpush2.bf16.msra.mxu0 0
      %2242 = vmatprep.subr.bf16.mxu0 0
      %2243 = vmatpush2.bf16.msra.mxu0 0
      %2244 = vmatprep.subr.bf16.mxu0 0
      %2245 = vmatpush2.bf16.msra.mxu0 0
      %2246 = vmatprep.subr.bf16.mxu0 0
      %2247 = vmatpush2.bf16.msra.mxu0 0
      %2248 = vmatprep.subr.bf16.mxu0 0
      %2249 = vmatpush2.bf16.msra.mxu0 0
      %2250 = vmatprep.subr.bf16.mxu0 0
      %2251 = vmatpush2.bf16.msra.mxu0 0
      %2252 = vmatprep.subr.bf16.mxu0 0
      %2253 = vmatpush2.bf16.msra.mxu0 0
      %2254 = vmatprep.subr.bf16.mxu0 0
      %2255 = vmatpush2.bf16.msra.mxu0 0
      %2256 = vmatprep.mubr.bf16.mxu0 0
      %2257 = vmatmul.mubr.bf16.gmra.mxu0 %v1325
      %v2258 = vpop.f32.mrf.mxu0
      %v2259 = vadd.f32 %v1601, %v2258
      %v2260 = vpop.f32.mrf.mxu0
      %v2261 = vpop.f32.mrf.mxu0
      %v2262 = vpop.f32.mrf.mxu0
      %2263 = vdwg.mxu0
      %v2265 = vsel %vm682, %v1618, 0
      %2267 = vmatprep.subr.bf16.mxu0 0
      %2268 = vmatpush1.bf16.msra.mxu0 0
      %2269 = vmatprep.subr.bf16.mxu0 0
      %2270 = vmatpush1.bf16.msra.mxu0 0
      %2271 = vmatprep.subr.bf16.mxu0 0
      %2272 = vmatpush1.bf16.msra.mxu0 0
      %2273 = vmatprep.subr.bf16.mxu0 0
      %2274 = vmatpush1.bf16.msra.mxu0 0
      %2275 = vmatprep.subr.bf16.mxu0 0
      %2276 = vmatpush1.bf16.msra.mxu0 0
      %2277 = vmatprep.subr.bf16.mxu0 0
      %2278 = vmatpush1.bf16.msra.mxu0 0
      %2279 = vmatprep.subr.bf16.mxu0 0
      %2280 = vmatpush1.bf16.msra.mxu0 0
      %2281 = vmatprep.subr.bf16.mxu0 0
      %2282 = vmatpush1.bf16.msra.mxu0 %v2265
      %2283 = vmatprep.subr.bf16.mxu0 0
      %2284 = vmatpush2.bf16.msra.mxu0 0
      %2285 = vmatprep.subr.bf16.mxu0 0
      %2286 = vmatpush2.bf16.msra.mxu0 0
      %2287 = vmatprep.subr.bf16.mxu0 0
      %2288 = vmatpush2.bf16.msra.mxu0 0
      %2289 = vmatprep.subr.bf16.mxu0 0
      %2290 = vmatpush2.bf16.msra.mxu0 0
      %2291 = vmatprep.subr.bf16.mxu0 0
      %2292 = vmatpush2.bf16.msra.mxu0 0
      %2293 = vmatprep.subr.bf16.mxu0 0
      %2294 = vmatpush2.bf16.msra.mxu0 0
      %2295 = vmatprep.subr.bf16.mxu0 0
      %2296 = vmatpush2.bf16.msra.mxu0 0
      %2297 = vmatprep.subr.bf16.mxu0 0
      %2298 = vmatpush2.bf16.msra.mxu0 0
      %2299 = vmatprep.mubr.bf16.mxu0 0
      %2300 = vmatmul.mubr.bf16.gmra.mxu0 %v1371
      %v2301 = vpop.f32.mrf.mxu0
      %v2302 = vadd.f32 %v1602, %v2301
      %v2303 = vpop.f32.mrf.mxu0
      %v2304 = vpop.f32.mrf.mxu0
      %v2305 = vpop.f32.mrf.mxu0
      %2306 = vdwg.mxu0
      %v2307 = vmul.f32 %v630, %v1657
      %v2308 = vmul.f32 %v631, %v1700
      %v2309 = vmul.f32 %v632, %v1743
      %v2310 = vmul.f32 %v633, %v1786
      %v2311 = vmul.f32 %v634, %v1829
      %v2312 = vmul.f32 %v635, %v1872
      %v2313 = vmul.f32 %v636, %v1915
      %v2314 = vmul.f32 %v637, %v1958
      %v2315 = vmul.f32 %v638, %v2001
      %v2316 = vmul.f32 %v639, %v2044
      %v2317 = vmul.f32 %v640, %v2087
      %v2318 = vmul.f32 %v641, %v2130
      %v2319 = vmul.f32 %v642, %v2173
      %v2320 = vmul.f32 %v643, %v2216
      %v2321 = vmul.f32 %v644, %v2259
      %v2322 = vmul.f32 %v645, %v2302
      %v2323 = vpack.c.bf16 %v2308, %v2307
      %v2324 = vpack.c.bf16 %v2310, %v2309
      %v2325 = vpack.c.bf16 %v2312, %v2311
      %v2326 = vpack.c.bf16 %v2314, %v2313
      %v2327 = vpack.c.bf16 %v2316, %v2315
      %v2328 = vpack.c.bf16 %v2318, %v2317
      %v2329 = vpack.c.bf16 %v2320, %v2319
      %v2330 = vpack.c.bf16 %v2322, %v2321
      %v2331 = vld [vmem:[%s6] sm:$0xf]
      %v2332 = vld [vmem:[%s6 + $0x4] sm:$0xf]
      %v2333 = vld [vmem:[%s6 + $0x8] sm:$0xf]
      %v2334 = vld [vmem:[%s6 + $0xc] sm:$0xf]
      %v2335 = vlaneseq
      %v2336 = vshrl.u32 %v2335, 7
      %v2337 = vsub.s32 1, %v2336
      %v2338 = vrot.slane %v646, %v2337
      %v2343 = vunpack.c.l.b16 %v2331
      %v2344 = vunpack.c.l.b16 %v2332
      %v2345 = vunpack.c.l.b16 %v2333
      %v2346 = vunpack.c.l.b16 %v2334
      %v2347 = vpack.c.b16 %v2344, %v2343
      %v2348 = vpack.c.b16 %v2346, %v2345
      %vm2351 = vcmask 261120
      %v2353 = vsel %vm2351, %v2323, 0
      %v2356 = vsel %vm2351, %v2324, 0
      %v2359 = vsel %vm2351, %v2325, 0
      %v2362 = vsel %vm2351, %v2326, 0
      %v2365 = vsel %vm2351, %v2327, 0
      %v2368 = vsel %vm2351, %v2328, 0
      %v2371 = vsel %vm2351, %v2329, 0
      %v2374 = vsel %vm2351, %v2330, 0
      %2376 = vmatprep.subr.bf16.mxu0 0
      %2377 = vmatpush1.bf16.msra.mxu0 0
      %2378 = vmatprep.subr.bf16.mxu0 0
      %2379 = vmatpush1.bf16.msra.mxu0 0
      %2380 = vmatprep.subr.bf16.mxu0 0
      %2381 = vmatpush1.bf16.msra.mxu0 0
      %2382 = vmatprep.subr.bf16.mxu0 0
      %2383 = vmatpush1.bf16.msra.mxu0 0
      %2384 = vmatprep.subr.bf16.mxu0 0
      %2385 = vmatpush1.bf16.msra.mxu0 0
      %2386 = vmatprep.subr.bf16.mxu0 0
      %2387 = vmatpush1.bf16.msra.mxu0 0
      %2388 = vmatprep.subr.bf16.mxu0 0
      %2389 = vmatpush1.bf16.msra.mxu0 %v2348
      %2390 = vmatprep.subr.bf16.mxu0 0
      %2391 = vmatpush1.bf16.msra.mxu0 %v2347
      %2392 = vmatprep.subr.bf16.mxu0 0
      %2393 = vmatpush2.bf16.msra.mxu0 0
      %2394 = vmatprep.subr.bf16.mxu0 0
      %2395 = vmatpush2.bf16.msra.mxu0 0
      %2396 = vmatprep.subr.bf16.mxu0 0
      %2397 = vmatpush2.bf16.msra.mxu0 0
      %2398 = vmatprep.subr.bf16.mxu0 0
      %2399 = vmatpush2.bf16.msra.mxu0 0
      %2400 = vmatprep.subr.bf16.mxu0 0
      %2401 = vmatpush2.bf16.msra.mxu0 0
      %2402 = vmatprep.subr.bf16.mxu0 0
      %2403 = vmatpush2.bf16.msra.mxu0 0
      %2404 = vmatprep.subr.bf16.mxu0 0
      %2405 = vmatpush2.bf16.msra.mxu0 0
      %2406 = vmatprep.subr.bf16.mxu0 0
      %2407 = vmatpush2.bf16.msra.mxu0 0
      %2408 = vmatprep.mubr.bf16.mxu0 0
      %2409 = vmatmul.mubr.bf16.gmra.mxu0 %v2353
      %v2410 = vpop.f32.mrf.mxu0
      %v2411 = vadd.f32 %v2338, %v2410
      %v2412 = vpop.f32.mrf.mxu0
      %v2413 = vpop.f32.mrf.mxu0
      %v2414 = vadd.f32 %v2338, %v2413
      %v2415 = vpop.f32.mrf.mxu0
      %2416 = vmatprep.mubr.bf16.mxu0 0
      %2417 = vmatmul.mubr.bf16.gmra.mxu0 %v2356
      %v2418 = vpop.f32.mrf.mxu0
      %v2419 = vadd.f32 %v2338, %v2418
      %v2420 = vpop.f32.mrf.mxu0
      %v2421 = vpop.f32.mrf.mxu0
      %v2422 = vadd.f32 %v2338, %v2421
      %v2423 = vpop.f32.mrf.mxu0
      %2424 = vmatprep.mubr.bf16.mxu0 0
      %2425 = vmatmul.mubr.bf16.gmra.mxu0 %v2359
      %v2426 = vpop.f32.mrf.mxu0
      %v2427 = vadd.f32 %v2338, %v2426
      %v2428 = vpop.f32.mrf.mxu0
      %v2429 = vpop.f32.mrf.mxu0
      %v2430 = vadd.f32 %v2338, %v2429
      %v2431 = vpop.f32.mrf.mxu0
      %2432 = vmatprep.mubr.bf16.mxu0 0
      %2433 = vmatmul.mubr.bf16.gmra.mxu0 %v2362
      %v2434 = vpop.f32.mrf.mxu0
      %v2435 = vadd.f32 %v2338, %v2434
      %v2436 = vpop.f32.mrf.mxu0
      %v2437 = vpop.f32.mrf.mxu0
      %v2438 = vadd.f32 %v2338, %v2437
      %v2439 = vpop.f32.mrf.mxu0
      %2440 = vmatprep.mubr.bf16.mxu0 0
      %2441 = vmatmul.mubr.bf16.gmra.mxu0 %v2365
      %v2442 = vpop.f32.mrf.mxu0
      %v2443 = vadd.f32 %v2338, %v2442
      %v2444 = vpop.f32.mrf.mxu0
      %v2445 = vpop.f32.mrf.mxu0
      %v2446 = vadd.f32 %v2338, %v2445
      %v2447 = vpop.f32.mrf.mxu0
      %2448 = vmatprep.mubr.bf16.mxu0 0
      %2449 = vmatmul.mubr.bf16.gmra.mxu0 %v2368
      %v2450 = vpop.f32.mrf.mxu0
      %v2451 = vadd.f32 %v2338, %v2450
      %v2452 = vpop.f32.mrf.mxu0
      %v2453 = vpop.f32.mrf.mxu0
      %v2454 = vadd.f32 %v2338, %v2453
      %v2455 = vpop.f32.mrf.mxu0
      %2456 = vmatprep.mubr.bf16.mxu0 0
      %2457 = vmatmul.mubr.bf16.gmra.mxu0 %v2371
      %v2458 = vpop.f32.mrf.mxu0
      %v2459 = vadd.f32 %v2338, %v2458
      %v2460 = vpop.f32.mrf.mxu0
      %v2461 = vpop.f32.mrf.mxu0
      %v2462 = vadd.f32 %v2338, %v2461
      %v2463 = vpop.f32.mrf.mxu0
      %2464 = vmatprep.mubr.bf16.mxu0 0
      %2465 = vmatmul.mubr.bf16.gmra.mxu0 %v2374
      %v2466 = vpop.f32.mrf.mxu0
      %v2467 = vadd.f32 %v2338, %v2466
      %v2468 = vpop.f32.mrf.mxu0
      %v2469 = vpop.f32.mrf.mxu0
      %v2470 = vadd.f32 %v2338, %v2469
      %v2471 = vpop.f32.mrf.mxu0
      %2472 = vdwg.mxu0
      %v2473 = vmax.f32 %v2411, 0.0
      %v2474 = vmax.f32 %v2414, 0.0
      %v2475 = vmax.f32 %v2419, 0.0
      %v2476 = vmax.f32 %v2422, 0.0
      %v2477 = vmax.f32 %v2427, 0.0
      %v2478 = vmax.f32 %v2430, 0.0
      %v2479 = vmax.f32 %v2435, 0.0
      %v2480 = vmax.f32 %v2438, 0.0
      %v2481 = vmax.f32 %v2443, 0.0
      %v2482 = vmax.f32 %v2446, 0.0
      %v2483 = vmax.f32 %v2451, 0.0
      %v2484 = vmax.f32 %v2454, 0.0
      %v2485 = vmax.f32 %v2459, 0.0
      %v2486 = vmax.f32 %v2462, 0.0
      %v2487 = vmax.f32 %v2467, 0.0
      %v2488 = vmax.f32 %v2470, 0.0
      %v2489 = vsel %vm2351, %v2473, 0.0
      %v2490 = vrot.slane %v2489, 4
      %v2491 = vadd.f32 %v2489, %v2490
      %v2492 = vrot.slane %v2491, 2
      %v2493 = vadd.f32 %v2491, %v2492
      %v2494 = vrot.slane %v2493, 1
      %v2495 = vadd.f32 %v2493, %v2494
      %v2496 = vsel %vm2351, %v2474, 0.0
      %v2497 = vrot.slane %v2496, 4
      %v2498 = vadd.f32 %v2496, %v2497
      %v2499 = vrot.slane %v2498, 2
      %v2500 = vadd.f32 %v2498, %v2499
      %v2501 = vrot.slane %v2500, 1
      %v2502 = vadd.f32 %v2500, %v2501
      %v2503 = vsel %vm2351, %v2475, 0.0
      %v2504 = vrot.slane %v2503, 4
      %v2505 = vadd.f32 %v2503, %v2504
      %v2506 = vrot.slane %v2505, 2
      %v2507 = vadd.f32 %v2505, %v2506
      %v2508 = vrot.slane %v2507, 1
      %v2509 = vadd.f32 %v2507, %v2508
      %v2510 = vsel %vm2351, %v2476, 0.0
      %v2511 = vrot.slane %v2510, 4
      %v2512 = vadd.f32 %v2510, %v2511
      %v2513 = vrot.slane %v2512, 2
      %v2514 = vadd.f32 %v2512, %v2513
      %v2515 = vrot.slane %v2514, 1
      %v2516 = vadd.f32 %v2514, %v2515
      %v2517 = vsel %vm2351, %v2477, 0.0
      %v2518 = vrot.slane %v2517, 4
      %v2519 = vadd.f32 %v2517, %v2518
      %v2520 = vrot.slane %v2519, 2
      %v2521 = vadd.f32 %v2519, %v2520
      %v2522 = vrot.slane %v2521, 1
      %v2523 = vadd.f32 %v2521, %v2522
      %v2524 = vsel %vm2351, %v2478, 0.0
      %v2525 = vrot.slane %v2524, 4
      %v2526 = vadd.f32 %v2524, %v2525
      %v2527 = vrot.slane %v2526, 2
      %v2528 = vadd.f32 %v2526, %v2527
      %v2529 = vrot.slane %v2528, 1
      %v2530 = vadd.f32 %v2528, %v2529
      %v2531 = vsel %vm2351, %v2479, 0.0
      %v2532 = vrot.slane %v2531, 4
      %v2533 = vadd.f32 %v2531, %v2532
      %v2534 = vrot.slane %v2533, 2
      %v2535 = vadd.f32 %v2533, %v2534
      %v2536 = vrot.slane %v2535, 1
      %v2537 = vadd.f32 %v2535, %v2536
      %v2538 = vsel %vm2351, %v2480, 0.0
      %v2539 = vrot.slane %v2538, 4
      %v2540 = vadd.f32 %v2538, %v2539
      %v2541 = vrot.slane %v2540, 2
      %v2542 = vadd.f32 %v2540, %v2541
      %v2543 = vrot.slane %v2542, 1
      %v2544 = vadd.f32 %v2542, %v2543
      %v2545 = vsel %vm2351, %v2481, 0.0
      %v2546 = vrot.slane %v2545, 4
      %v2547 = vadd.f32 %v2545, %v2546
      %v2548 = vrot.slane %v2547, 2
      %v2549 = vadd.f32 %v2547, %v2548
      %v2550 = vrot.slane %v2549, 1
      %v2551 = vadd.f32 %v2549, %v2550
      %v2552 = vsel %vm2351, %v2482, 0.0
      %v2553 = vrot.slane %v2552, 4
      %v2554 = vadd.f32 %v2552, %v2553
      %v2555 = vrot.slane %v2554, 2
      %v2556 = vadd.f32 %v2554, %v2555
      %v2557 = vrot.slane %v2556, 1
      %v2558 = vadd.f32 %v2556, %v2557
      %v2559 = vsel %vm2351, %v2483, 0.0
      %v2560 = vrot.slane %v2559, 4
      %v2561 = vadd.f32 %v2559, %v2560
      %v2562 = vrot.slane %v2561, 2
      %v2563 = vadd.f32 %v2561, %v2562
      %v2564 = vrot.slane %v2563, 1
      %v2565 = vadd.f32 %v2563, %v2564
      %v2566 = vsel %vm2351, %v2484, 0.0
      %v2567 = vrot.slane %v2566, 4
      %v2568 = vadd.f32 %v2566, %v2567
      %v2569 = vrot.slane %v2568, 2
      %v2570 = vadd.f32 %v2568, %v2569
      %v2571 = vrot.slane %v2570, 1
      %v2572 = vadd.f32 %v2570, %v2571
      %v2573 = vsel %vm2351, %v2485, 0.0
      %v2574 = vrot.slane %v2573, 4
      %v2575 = vadd.f32 %v2573, %v2574
      %v2576 = vrot.slane %v2575, 2
      %v2577 = vadd.f32 %v2575, %v2576
      %v2578 = vrot.slane %v2577, 1
      %v2579 = vadd.f32 %v2577, %v2578
      %v2580 = vsel %vm2351, %v2486, 0.0
      %v2581 = vrot.slane %v2580, 4
      %v2582 = vadd.f32 %v2580, %v2581
      %v2583 = vrot.slane %v2582, 2
      %v2584 = vadd.f32 %v2582, %v2583
      %v2585 = vrot.slane %v2584, 1
      %v2586 = vadd.f32 %v2584, %v2585
      %v2587 = vsel %vm2351, %v2487, 0.0
      %v2588 = vrot.slane %v2587, 4
      %v2589 = vadd.f32 %v2587, %v2588
      %v2590 = vrot.slane %v2589, 2
      %v2591 = vadd.f32 %v2589, %v2590
      %v2592 = vrot.slane %v2591, 1
      %v2593 = vadd.f32 %v2591, %v2592
      %v2594 = vsel %vm2351, %v2488, 0.0
      %v2595 = vrot.slane %v2594, 4
      %v2596 = vadd.f32 %v2594, %v2595
      %v2597 = vrot.slane %v2596, 2
      %v2598 = vadd.f32 %v2596, %v2597
      %v2599 = vrot.slane %v2598, 1
      %v2600 = vadd.f32 %v2598, %v2599
      %v2601 = vrcp.pop 8.0
      %v2602 = vmul.f32 %v2495, %v2601
      %v2603 = vmul.f32 %v2502, %v2601
      %v2604 = vmul.f32 %v2509, %v2601
      %v2605 = vmul.f32 %v2516, %v2601
      %v2606 = vmul.f32 %v2523, %v2601
      %v2607 = vmul.f32 %v2530, %v2601
      %v2608 = vmul.f32 %v2537, %v2601
      %v2609 = vmul.f32 %v2544, %v2601
      %v2610 = vmul.f32 %v2551, %v2601
      %v2611 = vmul.f32 %v2558, %v2601
      %v2612 = vmul.f32 %v2565, %v2601
      %v2613 = vmul.f32 %v2572, %v2601
      %v2614 = vmul.f32 %v2579, %v2601
      %v2615 = vmul.f32 %v2586, %v2601
      %v2616 = vmul.f32 %v2593, %v2601
      %v2617 = vmul.f32 %v2600, %v2601
      %v2618 = vld [vmem:[%s493] sm:$0x1]
      %v2619 = vld [vmem:[%s493 + $0x1] sm:$0x1]
      %v2620 = vld [vmem:[%s493 + $0x2] sm:$0x1]
      %v2621 = vld [vmem:[%s493 + $0x3] sm:$0x1]
      %v2622 = vld [vmem:[%s493 + $0x4] sm:$0x1]
      %v2623 = vld [vmem:[%s493 + $0x5] sm:$0x1]
      %v2624 = vld [vmem:[%s493 + $0x6] sm:$0x1]
      %v2625 = vld [vmem:[%s493 + $0x7] sm:$0x1]
      %v2626 = vld [vmem:[%s7] sm:$0xff]
      %v2627 = vld [vmem:[%s7 + $0x8] sm:$0xff]
      %v2628 = vld [vmem:[%s7 + $0x10] sm:$0xff]
      %v2629 = vld [vmem:[%s7 + $0x18] sm:$0xff]
      %v2630 = vld [vmem:[%s7 + $0x20] sm:$0xff]
      %v2631 = vld [vmem:[%s7 + $0x28] sm:$0xff]
      %v2632 = vld [vmem:[%s7 + $0x30] sm:$0xff]
      %v2633 = vld [vmem:[%s7 + $0x38] sm:$0xff]
      %v2634 = vld [vmem:[%s7 + $0x40] sm:$0x3f]
      %vm2643 = vcmask 1041409
      %v2644 = vsel %vm2643, %v2611, %v2610
      %vm2645 = vcmask 1042434
      %v2646 = vsel %vm2645, %v2612, %v2644
      %vm2647 = vcmask 1043459
      %v2648 = vsel %vm2647, %v2613, %v2646
      %vm2649 = vcmask 1044484
      %v2650 = vsel %vm2649, %v2614, %v2648
      %vm2651 = vcmask 1045509
      %v2652 = vsel %vm2651, %v2615, %v2650
      %vm2653 = vcmask 1046534
      %v2654 = vsel %vm2653, %v2616, %v2652
      %vm2655 = vcmask 1047559
      %v2656 = vsel %vm2655, %v2617, %v2654
      %v2657 = vsel %vm2351, %v2656, 0
      %2659 = vmatprep.subr.mxu0 0.0
      %2660 = vmatpush1.msra.mxu0 0.0
      %2661 = vmatprep.subr.mxu0 0.0
      %2662 = vmatpush1.msra.mxu0 0.0
      %2663 = vmatprep.subr.mxu0 0.0
      %2664 = vmatpush1.msra.mxu0 0.0
      %2665 = vmatprep.subr.mxu0 0.0
      %2666 = vmatpush1.msra.mxu0 0.0
      %2667 = vmatprep.subr.mxu0 0.0
      %2668 = vmatpush1.msra.mxu0 0.0
      %2669 = vmatprep.subr.mxu0 0.0
      %2670 = vmatpush1.msra.mxu0 0.0
      %2671 = vmatprep.subr.mxu0 0.0
      %2672 = vmatpush1.msra.mxu0 0.0
      %2673 = vmatprep.subr.mxu0 0.0
      %2674 = vmatpush1.msra.mxu0 0.0
      %2675 = vmatprep.subr.mxu0 0.0
      %2676 = vmatpush1.msra.mxu0 0.0
      %2677 = vmatprep.subr.mxu0 0.0
      %2678 = vmatpush1.msra.mxu0 0.0
      %2679 = vmatprep.subr.mxu0 0.0
      %2680 = vmatpush1.msra.mxu0 0.0
      %2681 = vmatprep.subr.mxu0 0.0
      %2682 = vmatpush1.msra.mxu0 0.0
      %2683 = vmatprep.subr.mxu0 0.0
      %2684 = vmatpush1.msra.mxu0 %v2633
      %2685 = vmatprep.subr.mxu0 0.0
      %2686 = vmatpush1.msra.mxu0 %v2632
      %2687 = vmatprep.subr.mxu0 0.0
      %2688 = vmatpush1.msra.mxu0 %v2631
      %2689 = vmatprep.subr.mxu0 0.0
      %2690 = vmatpush1.msra.mxu0 %v2630
      %2691 = vmatprep.subr.mxu0 0.0
      %2692 = vmatpush2.msra.mxu0 0.0
      %2693 = vmatprep.subr.mxu0 0.0
      %2694 = vmatpush2.msra.mxu0 0.0
      %2695 = vmatprep.subr.mxu0 0.0
      %2696 = vmatpush2.msra.mxu0 0.0
      %2697 = vmatprep.subr.mxu0 0.0
      %2698 = vmatpush2.msra.mxu0 0.0
      %2699 = vmatprep.subr.mxu0 0.0
      %2700 = vmatpush2.msra.mxu0 0.0
      %2701 = vmatprep.subr.mxu0 0.0
      %2702 = vmatpush2.msra.mxu0 0.0
      %2703 = vmatprep.subr.mxu0 0.0
      %2704 = vmatpush2.msra.mxu0 0.0
      %2705 = vmatprep.subr.mxu0 0.0
      %2706 = vmatpush2.msra.mxu0 0.0
      %2707 = vmatprep.subr.mxu0 0.0
      %2708 = vmatpush2.msra.mxu0 0.0
      %2709 = vmatprep.subr.mxu0 0.0
      %2710 = vmatpush2.msra.mxu0 0.0
      %2711 = vmatprep.subr.mxu0 0.0
      %2712 = vmatpush2.msra.mxu0 0.0
      %2713 = vmatprep.subr.mxu0 0.0
      %2714 = vmatpush2.msra.mxu0 0.0
      %2715 = vmatprep.subr.mxu0 0.0
      %2716 = vmatpush2.msra.mxu0 0.0
      %2717 = vmatprep.subr.mxu0 0.0
      %2718 = vmatpush2.msra.mxu0 0.0
      %2719 = vmatprep.subr.mxu0 0.0
      %2720 = vmatpush2.msra.mxu0 0.0
      %2721 = vmatprep.subr.mxu0 0.0
      %2722 = vmatpush2.msra.mxu0 0.0
      %2723 = vmatprep.mubr.f32.mxu0 0.0
      %2724 = vmatmul.mubr.f32.gmra.mxu0 %v2657
      %v2725 = vpop.f32.mrf.mxu0
      %v2726 = vadd.f32 0.0, %v2725
      %v2727 = vpop.f32.mrf.mxu0
      %2728 = vdwg.mxu0
      %v2737 = vsel %vm2643, %v2603, %v2602
      %v2738 = vsel %vm2645, %v2604, %v2737
      %v2739 = vsel %vm2647, %v2605, %v2738
      %v2740 = vsel %vm2649, %v2606, %v2739
      %v2741 = vsel %vm2651, %v2607, %v2740
      %v2742 = vsel %vm2653, %v2608, %v2741
      %v2743 = vsel %vm2655, %v2609, %v2742
      %v2744 = vsel %vm2351, %v2743, 0
      %2746 = vmatprep.subr.mxu0 0.0
      %2747 = vmatpush1.msra.mxu0 0.0
      %2748 = vmatprep.subr.mxu0 0.0
      %2749 = vmatpush1.msra.mxu0 0.0
      %2750 = vmatprep.subr.mxu0 0.0
      %2751 = vmatpush1.msra.mxu0 0.0
      %2752 = vmatprep.subr.mxu0 0.0
      %2753 = vmatpush1.msra.mxu0 0.0
      %2754 = vmatprep.subr.mxu0 0.0
      %2755 = vmatpush1.msra.mxu0 0.0
      %2756 = vmatprep.subr.mxu0 0.0
      %2757 = vmatpush1.msra.mxu0 0.0
      %2758 = vmatprep.subr.mxu0 0.0
      %2759 = vmatpush1.msra.mxu0 0.0
      %2760 = vmatprep.subr.mxu0 0.0
      %2761 = vmatpush1.msra.mxu0 0.0
      %2762 = vmatprep.subr.mxu0 0.0
      %2763 = vmatpush1.msra.mxu0 0.0
      %2764 = vmatprep.subr.mxu0 0.0
      %2765 = vmatpush1.msra.mxu0 0.0
      %2766 = vmatprep.subr.mxu0 0.0
      %2767 = vmatpush1.msra.mxu0 0.0
      %2768 = vmatprep.subr.mxu0 0.0
      %2769 = vmatpush1.msra.mxu0 0.0
      %2770 = vmatprep.subr.mxu0 0.0
      %2771 = vmatpush1.msra.mxu0 %v2629
      %2772 = vmatprep.subr.mxu0 0.0
      %2773 = vmatpush1.msra.mxu0 %v2628
      %2774 = vmatprep.subr.mxu0 0.0
      %2775 = vmatpush1.msra.mxu0 %v2627
      %2776 = vmatprep.subr.mxu0 0.0
      %2777 = vmatpush1.msra.mxu0 %v2626
      %2778 = vmatprep.subr.mxu0 0.0
      %2779 = vmatpush2.msra.mxu0 0.0
      %2780 = vmatprep.subr.mxu0 0.0
      %2781 = vmatpush2.msra.mxu0 0.0
      %2782 = vmatprep.subr.mxu0 0.0
      %2783 = vmatpush2.msra.mxu0 0.0
      %2784 = vmatprep.subr.mxu0 0.0
      %2785 = vmatpush2.msra.mxu0 0.0
      %2786 = vmatprep.subr.mxu0 0.0
      %2787 = vmatpush2.msra.mxu0 0.0
      %2788 = vmatprep.subr.mxu0 0.0
      %2789 = vmatpush2.msra.mxu0 0.0
      %2790 = vmatprep.subr.mxu0 0.0
      %2791 = vmatpush2.msra.mxu0 0.0
      %2792 = vmatprep.subr.mxu0 0.0
      %2793 = vmatpush2.msra.mxu0 0.0
      %2794 = vmatprep.subr.mxu0 0.0
      %2795 = vmatpush2.msra.mxu0 0.0
      %2796 = vmatprep.subr.mxu0 0.0
      %2797 = vmatpush2.msra.mxu0 0.0
      %2798 = vmatprep.subr.mxu0 0.0
      %2799 = vmatpush2.msra.mxu0 0.0
      %2800 = vmatprep.subr.mxu0 0.0
      %2801 = vmatpush2.msra.mxu0 0.0
      %2802 = vmatprep.subr.mxu0 0.0
      %2803 = vmatpush2.msra.mxu0 0.0
      %2804 = vmatprep.subr.mxu0 0.0
      %2805 = vmatpush2.msra.mxu0 0.0
      %2806 = vmatprep.subr.mxu0 0.0
      %2807 = vmatpush2.msra.mxu0 0.0
      %2808 = vmatprep.subr.mxu0 0.0
      %2809 = vmatpush2.msra.mxu0 0.0
      %2810 = vmatprep.mubr.f32.mxu0 0.0
      %2811 = vmatmul.mubr.f32.gmra.mxu0 %v2744
      %v2812 = vpop.f32.mrf.mxu0
      %v2813 = vadd.f32 %v2726, %v2812
      %v2814 = vpop.f32.mrf.mxu0
      %2815 = vdwg.mxu0
      %v2824 = vcombine.low %v2618, %v2619
      %v2825 = vcombine.low %v2620, %v2621
      %v2826 = vcombine.low %v2622, %v2623
      %v2827 = vcombine.low %v2624, %v2625
      %v2829 = vunpack.c.l.s4 1966171168
      %v2830 = vunpack.c.0.s8 %v2829
      %v2831 = vlaneseq
      %v2832 = vshrl.u32 %v2831, 7
      %v2833 = vsub.s32 %v2830, %v2832
      %v2834 = vrot.slane %v2824, %v2833
      %v2836 = vunpack.c.l.s4 1966171168
      %v2837 = vunpack.c.0.s8 %v2836
      %v2838 = vlaneseq
      %v2839 = vshrl.u32 %v2838, 7
      %v2840 = vsub.s32 %v2837, %v2839
      %v2841 = vrot.slane %v2825, %v2840
      %v2843 = vunpack.c.l.s4 1966171168
      %v2844 = vunpack.c.0.s8 %v2843
      %v2845 = vlaneseq
      %v2846 = vshrl.u32 %v2845, 7
      %v2847 = vsub.s32 %v2844, %v2846
      %v2848 = vrot.slane %v2826, %v2847
      %v2850 = vunpack.c.l.s4 1966171168
      %v2851 = vunpack.c.0.s8 %v2850
      %v2852 = vlaneseq
      %v2853 = vshrl.u32 %v2852, 7
      %v2854 = vsub.s32 %v2851, %v2853
      %v2855 = vrot.slane %v2827, %v2854
      %v2856 = vcombine.low %v2834, %v2841
      %v2857 = vcombine.low %v2848, %v2855
      %v2859 = vunpack.c.l.s4 1966171168
      %v2860 = vunpack.c.0.s8 %v2859
      %v2861 = vlaneseq
      %v2862 = vshrl.u32 %v2861, 7
      %v2863 = vsub.s32 %v2860, %v2862
      %v2864 = vrot.slane %v2856, %v2863
      %v2866 = vunpack.c.l.s4 1966171168
      %v2867 = vunpack.c.0.s8 %v2866
      %v2868 = vlaneseq
      %v2869 = vshrl.u32 %v2868, 7
      %v2870 = vsub.s32 %v2867, %v2869
      %v2871 = vrot.slane %v2857, %v2870
      %v2872 = vcombine.low %v2864, %v2871
      %vm2873 = vcmask 48128
      %v2874 = vsel %vm2873, %v2872, 0
      %vm2876 = vcmask 1045504
      %v2878 = vsel %vm2876, %v2634, 0
      %2880 = vmatprep.subr.mxu0 0.0
      %2881 = vmatpush1.msra.mxu0 0.0
      %2882 = vmatprep.subr.mxu0 0.0
      %2883 = vmatpush1.msra.mxu0 0.0
      %2884 = vmatprep.subr.mxu0 0.0
      %2885 = vmatpush1.msra.mxu0 0.0
      %2886 = vmatprep.subr.mxu0 0.0
      %2887 = vmatpush1.msra.mxu0 0.0
      %2888 = vmatprep.subr.mxu0 0.0
      %2889 = vmatpush1.msra.mxu0 0.0
      %2890 = vmatprep.subr.mxu0 0.0
      %2891 = vmatpush1.msra.mxu0 0.0
      %2892 = vmatprep.subr.mxu0 0.0
      %2893 = vmatpush1.msra.mxu0 0.0
      %2894 = vmatprep.subr.mxu0 0.0
      %2895 = vmatpush1.msra.mxu0 0.0
      %2896 = vmatprep.subr.mxu0 0.0
      %2897 = vmatpush1.msra.mxu0 0.0
      %2898 = vmatprep.subr.mxu0 0.0
      %2899 = vmatpush1.msra.mxu0 0.0
      %2900 = vmatprep.subr.mxu0 0.0
      %2901 = vmatpush1.msra.mxu0 0.0
      %2902 = vmatprep.subr.mxu0 0.0
      %2903 = vmatpush1.msra.mxu0 0.0
      %2904 = vmatprep.subr.mxu0 0.0
      %2905 = vmatpush1.msra.mxu0 0.0
      %2906 = vmatprep.subr.mxu0 0.0
      %2907 = vmatpush1.msra.mxu0 0.0
      %2908 = vmatprep.subr.mxu0 0.0
      %2909 = vmatpush1.msra.mxu0 0.0
      %2910 = vmatprep.subr.mxu0 0.0
      %2911 = vmatpush1.msra.mxu0 %v2878
      %2912 = vmatprep.subr.mxu0 0.0
      %2913 = vmatpush2.msra.mxu0 0.0
      %2914 = vmatprep.subr.mxu0 0.0
      %2915 = vmatpush2.msra.mxu0 0.0
      %2916 = vmatprep.subr.mxu0 0.0
      %2917 = vmatpush2.msra.mxu0 0.0
      %2918 = vmatprep.subr.mxu0 0.0
      %2919 = vmatpush2.msra.mxu0 0.0
      %2920 = vmatprep.subr.mxu0 0.0
      %2921 = vmatpush2.msra.mxu0 0.0
      %2922 = vmatprep.subr.mxu0 0.0
      %2923 = vmatpush2.msra.mxu0 0.0
      %2924 = vmatprep.subr.mxu0 0.0
      %2925 = vmatpush2.msra.mxu0 0.0
      %2926 = vmatprep.subr.mxu0 0.0
      %2927 = vmatpush2.msra.mxu0 0.0
      %2928 = vmatprep.subr.mxu0 0.0
      %2929 = vmatpush2.msra.mxu0 0.0
      %2930 = vmatprep.subr.mxu0 0.0
      %2931 = vmatpush2.msra.mxu0 0.0
      %2932 = vmatprep.subr.mxu0 0.0
      %2933 = vmatpush2.msra.mxu0 0.0
      %2934 = vmatprep.subr.mxu0 0.0
      %2935 = vmatpush2.msra.mxu0 0.0
      %2936 = vmatprep.subr.mxu0 0.0
      %2937 = vmatpush2.msra.mxu0 0.0
      %2938 = vmatprep.subr.mxu0 0.0
      %2939 = vmatpush2.msra.mxu0 0.0
      %2940 = vmatprep.subr.mxu0 0.0
      %2941 = vmatpush2.msra.mxu0 0.0
      %2942 = vmatprep.subr.mxu0 0.0
      %2943 = vmatpush2.msra.mxu0 0.0
      %2944 = vmatprep.mubr.f32.mxu0 0.0
      %2945 = vmatmul.mubr.f32.gmra.mxu0 %v2874
      %v2946 = vpop.f32.mrf.mxu0
      %v2947 = vadd.f32 0.0, %v2946
      %v2948 = vpop.f32.mrf.mxu0
      %2949 = vdwg.mxu0
      %v2950 = vadd.f32 %v2813, %v2947
      %v2951 = vlaneseq
      %v2952 = vshrl.u32 %v2951, 7
      %v2953 = vsub.s32 2, %v2952
      %v2954 = vrot.slane %v646, %v2953
      %v2955 = vadd.f32 %v2950, %v2954
      %v2956 = vmax.f32 %v2955, 0.0
      %v2957 = vld [vmem:[%s8] sm:$0xff]
      %v2958 = vld [vmem:[%s8 + $0x8] sm:$0xff]
      %v2959 = vld [vmem:[%s8 + $0x10] sm:$0xff]
      %v2960 = vld [vmem:[%s8 + $0x18] sm:$0xff]
      %v2961 = vld [vmem:[%s8 + $0x20] sm:$0xff]
      %v2962 = vld [vmem:[%s8 + $0x28] sm:$0xff]
      %v2963 = vld [vmem:[%s8 + $0x30] sm:$0xff]
      %v2964 = vld [vmem:[%s8 + $0x38] sm:$0xff]
      %v2965 = vld [vmem:[%s8 + $0x40] sm:$0x3f]
      %v2966 = vlaneseq
      %v2967 = vshrl.u32 %v2966, 7
      %v2968 = vsub.s32 3, %v2967
      %v2969 = vrot.slane %v646, %v2968
      %vm2970 = vcmask 572416
      %v2972 = vsel %vm2970, %v2956, 0
      %v2975 = vsel %vm2876, %v2965, 0
      %2977 = vmatprep.subr.mxu0 0.0
      %2978 = vmatpush1.msra.mxu0 0.0
      %2979 = vmatprep.subr.mxu0 0.0
      %2980 = vmatpush1.msra.mxu0 0.0
      %2981 = vmatprep.subr.mxu0 0.0
      %2982 = vmatpush1.msra.mxu0 0.0
      %2983 = vmatprep.subr.mxu0 0.0
      %2984 = vmatpush1.msra.mxu0 0.0
      %2985 = vmatprep.subr.mxu0 0.0
      %2986 = vmatpush1.msra.mxu0 0.0
      %2987 = vmatprep.subr.mxu0 0.0
      %2988 = vmatpush1.msra.mxu0 0.0
      %2989 = vmatprep.subr.mxu0 0.0
      %2990 = vmatpush1.msra.mxu0 0.0
      %2991 = vmatprep.subr.mxu0 0.0
      %2992 = vmatpush1.msra.mxu0 %v2975
      %2993 = vmatprep.subr.mxu0 0.0
      %2994 = vmatpush1.msra.mxu0 %v2964
      %2995 = vmatprep.subr.mxu0 0.0
      %2996 = vmatpush1.msra.mxu0 %v2963
      %2997 = vmatprep.subr.mxu0 0.0
      %2998 = vmatpush1.msra.mxu0 %v2962
      %2999 = vmatprep.subr.mxu0 0.0
      %3000 = vmatpush1.msra.mxu0 %v2961
      %3001 = vmatprep.subr.mxu0 0.0
      %3002 = vmatpush1.msra.mxu0 %v2960
      %3003 = vmatprep.subr.mxu0 0.0
      %3004 = vmatpush1.msra.mxu0 %v2959
      %3005 = vmatprep.subr.mxu0 0.0
      %3006 = vmatpush1.msra.mxu0 %v2958
      %3007 = vmatprep.subr.mxu0 0.0
      %3008 = vmatpush1.msra.mxu0 %v2957
      %3009 = vmatprep.subr.mxu0 0.0
      %3010 = vmatpush2.msra.mxu0 0.0
      %3011 = vmatprep.subr.mxu0 0.0
      %3012 = vmatpush2.msra.mxu0 0.0
      %3013 = vmatprep.subr.mxu0 0.0
      %3014 = vmatpush2.msra.mxu0 0.0
      %3015 = vmatprep.subr.mxu0 0.0
      %3016 = vmatpush2.msra.mxu0 0.0
      %3017 = vmatprep.subr.mxu0 0.0
      %3018 = vmatpush2.msra.mxu0 0.0
      %3019 = vmatprep.subr.mxu0 0.0
      %3020 = vmatpush2.msra.mxu0 0.0
      %3021 = vmatprep.subr.mxu0 0.0
      %3022 = vmatpush2.msra.mxu0 0.0
      %3023 = vmatprep.subr.mxu0 0.0
      %3024 = vmatpush2.msra.mxu0 0.0
      %3025 = vmatprep.subr.mxu0 0.0
      %3026 = vmatpush2.msra.mxu0 0.0
      %3027 = vmatprep.subr.mxu0 0.0
      %3028 = vmatpush2.msra.mxu0 0.0
      %3029 = vmatprep.subr.mxu0 0.0
      %3030 = vmatpush2.msra.mxu0 0.0
      %3031 = vmatprep.subr.mxu0 0.0
      %3032 = vmatpush2.msra.mxu0 0.0
      %3033 = vmatprep.subr.mxu0 0.0
      %3034 = vmatpush2.msra.mxu0 0.0
      %3035 = vmatprep.subr.mxu0 0.0
      %3036 = vmatpush2.msra.mxu0 0.0
      %3037 = vmatprep.subr.mxu0 0.0
      %3038 = vmatpush2.msra.mxu0 0.0
      %3039 = vmatprep.subr.mxu0 0.0
      %3040 = vmatpush2.msra.mxu0 0.0
      %3041 = vmatprep.mubr.f32.mxu0 0.0
      %3042 = vmatmul.mubr.f32.gmra.mxu0 %v2972
      %v3043 = vpop.f32.mrf.mxu0
      %v3044 = vadd.f32 %v2969, %v3043
      %v3045 = vpop.f32.mrf.mxu0
      %3046 = vdwg.mxu0
      %v3047 = vmax.f32 %v3044, 0.0
      %v3048 = vld [vmem:[%s9] sm:$0xff]
      %v3049 = vld [vmem:[%s9 + $0x8] sm:$0xff]
      %v3050 = vld [vmem:[%s9 + $0x10] sm:$0xff]
      %v3051 = vld [vmem:[%s9 + $0x18] sm:$0xff]
      %v3052 = vlaneseq
      %v3053 = vshrl.u32 %v3052, 7
      %v3054 = vsub.s32 4, %v3053
      %v3055 = vrot.slane %v646, %v3054
      %v3057 = vsel %vm2351, %v3047, 0
      %3059 = vmatprep.subr.mxu0 0.0
      %3060 = vmatpush1.msra.mxu0 0.0
      %3061 = vmatprep.subr.mxu0 0.0
      %3062 = vmatpush1.msra.mxu0 0.0
      %3063 = vmatprep.subr.mxu0 0.0
      %3064 = vmatpush1.msra.mxu0 0.0
      %3065 = vmatprep.subr.mxu0 0.0
      %3066 = vmatpush1.msra.mxu0 0.0
      %3067 = vmatprep.subr.mxu0 0.0
      %3068 = vmatpush1.msra.mxu0 0.0
      %3069 = vmatprep.subr.mxu0 0.0
      %3070 = vmatpush1.msra.mxu0 0.0
      %3071 = vmatprep.subr.mxu0 0.0
      %3072 = vmatpush1.msra.mxu0 0.0
      %3073 = vmatprep.subr.mxu0 0.0
      %3074 = vmatpush1.msra.mxu0 0.0
      %3075 = vmatprep.subr.mxu0 0.0
      %3076 = vmatpush1.msra.mxu0 0.0
      %3077 = vmatprep.subr.mxu0 0.0
      %3078 = vmatpush1.msra.mxu0 0.0
      %3079 = vmatprep.subr.mxu0 0.0
      %3080 = vmatpush1.msra.mxu0 0.0
      %3081 = vmatprep.subr.mxu0 0.0
      %3082 = vmatpush1.msra.mxu0 0.0
      %3083 = vmatprep.subr.mxu0 0.0
      %3084 = vmatpush1.msra.mxu0 %v3051
      %3085 = vmatprep.subr.mxu0 0.0
      %3086 = vmatpush1.msra.mxu0 %v3050
      %3087 = vmatprep.subr.mxu0 0.0
      %3088 = vmatpush1.msra.mxu0 %v3049
      %3089 = vmatprep.subr.mxu0 0.0
      %3090 = vmatpush1.msra.mxu0 %v3048
      %3091 = vmatprep.subr.mxu0 0.0
      %3092 = vmatpush2.msra.mxu0 0.0
      %3093 = vmatprep.subr.mxu0 0.0
      %3094 = vmatpush2.msra.mxu0 0.0
      %3095 = vmatprep.subr.mxu0 0.0
      %3096 = vmatpush2.msra.mxu0 0.0
      %3097 = vmatprep.subr.mxu0 0.0
      %3098 = vmatpush2.msra.mxu0 0.0
      %3099 = vmatprep.subr.mxu0 0.0
      %3100 = vmatpush2.msra.mxu0 0.0
      %3101 = vmatprep.subr.mxu0 0.0
      %3102 = vmatpush2.msra.mxu0 0.0
      %3103 = vmatprep.subr.mxu0 0.0
      %3104 = vmatpush2.msra.mxu0 0.0
      %3105 = vmatprep.subr.mxu0 0.0
      %3106 = vmatpush2.msra.mxu0 0.0
      %3107 = vmatprep.subr.mxu0 0.0
      %3108 = vmatpush2.msra.mxu0 0.0
      %3109 = vmatprep.subr.mxu0 0.0
      %3110 = vmatpush2.msra.mxu0 0.0
      %3111 = vmatprep.subr.mxu0 0.0
      %3112 = vmatpush2.msra.mxu0 0.0
      %3113 = vmatprep.subr.mxu0 0.0
      %3114 = vmatpush2.msra.mxu0 0.0
      %3115 = vmatprep.subr.mxu0 0.0
      %3116 = vmatpush2.msra.mxu0 0.0
      %3117 = vmatprep.subr.mxu0 0.0
      %3118 = vmatpush2.msra.mxu0 0.0
      %3119 = vmatprep.subr.mxu0 0.0
      %3120 = vmatpush2.msra.mxu0 0.0
      %3121 = vmatprep.subr.mxu0 0.0
      %3122 = vmatpush2.msra.mxu0 0.0
      %3123 = vmatprep.mubr.f32.mxu0 0.0
      %3124 = vmatmul.mubr.f32.gmra.mxu0 %v3057
      %v3125 = vpop.f32.mrf.mxu0
      %v3126 = vadd.f32 %v3055, %v3125
      %v3127 = vpop.f32.mrf.mxu0
      %3128 = vdwg.mxu0
      %v3129 = vmax.f32 %v3126, 0.0
      %v3130 = vld [vmem:[%s10] sm:$0xff]
      %v3131 = vld [vmem:[%s10 + $0x8] sm:$0xff]
      %v3132 = vld [vmem:[%s10 + $0x10] sm:$0xff]
      %v3133 = vld [vmem:[%s10 + $0x18] sm:$0xff]
      %v3134 = vlaneseq
      %v3135 = vshrl.u32 %v3134, 7
      %v3136 = vsub.s32 5, %v3135
      %v3137 = vrot.slane %v646, %v3136
      %v3139 = vsel %vm2351, %v3129, 0
      %3141 = vmatprep.subr.mxu0 0.0
      %3142 = vmatpush1.msra.mxu0 0.0
      %3143 = vmatprep.subr.mxu0 0.0
      %3144 = vmatpush1.msra.mxu0 0.0
      %3145 = vmatprep.subr.mxu0 0.0
      %3146 = vmatpush1.msra.mxu0 0.0
      %3147 = vmatprep.subr.mxu0 0.0
      %3148 = vmatpush1.msra.mxu0 0.0
      %3149 = vmatprep.subr.mxu0 0.0
      %3150 = vmatpush1.msra.mxu0 0.0
      %3151 = vmatprep.subr.mxu0 0.0
      %3152 = vmatpush1.msra.mxu0 0.0
      %3153 = vmatprep.subr.mxu0 0.0
      %3154 = vmatpush1.msra.mxu0 0.0
      %3155 = vmatprep.subr.mxu0 0.0
      %3156 = vmatpush1.msra.mxu0 0.0
      %3157 = vmatprep.subr.mxu0 0.0
      %3158 = vmatpush1.msra.mxu0 0.0
      %3159 = vmatprep.subr.mxu0 0.0
      %3160 = vmatpush1.msra.mxu0 0.0
      %3161 = vmatprep.subr.mxu0 0.0
      %3162 = vmatpush1.msra.mxu0 0.0
      %3163 = vmatprep.subr.mxu0 0.0
      %3164 = vmatpush1.msra.mxu0 0.0
      %3165 = vmatprep.subr.mxu0 0.0
      %3166 = vmatpush1.msra.mxu0 %v3133
      %3167 = vmatprep.subr.mxu0 0.0
      %3168 = vmatpush1.msra.mxu0 %v3132
      %3169 = vmatprep.subr.mxu0 0.0
      %3170 = vmatpush1.msra.mxu0 %v3131
      %3171 = vmatprep.subr.mxu0 0.0
      %3172 = vmatpush1.msra.mxu0 %v3130
      %3173 = vmatprep.subr.mxu0 0.0
      %3174 = vmatpush2.msra.mxu0 0.0
      %3175 = vmatprep.subr.mxu0 0.0
      %3176 = vmatpush2.msra.mxu0 0.0
      %3177 = vmatprep.subr.mxu0 0.0
      %3178 = vmatpush2.msra.mxu0 0.0
      %3179 = vmatprep.subr.mxu0 0.0
      %3180 = vmatpush2.msra.mxu0 0.0
      %3181 = vmatprep.subr.mxu0 0.0
      %3182 = vmatpush2.msra.mxu0 0.0
      %3183 = vmatprep.subr.mxu0 0.0
      %3184 = vmatpush2.msra.mxu0 0.0
      %3185 = vmatprep.subr.mxu0 0.0
      %3186 = vmatpush2.msra.mxu0 0.0
      %3187 = vmatprep.subr.mxu0 0.0
      %3188 = vmatpush2.msra.mxu0 0.0
      %3189 = vmatprep.subr.mxu0 0.0
      %3190 = vmatpush2.msra.mxu0 0.0
      %3191 = vmatprep.subr.mxu0 0.0
      %3192 = vmatpush2.msra.mxu0 0.0
      %3193 = vmatprep.subr.mxu0 0.0
      %3194 = vmatpush2.msra.mxu0 0.0
      %3195 = vmatprep.subr.mxu0 0.0
      %3196 = vmatpush2.msra.mxu0 0.0
      %3197 = vmatprep.subr.mxu0 0.0
      %3198 = vmatpush2.msra.mxu0 0.0
      %3199 = vmatprep.subr.mxu0 0.0
      %3200 = vmatpush2.msra.mxu0 0.0
      %3201 = vmatprep.subr.mxu0 0.0
      %3202 = vmatpush2.msra.mxu0 0.0
      %3203 = vmatprep.subr.mxu0 0.0
      %3204 = vmatpush2.msra.mxu0 0.0
      %3205 = vmatprep.mubr.f32.mxu0 0.0
      %3206 = vmatmul.mubr.f32.gmra.mxu0 %v3139
      %v3207 = vpop.f32.mrf.mxu0
      %v3208 = vadd.f32 %v3137, %v3207
      %v3209 = vpop.f32.mrf.mxu0
      %3210 = vdwg.mxu0
      %v3212 = vcombine.high %v3208, %v3208
      %v3214 = vunpack.c.l.s4 1966171168
      %v3215 = vunpack.c.0.s8 %v3214
      %v3216 = vlaneseq
      %v3217 = vshrl.u32 %v3216, 7
      %v3218 = vsub.s32 %v3215, %v3217
      %v3219 = vrot.slane %v3208, %v3218
      %v3221 = vunpack.c.l.s4 1966171168
      %v3222 = vunpack.c.0.s8 %v3221
      %v3223 = vlaneseq
      %v3224 = vshrl.u32 %v3223, 7
      %v3225 = vsub.s32 %v3222, %v3224
      %v3226 = vrot.slane %v3212, %v3225
      %v3227 = vcombine.high %v3219, %v3219
      %v3228 = vcombine.high %v3226, %v3226
      %v3230 = vunpack.c.l.s4 1966171168
      %v3231 = vunpack.c.0.s8 %v3230
      %v3232 = vlaneseq
      %v3233 = vshrl.u32 %v3232, 7
      %v3234 = vsub.s32 %v3231, %v3233
      %v3235 = vrot.slane %v3219, %v3234
      %v3237 = vunpack.c.l.s4 1966171168
      %v3238 = vunpack.c.0.s8 %v3237
      %v3239 = vlaneseq
      %v3240 = vshrl.u32 %v3239, 7
      %v3241 = vsub.s32 %v3238, %v3240
      %v3242 = vrot.slane %v3226, %v3241
      %v3244 = vunpack.c.l.s4 1966171168
      %v3245 = vunpack.c.0.s8 %v3244
      %v3246 = vlaneseq
      %v3247 = vshrl.u32 %v3246, 7
      %v3248 = vsub.s32 %v3245, %v3247
      %v3249 = vrot.slane %v3227, %v3248
      %v3251 = vunpack.c.l.s4 1966171168
      %v3252 = vunpack.c.0.s8 %v3251
      %v3253 = vlaneseq
      %v3254 = vshrl.u32 %v3253, 7
      %v3255 = vsub.s32 %v3252, %v3254
      %v3256 = vrot.slane %v3228, %v3255
      %v3257 = vcombine.high %v3235, %v3235
      %v3258 = vcombine.high %v3242, %v3242
      %v3259 = vcombine.high %v3249, %v3249
      %v3260 = vcombine.high %v3256, %v3256
      %vm3269 = vcmask 8192
      %3270 = vst.msk [vmem:[%s498] sm:$0x1] %vm3269, %v3235
      %3271 = vst.msk [vmem:[%s498 + $0x1] sm:$0x1] %vm3269, %v3249
      %3272 = vst.msk [vmem:[%s498 + $0x2] sm:$0x1] %vm3269, %v3257
      %3273 = vst.msk [vmem:[%s498 + $0x3] sm:$0x1] %vm3269, %v3259
      %3274 = vst.msk [vmem:[%s498 + $0x4] sm:$0x1] %vm3269, %v3242
      %3275 = vst.msk [vmem:[%s498 + $0x5] sm:$0x1] %vm3269, %v3256
      %3276 = vst.msk [vmem:[%s498 + $0x6] sm:$0x1] %vm3269, %v3258
      %3277 = vst.msk [vmem:[%s498 + $0x7] sm:$0x1] %vm3269, %v3260
      %s3278 = smul.u32 8, %s23
      %p3279 = scmp.lt.s32.totalorder %s3278, 23
      %s3280 = scalar_select %p3279, %s3278, 23
      %s3281 = scalar_lea.vmem %s12, %s3280
      // Predicated region
      $region69: #{gcnreg_binary_add_forward.1} parent=67 // pred_check
        %p3282 = pneg %p318
      $region70: #{gcnreg_binary_add_forward.1} parent=67 // pred_check_branch
        %3284 = sbr.rel (%p3282) target = $region72
      $region71: #{gcnreg_binary_add_forward.1} parent=67 // pred_region
        %s3285 = smul.u32 8, %s23
      $region72: #{gcnreg_binary_add_forward.1} parent=67 // pred_fallthru
        _
    $region68: #{gcnreg_binary_add_forward.1} parent=5 // pred_fallthru
      _
    %p3286 = scmp.le.s32.totalorder 2, %s18
    // Predicated region
    $region73: #{gcnreg_binary_add_forward.1} parent=5 // pred_check
      %p3287 = pneg %p3286
    $region74: #{gcnreg_binary_add_forward.1} parent=5 // pred_check_branch
      %3289 = sbr.rel (%p3287) target = $region76
    $region75: #{gcnreg_binary_add_forward.1} parent=5 // pred_region
      %s3290 = ssub.s32 %s18, 2
      // Predicated region
      $region77: #{gcnreg_binary_add_forward.1} parent=75 // pred_check
        %p3291 = pneg %p324
      $region78: #{gcnreg_binary_add_forward.1} parent=75 // pred_check_branch
        %3293 = sbr.rel (%p3291) target = $region80
      $region79: #{gcnreg_binary_add_forward.1} parent=75 // pred_region
        %s3294 = smul.u32 8, %s24
        %p3295 = scmp.lt.s32.totalorder %s3294, 23
        %s3296 = scalar_select %p3295, %s3294, 23
        %s3297 = scalar_lea.vmem %s12, %s3296
      $region80: #{gcnreg_binary_add_forward.1} parent=75 // pred_fallthru
        _
    $region76: #{gcnreg_binary_add_forward.1} parent=5 // pred_fallthru
      _
  $region6: #{gcnreg_binary_add_forward.1} parent=0 // loop_footer
    %s22 = sadd.s32 1, %s18
  $region7: #{gcnreg_binary_add_forward.1} parent=0 // loop_footer_branch
    %17 = sbr.rel target = $region3
  $region8: #{gcnreg_binary_add_forward.1} parent=0 // loop_exit
    _

</llo_original>
